<compile_context>
chip_gen: v5e
topology: v5e:2x2
jax: 0.10.0
libtpu: 0.0.40
codegen_flags: <defaults>
</compile_context>

<pallas_src>
import functools

import numpy as np
import jax
import jax.numpy as jnp
from jax import lax
from jax.experimental import pallas as pl
from jax.experimental.pallas import tpu as pltpu

EMB = 512                  # emb_size
HEADS = 8                  # heads_num
HEAD_DIM = EMB // HEADS    # 64 (Q_dim = K_dim = V_dim)
LN_EPS = 1e-5


def _row_tile(m, cap=256):
    """Row-tile for [M, E] matmuls: full M if small, else 256 (multiple of 8)."""
    return m if m <= cap else cap


# --------------------- kernel 1: fused Q/K/V projection ---------------------- #
def _qkv_proj_kernel(xq_ref, xk_ref, xv_ref, wq_ref, wk_ref, wv_ref,
                     q_ref, k_ref, v_ref):
    for x_ref, w_ref, o_ref in ((xq_ref, wq_ref, q_ref),
                                (xk_ref, wk_ref, k_ref),
                                (xv_ref, wv_ref, v_ref)):
        o_ref[...] = jnp.dot(
            x_ref[...].astype(jnp.bfloat16), w_ref[...],
            preferred_element_type=jnp.float32).astype(o_ref.dtype)


def qkv_projection(xq, xk, xv, wq_t, wk_t, wv_t):
    """x*: [M, E] f32; w*_t: [E, E] bf16 (pre-transposed). Returns bf16 [M, E] x3."""
    M, E = xq.shape
    tm = _row_tile(M)
    x_spec = pl.BlockSpec((tm, E), lambda i: (i, 0))
    w_spec = pl.BlockSpec((E, E), lambda i: (0, 0))      # weights resident in VMEM
    o_spec = pl.BlockSpec((tm, E), lambda i: (i, 0))
    out = jax.ShapeDtypeStruct((M, E), jnp.bfloat16)
    return pl.pallas_call(
        _qkv_proj_kernel,
        out_shape=(out, out, out),
        grid=(pl.cdiv(M, tm),),
        in_specs=[x_spec, x_spec, x_spec, w_spec, w_spec, w_spec],
        out_specs=(o_spec, o_spec, o_spec),
        compiler_params=pltpu.CompilerParams(dimension_semantics=("parallel",)),
    )(xq, xk, xv, wq_t, wk_t, wv_t)


# ------------------ kernel 2: all-heads scaled dot-product attention --------- #
def _attention_kernel(q_ref, k_ref, v_ref, ctx_ref, attn_ref, *,
                      heads, head_dim, scale):
    # Blocks are [1, S, H*D]; heads are picked via static lane slices so Q/K/V
    # never need an HBM [B, H, S, D] transpose and ctx is written lane-dense.
    for h in range(heads):
        lo = h * head_dim
        hi = lo + head_dim
        q_h = q_ref[0, :, lo:hi]          # [S, D] bf16
        k_h = k_ref[0, :, lo:hi]          # [S, D] bf16
        v_h = v_ref[0, :, lo:hi]          # [S, D] bf16
        # Q @ K^T without an explicit transpose: contract the last dims.
        s = lax.dot_general(q_h, k_h, (((1,), (1,)), ((), ())),
                            preferred_element_type=jnp.float32) * scale
        # masked_fill in the reference is out-of-place & discarded -> mask no-op.
        m = jnp.max(s, axis=-1, keepdims=True)
        e = jnp.exp(s - m)
        p = e * pl.reciprocal(jnp.sum(e, axis=-1, keepdims=True), approx=True)
        attn_ref[0, h] = p
        ctx_ref[0, :, lo:hi] = jnp.dot(
            p.astype(jnp.bfloat16), v_h,
            preferred_element_type=jnp.float32).astype(ctx_ref.dtype)


def scaled_dot_product_attention(q, k, v):
    """q/k/v: [B, S, H*D] bf16 -> (ctx [B, S, H*D] bf16, attn [B, H, S, S] f32)."""
    B, S, E = q.shape
    scale = float(1.0 / np.sqrt(HEAD_DIM))
    kern = functools.partial(_attention_kernel,
                             heads=HEADS, head_dim=HEAD_DIM, scale=scale)
    bse = pl.BlockSpec((1, S, E), lambda b: (b, 0, 0))
    # TODO(synk): for long sequences a KV-tiled online-softmax (flash) form would
    # bound VMEM, but the module returns the full [B, H, S, S] attn matrix, so the
    # S x S scores must be materialized anyway.
    return pl.pallas_call(
        kern,
        out_shape=(jax.ShapeDtypeStruct((B, S, E), jnp.bfloat16),
                   jax.ShapeDtypeStruct((B, HEADS, S, S), jnp.float32)),
        grid=(B,),
        in_specs=[bse, bse, bse],
        out_specs=(pl.BlockSpec((1, S, E), lambda b: (b, 0, 0)),
                   pl.BlockSpec((1, HEADS, S, S), lambda b: (b, 0, 0, 0))),
        compiler_params=pltpu.CompilerParams(dimension_semantics=("parallel",)),
    )(q, k, v)


# -------------- kernel 3: fc matmul + residual add + LayerNorm --------------- #
def _fc_res_ln_kernel(ctx_ref, res_ref, w_ref, o_ref, *, eps):
    y = jnp.dot(ctx_ref[...], w_ref[...], preferred_element_type=jnp.float32)
    y = y + res_ref[...]                                      # residual in f32
    mean = jnp.mean(y, axis=-1, keepdims=True)
    c = y - mean
    var = jnp.mean(c * c, axis=-1, keepdims=True)             # biased var (torch LN)
    # fresh nn.LayerNorm in forward() -> weight=1, bias=0, eps=1e-5
    o_ref[...] = (c * lax.rsqrt(var + eps)).astype(o_ref.dtype)


def fc_residual_layernorm(ctx, residual, wfc_t):
    """ctx: [M, E] bf16, residual: [M, E] f32, wfc_t: [E, E] bf16 -> [M, E] f32."""
    M, E = ctx.shape
    tm = _row_tile(M)
    kern = functools.partial(_fc_res_ln_kernel, eps=LN_EPS)
    row_spec = pl.BlockSpec((tm, E), lambda i: (i, 0))
    w_spec = pl.BlockSpec((E, E), lambda i: (0, 0))
    return pl.pallas_call(
        kern,
        out_shape=jax.ShapeDtypeStruct((M, E), jnp.float32),
        grid=(pl.cdiv(M, tm),),
        in_specs=[row_spec, row_spec, w_spec],
        out_specs=row_spec,
        compiler_params=pltpu.CompilerParams(dimension_semantics=("parallel",)),
    )(ctx, residual, wfc_t)


# ------------------------------ MultiHeadAttention --------------------------- #
def init_params(key):
    k1, k2, k3, k4 = jax.random.split(key, 4)
    std = 1.0 / np.sqrt(EMB)

    def w(k):
        # Pre-transposed ([in_features, out_features]) and stored in bf16 so the
        # kernels compute x @ W^T with no per-forward transpose or cast.
        return (jax.random.normal(k, (EMB, EMB), jnp.float32) * std).astype(jnp.bfloat16)

    return {"W_Q_T": w(k1), "W_K_T": w(k2), "W_V_T": w(k3), "fc_T": w(k4)}


def multi_head_attention(params, input_Q, input_K, input_V, attention_mask):
    del attention_mask  # no-op in the reference (out-of-place masked_fill discarded)
    B, S, E = input_Q.shape
    M = B * S

    q2, k2, v2 = qkv_projection(
        input_Q.reshape(M, E), input_K.reshape(M, E), input_V.reshape(M, E),
        params["W_Q_T"], params["W_K_T"], params["W_V_T"])

    ctx, attn = scaled_dot_product_attention(
        q2.reshape(B, S, E), k2.reshape(B, S, E), v2.reshape(B, S, E))

    out = fc_residual_layernorm(ctx.reshape(M, E), input_Q.reshape(M, E),
                                params["fc_T"])
    return out.reshape(B, S, E), attn


# ------------------------------ numpy reference ------------------------------ #
def _ref_forward(params, iq, ik, iv):
    to_np = lambda a: np.asarray(jnp.asarray(a, jnp.float32))
    wq, wk, wv, wfc = (to_np(params[n]) for n in ("W_Q_T", "W_K_T", "W_V_T", "fc_T"))
    iq, ik, iv = map(np.asarray, (iq, ik, iv))
    B, S, E = iq.shape

    def split_heads(x2d):
        return x2d.reshape(B, S, HEADS, HEAD_DIM).transpose(0, 2, 1, 3)

    Q = split_heads(iq.reshape(B * S, E) @ wq)
    K = split_heads(ik.reshape(B * S, E) @ wk)
    V = split_heads(iv.reshape(B * S, E) @ wv)

    scores = Q @ K.transpose(0, 1, 3, 2) / np.sqrt(HEAD_DIM)
    scores = scores - scores.max(-1, keepdims=True)
    e = np.exp(scores)
    attn = e / e.sum(-1, keepdims=True)
    ctx = (attn @ V).transpose(0, 2, 1, 3).reshape(B * S, E)
    out = (ctx @ wfc).reshape(B, S, E) + iq
    mean = out.mean(-1, keepdims=True)
    var = ((out - mean) ** 2).mean(-1, keepdims=True)
    return (out - mean) / np.sqrt(var + LN_EPS), attn


if __name__ == "__main__":
    key = jax.random.PRNGKey(0)
    kp, kq, kk, kv = jax.random.split(key, 4)

    B, S = 2, 8
    params = init_params(kp)
    input_Q = jax.random.normal(kq, (B, S, EMB), jnp.float32)
    input_K = jax.random.normal(kk, (B, S, EMB), jnp.float32)
    input_V = jax.random.normal(kv, (B, S, EMB), jnp.float32)
    attention_mask = jnp.zeros((B, S, S), dtype=jnp.bool_)   # unused (see note above)

    fwd = jax.jit(multi_head_attention)
    out, attn = fwd(params, input_Q, input_K, input_V, attention_mask)
    out = jax.block_until_ready(out)
    attn = jax.block_until_ready(attn)

    ref_out, ref_attn = _ref_forward(params, input_Q, input_K, input_V)
    # bf16 MXU operands (f32 accumulation) -> tolerances sized for bf16 compute.
    np.testing.assert_allclose(np.asarray(out), ref_out, rtol=2e-2, atol=1e-2)
    np.testing.assert_allclose(np.asarray(attn), ref_attn, rtol=2e-2, atol=5e-3)

    assert out.shape == (B, S, EMB) and attn.shape == (B, HEADS, S, S)
    print("KERNEL_OK")
</pallas_src>

<mosaic_0001>
module attributes {stable_mosaic.version = 11 : i64} {
  func.func @_qkv_proj_kernel(%arg0: i32, %arg1: memref<16x512xf32, #tpu.memory_space<vmem>>, %arg2: memref<16x512xf32, #tpu.memory_space<vmem>>, %arg3: memref<16x512xf32, #tpu.memory_space<vmem>>, %arg4: memref<512x512xbf16, #tpu.memory_space<vmem>>, %arg5: memref<512x512xbf16, #tpu.memory_space<vmem>>, %arg6: memref<512x512xbf16, #tpu.memory_space<vmem>>, %arg7: memref<16x512xbf16, #tpu.memory_space<vmem>>, %arg8: memref<16x512xbf16, #tpu.memory_space<vmem>>, %arg9: memref<16x512xbf16, #tpu.memory_space<vmem>>) attributes {dimension_semantics = [#tpu.dimension_semantics<parallel>], iteration_bounds = array<i64: 1>, scalar_prefetch = 0 : i64, scratch_operands = 0 : i64, tpu.core_type = #tpu.core_type<tc>, window_params = [{transform_indices = @transform_0, window_bounds = array<i64: 16, 512>}, {transform_indices = @transform_1, window_bounds = array<i64: 16, 512>}, {transform_indices = @transform_2, window_bounds = array<i64: 16, 512>}, {pipeline_mode = #tpu.pipeline_mode<synchronous>, transform_indices = @transform_3, window_bounds = array<i64: 512, 512>}, {pipeline_mode = #tpu.pipeline_mode<synchronous>, transform_indices = @transform_4, window_bounds = array<i64: 512, 512>}, {pipeline_mode = #tpu.pipeline_mode<synchronous>, transform_indices = @transform_5, window_bounds = array<i64: 512, 512>}, {transform_indices = @transform_6, window_bounds = array<i64: 16, 512>}, {transform_indices = @transform_7, window_bounds = array<i64: 16, 512>}, {transform_indices = @transform_8, window_bounds = array<i64: 16, 512>}]} {
    %c0 = arith.constant 0 : index
    %c0_0 = arith.constant 0 : index
    %0 = vector.load %arg1[%c0, %c0_0] : memref<16x512xf32, #tpu.memory_space<vmem>>, vector<16x512xf32>
    %1 = arith.truncf %0 : vector<16x512xf32> to vector<16x512xbf16>
    %c0_1 = arith.constant 0 : index
    %c0_2 = arith.constant 0 : index
    %2 = vector.load %arg4[%c0_1, %c0_2] : memref<512x512xbf16, #tpu.memory_space<vmem>>, vector<512x512xbf16>
    %cst = arith.constant dense<0.000000e+00> : vector<16x512xf32>
    %3 = tpu.matmul %1, %2, %cst {dimension_numbers = #tpu.dot_dimension_numbers<[1], [0], [0], [1], [0, 0, 1, 1], [], []>} : vector<16x512xbf16>, vector<512x512xbf16>, vector<16x512xf32> -> vector<16x512xf32>
    %4 = arith.truncf %3 : vector<16x512xf32> to vector<16x512xbf16>
    %c0_3 = arith.constant 0 : index
    %c0_4 = arith.constant 0 : index
    %5 = vector.load %arg7[%c0_3, %c0_4] : memref<16x512xbf16, #tpu.memory_space<vmem>>, vector<16x512xbf16>
    tpu.vector_store %arg7[%c0_3, %c0_4], %4 {strides = array<i32>} : memref<16x512xbf16, #tpu.memory_space<vmem>>, vector<16x512xbf16>,
    %c0_5 = arith.constant 0 : index
    %c0_6 = arith.constant 0 : index
    %6 = vector.load %arg2[%c0_5, %c0_6] : memref<16x512xf32, #tpu.memory_space<vmem>>, vector<16x512xf32>
    %7 = arith.truncf %6 : vector<16x512xf32> to vector<16x512xbf16>
    %c0_7 = arith.constant 0 : index
    %c0_8 = arith.constant 0 : index
    %8 = vector.load %arg5[%c0_7, %c0_8] : memref<512x512xbf16, #tpu.memory_space<vmem>>, vector<512x512xbf16>
    %cst_9 = arith.constant dense<0.000000e+00> : vector<16x512xf32>
    %9 = tpu.matmul %7, %8, %cst_9 {dimension_numbers = #tpu.dot_dimension_numbers<[1], [0], [0], [1], [0, 0, 1, 1], [], []>} : vector<16x512xbf16>, vector<512x512xbf16>, vector<16x512xf32> -> vector<16x512xf32>
    %10 = arith.truncf %9 : vector<16x512xf32> to vector<16x512xbf16>
    %c0_10 = arith.constant 0 : index
    %c0_11 = arith.constant 0 : index
    %11 = vector.load %arg8[%c0_10, %c0_11] : memref<16x512xbf16, #tpu.memory_space<vmem>>, vector<16x512xbf16>
    tpu.vector_store %arg8[%c0_10, %c0_11], %10 {strides = array<i32>} : memref<16x512xbf16, #tpu.memory_space<vmem>>, vector<16x512xbf16>,
    %c0_12 = arith.constant 0 : index
    %c0_13 = arith.constant 0 : index
    %12 = vector.load %arg3[%c0_12, %c0_13] : memref<16x512xf32, #tpu.memory_space<vmem>>, vector<16x512xf32>
    %13 = arith.truncf %12 : vector<16x512xf32> to vector<16x512xbf16>
    %c0_14 = arith.constant 0 : index
    %c0_15 = arith.constant 0 : index
    %14 = vector.load %arg6[%c0_14, %c0_15] : memref<512x512xbf16, #tpu.memory_space<vmem>>, vector<512x512xbf16>
    %cst_16 = arith.constant dense<0.000000e+00> : vector<16x512xf32>
    %15 = tpu.matmul %13, %14, %cst_16 {dimension_numbers = #tpu.dot_dimension_numbers<[1], [0], [0], [1], [0, 0, 1, 1], [], []>} : vector<16x512xbf16>, vector<512x512xbf16>, vector<16x512xf32> -> vector<16x512xf32>
    %16 = arith.truncf %15 : vector<16x512xf32> to vector<16x512xbf16>
    %c0_17 = arith.constant 0 : index
    %c0_18 = arith.constant 0 : index
    %17 = vector.load %arg9[%c0_17, %c0_18] : memref<16x512xbf16, #tpu.memory_space<vmem>>, vector<16x512xbf16>
    tpu.vector_store %arg9[%c0_17, %c0_18], %16 {strides = array<i32>} : memref<16x512xbf16, #tpu.memory_space<vmem>>, vector<16x512xbf16>,
    return
  }
  func.func @transform_0(%arg0: i32) -> (i32, i32) {
    %c0_i32 = arith.constant 0 : i32
    %c0_i32_0 = arith.constant 0 : i32
    return %arg0, %c0_i32 : i32, i32
  }
  func.func @transform_1(%arg0: i32) -> (i32, i32) {
    %c0_i32 = arith.constant 0 : i32
    %c0_i32_0 = arith.constant 0 : i32
    return %arg0, %c0_i32 : i32, i32
  }
  func.func @transform_2(%arg0: i32) -> (i32, i32) {
    %c0_i32 = arith.constant 0 : i32
    %c0_i32_0 = arith.constant 0 : i32
    return %arg0, %c0_i32 : i32, i32
  }
  func.func @transform_3(%arg0: i32) -> (i32, i32) {
    %c0_i32 = arith.constant 0 : i32
    %c0_i32_0 = arith.constant 0 : i32
    %c0_i32_1 = arith.constant 0 : i32
    return %c0_i32, %c0_i32_0 : i32, i32
  }
  func.func @transform_4(%arg0: i32) -> (i32, i32) {
    %c0_i32 = arith.constant 0 : i32
    %c0_i32_0 = arith.constant 0 : i32
    %c0_i32_1 = arith.constant 0 : i32
    return %c0_i32, %c0_i32_0 : i32, i32
  }
  func.func @transform_5(%arg0: i32) -> (i32, i32) {
    %c0_i32 = arith.constant 0 : i32
    %c0_i32_0 = arith.constant 0 : i32
    %c0_i32_1 = arith.constant 0 : i32
    return %c0_i32, %c0_i32_0 : i32, i32
  }
  func.func @transform_6(%arg0: i32) -> (i32, i32) {
    %c0_i32 = arith.constant 0 : i32
    %c0_i32_0 = arith.constant 0 : i32
    return %arg0, %c0_i32 : i32, i32
  }
  func.func @transform_7(%arg0: i32) -> (i32, i32) {
    %c0_i32 = arith.constant 0 : i32
    %c0_i32_0 = arith.constant 0 : i32
    return %arg0, %c0_i32 : i32, i32
  }
  func.func @transform_8(%arg0: i32) -> (i32, i32) {
    %c0_i32 = arith.constant 0 : i32
    %c0_i32_0 = arith.constant 0 : i32
    return %arg0, %c0_i32 : i32, i32
  }
}

module attributes {stable_mosaic.version = 11 : i64} {
  func.func @_fc_res_ln_kernel(%arg0: i32, %arg1: memref<16x512xbf16, #tpu.memory_space<vmem>>, %arg2: memref<16x512xf32, #tpu.memory_space<vmem>>, %arg3: memref<512x512xbf16, #tpu.memory_space<vmem>>, %arg4: memref<16x512xf32, #tpu.memory_space<vmem>>) attributes {dimension_semantics = [#tpu.dimension_semantics<parallel>], iteration_bounds = array<i64: 1>, scalar_prefetch = 0 : i64, scratch_operands = 0 : i64, tpu.core_type = #tpu.core_type<tc>, window_params = [{transform_indices = @transform_0, window_bounds = array<i64: 16, 512>}, {transform_indices = @transform_1, window_bounds = array<i64: 16, 512>}, {pipeline_mode = #tpu.pipeline_mode<synchronous>, transform_indices = @transform_2, window_bounds = array<i64: 512, 512>}, {transform_indices = @transform_3, window_bounds = array<i64: 16, 512>}]} {
    %c0 = arith.constant 0 : index
    %c0_0 = arith.constant 0 : index
    %0 = vector.load %arg1[%c0, %c0_0] : memref<16x512xbf16, #tpu.memory_space<vmem>>, vector<16x512xbf16>
    %c0_1 = arith.constant 0 : index
    %c0_2 = arith.constant 0 : index
    %1 = vector.load %arg3[%c0_1, %c0_2] : memref<512x512xbf16, #tpu.memory_space<vmem>>, vector<512x512xbf16>
    %cst = arith.constant dense<0.000000e+00> : vector<16x512xf32>
    %2 = tpu.matmul %0, %1, %cst {dimension_numbers = #tpu.dot_dimension_numbers<[1], [0], [0], [1], [0, 0, 1, 1], [], []>} : vector<16x512xbf16>, vector<512x512xbf16>, vector<16x512xf32> -> vector<16x512xf32>
    %c0_3 = arith.constant 0 : index
    %c0_4 = arith.constant 0 : index
    %3 = vector.load %arg2[%c0_3, %c0_4] : memref<16x512xf32, #tpu.memory_space<vmem>>, vector<16x512xf32>
    %4 = arith.addf %2, %3 : vector<16x512xf32>
    %cst_5 = arith.constant dense<0.000000e+00> : vector<16xf32>
    %5 = vector.multi_reduction <add>, %4, %cst_5 [1] : vector<16x512xf32> to vector<16xf32>
    %6 = vector.shape_cast %5 : vector<16xf32> to vector<16x1xf32>
    %cst_6 = arith.constant 5.120000e+02 : f32
    %7 = vector.broadcast %cst_6 : f32 to vector<16x1xf32>
    %8 = arith.divf %6, %7 : vector<16x1xf32>
    %9 = vector.broadcast %8 : vector<16x1xf32> to vector<16x512xf32>
    %10 = arith.subf %4, %9 : vector<16x512xf32>
    %11 = arith.mulf %10, %10 : vector<16x512xf32>
    %cst_7 = arith.constant dense<0.000000e+00> : vector<16xf32>
    %12 = vector.multi_reduction <add>, %11, %cst_7 [1] : vector<16x512xf32> to vector<16xf32>
    %13 = vector.shape_cast %12 : vector<16xf32> to vector<16x1xf32>
    %cst_8 = arith.constant 5.120000e+02 : f32
    %14 = vector.broadcast %cst_8 : f32 to vector<16x1xf32>
    %15 = arith.divf %13, %14 : vector<16x1xf32>
    %cst_9 = arith.constant 9.99999974E-6 : f32
    %16 = vector.broadcast %cst_9 : f32 to vector<16x1xf32>
    %17 = arith.addf %15, %16 : vector<16x1xf32>
    %18 = math.rsqrt %17 : vector<16x1xf32>
    %19 = vector.broadcast %18 : vector<16x1xf32> to vector<16x512xf32>
    %20 = arith.mulf %10, %19 : vector<16x512xf32>
    %c0_10 = arith.constant 0 : index
    %c0_11 = arith.constant 0 : index
    %21 = vector.load %arg4[%c0_10, %c0_11] : memref<16x512xf32, #tpu.memory_space<vmem>>, vector<16x512xf32>
    tpu.vector_store %arg4[%c0_10, %c0_11], %20 {strides = array<i32>} : memref<16x512xf32, #tpu.memory_space<vmem>>, vector<16x512xf32>,
    return
  }
  func.func @transform_0(%arg0: i32) -> (i32, i32) {
    %c0_i32 = arith.constant 0 : i32
    %c0_i32_0 = arith.constant 0 : i32
    return %arg0, %c0_i32 : i32, i32
  }
  func.func @transform_1(%arg0: i32) -> (i32, i32) {
    %c0_i32 = arith.constant 0 : i32
    %c0_i32_0 = arith.constant 0 : i32
    return %arg0, %c0_i32 : i32, i32
  }
  func.func @transform_2(%arg0: i32) -> (i32, i32) {
    %c0_i32 = arith.constant 0 : i32
    %c0_i32_0 = arith.constant 0 : i32
    %c0_i32_1 = arith.constant 0 : i32
    return %c0_i32, %c0_i32_0 : i32, i32
  }
  func.func @transform_3(%arg0: i32) -> (i32, i32) {
    %c0_i32 = arith.constant 0 : i32
    %c0_i32_0 = arith.constant 0 : i32
    return %arg0, %c0_i32 : i32, i32
  }
}

module attributes {stable_mosaic.version = 11 : i64} {
  func.func @_attention_kernel(%arg0: i32, %arg1: memref<1x8x512xbf16, #tpu.memory_space<vmem>>, %arg2: memref<1x8x512xbf16, #tpu.memory_space<vmem>>, %arg3: memref<1x8x512xbf16, #tpu.memory_space<vmem>>, %arg4: memref<1x8x512xbf16, #tpu.memory_space<vmem>>, %arg5: memref<1x8x8x8xf32, #tpu.memory_space<vmem>>) attributes {dimension_semantics = [#tpu.dimension_semantics<parallel>], iteration_bounds = array<i64: 2>, scalar_prefetch = 0 : i64, scratch_operands = 0 : i64, tpu.core_type = #tpu.core_type<tc>, window_params = [{transform_indices = @transform_0, window_bounds = array<i64: 1, 8, 512>}, {transform_indices = @transform_1, window_bounds = array<i64: 1, 8, 512>}, {transform_indices = @transform_2, window_bounds = array<i64: 1, 8, 512>}, {transform_indices = @transform_3, window_bounds = array<i64: 1, 8, 512>}, {transform_indices = @transform_4, window_bounds = array<i64: 1, 8, 8, 8>}]} {
    %c0 = arith.constant 0 : index
    %c0_0 = arith.constant 0 : index
    %c0_1 = arith.constant 0 : index
    %0 = vector.load %arg1[%c0, %c0_0, %c0_1] : memref<1x8x512xbf16, #tpu.memory_space<vmem>>, vector<1x8x64xbf16>
    %1 = vector.shape_cast %0 : vector<1x8x64xbf16> to vector<8x64xbf16>
    %c0_2 = arith.constant 0 : index
    %c0_3 = arith.constant 0 : index
    %c0_4 = arith.constant 0 : index
    %2 = vector.load %arg2[%c0_2, %c0_3, %c0_4] : memref<1x8x512xbf16, #tpu.memory_space<vmem>>, vector<1x8x64xbf16>
    %3 = vector.shape_cast %2 : vector<1x8x64xbf16> to vector<8x64xbf16>
    %c0_5 = arith.constant 0 : index
    %c0_6 = arith.constant 0 : index
    %c0_7 = arith.constant 0 : index
    %4 = vector.load %arg3[%c0_5, %c0_6, %c0_7] : memref<1x8x512xbf16, #tpu.memory_space<vmem>>, vector<1x8x64xbf16>
    %5 = vector.shape_cast %4 : vector<1x8x64xbf16> to vector<8x64xbf16>
    %cst = arith.constant dense<0.000000e+00> : vector<8x8xf32>
    %6 = tpu.matmul %1, %3, %cst {dimension_numbers = #tpu.dot_dimension_numbers<[1], [1], [0], [0], [0, 0, 1, 0], [], []>} : vector<8x64xbf16>, vector<8x64xbf16>, vector<8x8xf32> -> vector<8x8xf32>
    %cst_8 = arith.constant 1.250000e-01 : f32
    %7 = vector.broadcast %cst_8 : f32 to vector<8x8xf32>
    %8 = arith.mulf %6, %7 : vector<8x8xf32>
    %cst_9 = arith.constant dense<0xFF800000> : vector<8xf32>
    %9 = vector.multi_reduction <maximumf>, %8, %cst_9 [1] : vector<8x8xf32> to vector<8xf32>
    %10 = vector.shape_cast %9 : vector<8xf32> to vector<8x1xf32>
    %11 = vector.broadcast %10 : vector<8x1xf32> to vector<8x8xf32>
    %12 = arith.subf %8, %11 : vector<8x8xf32>
    %13 = math.exp %12 : vector<8x8xf32>
    %cst_10 = arith.constant dense<0.000000e+00> : vector<8xf32>
    %14 = vector.multi_reduction <add>, %13, %cst_10 [1] : vector<8x8xf32> to vector<8xf32>
    %15 = vector.shape_cast %14 : vector<8xf32> to vector<8x1xf32>
    %16 = tpu.reciprocal %15 {approx = true} : vector<8x1xf32> -> vector<8x1xf32>
    %17 = vector.broadcast %16 : vector<8x1xf32> to vector<8x8xf32>
    %18 = arith.mulf %13, %17 : vector<8x8xf32>
    %c0_11 = arith.constant 0 : index
    %c0_12 = arith.constant 0 : index
    %c0_13 = arith.constant 0 : index
    %c0_14 = arith.constant 0 : index
    %19 = vector.load %arg5[%c0_11, %c0_12, %c0_13, %c0_14] : memref<1x8x8x8xf32, #tpu.memory_space<vmem>>, vector<1x1x8x8xf32>
    %20 = vector.shape_cast %19 : vector<1x1x8x8xf32> to vector<8x8xf32>
    %21 = vector.shape_cast %18 : vector<8x8xf32> to vector<1x1x8x8xf32>
    tpu.vector_store %arg5[%c0_11, %c0_12, %c0_13, %c0_14], %21 {strides = array<i32>} : memref<1x8x8x8xf32, #tpu.memory_space<vmem>>, vector<1x1x8x8xf32>,
    %22 = arith.truncf %18 : vector<8x8xf32> to vector<8x8xbf16>
    %cst_15 = arith.constant dense<0.000000e+00> : vector<8x64xf32>
    %23 = tpu.matmul %22, %5, %cst_15 {dimension_numbers = #tpu.dot_dimension_numbers<[1], [0], [0], [1], [0, 0, 1, 1], [], []>} : vector<8x8xbf16>, vector<8x64xbf16>, vector<8x64xf32> -> vector<8x64xf32>
    %24 = arith.truncf %23 : vector<8x64xf32> to vector<8x64xbf16>
    %c0_16 = arith.constant 0 : index
    %c0_17 = arith.constant 0 : index
    %c0_18 = arith.constant 0 : index
    %25 = vector.load %arg4[%c0_16, %c0_17, %c0_18] : memref<1x8x512xbf16, #tpu.memory_space<vmem>>, vector<1x8x64xbf16>
    %26 = vector.shape_cast %25 : vector<1x8x64xbf16> to vector<8x64xbf16>
    %27 = vector.shape_cast %24 : vector<8x64xbf16> to vector<1x8x64xbf16>
    tpu.vector_store %arg4[%c0_16, %c0_17, %c0_18], %27 {strides = array<i32>} : memref<1x8x512xbf16, #tpu.memory_space<vmem>>, vector<1x8x64xbf16>,
    %c0_19 = arith.constant 0 : index
    %c0_20 = arith.constant 0 : index
    %c64 = arith.constant 64 : index
    %28 = vector.load %arg1[%c0_19, %c0_20, %c64] : memref<1x8x512xbf16, #tpu.memory_space<vmem>>, vector<1x8x64xbf16>
    %29 = vector.shape_cast %28 : vector<1x8x64xbf16> to vector<8x64xbf16>
    %c0_21 = arith.constant 0 : index
    %c0_22 = arith.constant 0 : index
    %c64_23 = arith.constant 64 : index
    %30 = vector.load %arg2[%c0_21, %c0_22, %c64_23] : memref<1x8x512xbf16, #tpu.memory_space<vmem>>, vector<1x8x64xbf16>
    %31 = vector.shape_cast %30 : vector<1x8x64xbf16> to vector<8x64xbf16>
    %c0_24 = arith.constant 0 : index
    %c0_25 = arith.constant 0 : index
    %c64_26 = arith.constant 64 : index
    %32 = vector.load %arg3[%c0_24, %c0_25, %c64_26] : memref<1x8x512xbf16, #tpu.memory_space<vmem>>, vector<1x8x64xbf16>
    %33 = vector.shape_cast %32 : vector<1x8x64xbf16> to vector<8x64xbf16>
    %cst_27 = arith.constant dense<0.000000e+00> : vector<8x8xf32>
    %34 = tpu.matmul %29, %31, %cst_27 {dimension_numbers = #tpu.dot_dimension_numbers<[1], [1], [0], [0], [0, 0, 1, 0], [], []>} : vector<8x64xbf16>, vector<8x64xbf16>, vector<8x8xf32> -> vector<8x8xf32>
    %cst_28 = arith.constant 1.250000e-01 : f32
    %35 = vector.broadcast %cst_28 : f32 to vector<8x8xf32>
    %36 = arith.mulf %34, %35 : vector<8x8xf32>
    %cst_29 = arith.constant dense<0xFF800000> : vector<8xf32>
    %37 = vector.multi_reduction <maximumf>, %36, %cst_29 [1] : vector<8x8xf32> to vector<8xf32>
    %38 = vector.shape_cast %37 : vector<8xf32> to vector<8x1xf32>
    %39 = vector.broadcast %38 : vector<8x1xf32> to vector<8x8xf32>
    %40 = arith.subf %36, %39 : vector<8x8xf32>
    %41 = math.exp %40 : vector<8x8xf32>
    %cst_30 = arith.constant dense<0.000000e+00> : vector<8xf32>
    %42 = vector.multi_reduction <add>, %41, %cst_30 [1] : vector<8x8xf32> to vector<8xf32>
    %43 = vector.shape_cast %42 : vector<8xf32> to vector<8x1xf32>
    %44 = tpu.reciprocal %43 {approx = true} : vector<8x1xf32> -> vector<8x1xf32>
    %45 = vector.broadcast %44 : vector<8x1xf32> to vector<8x8xf32>
    %46 = arith.mulf %41, %45 : vector<8x8xf32>
    %c0_31 = arith.constant 0 : index
    %c1 = arith.constant 1 : index
    %c0_32 = arith.constant 0 : index
    %c0_33 = arith.constant 0 : index
    %47 = vector.load %arg5[%c0_31, %c1, %c0_32, %c0_33] : memref<1x8x8x8xf32, #tpu.memory_space<vmem>>, vector<1x1x8x8xf32>
    %48 = vector.shape_cast %47 : vector<1x1x8x8xf32> to vector<8x8xf32>
    %49 = vector.shape_cast %46 : vector<8x8xf32> to vector<1x1x8x8xf32>
    tpu.vector_store %arg5[%c0_31, %c1, %c0_32, %c0_33], %49 {strides = array<i32>} : memref<1x8x8x8xf32, #tpu.memory_space<vmem>>, vector<1x1x8x8xf32>,
    %50 = arith.truncf %46 : vector<8x8xf32> to vector<8x8xbf16>
    %cst_34 = arith.constant dense<0.000000e+00> : vector<8x64xf32>
    %51 = tpu.matmul %50, %33, %cst_34 {dimension_numbers = #tpu.dot_dimension_numbers<[1], [0], [0], [1], [0, 0, 1, 1], [], []>} : vector<8x8xbf16>, vector<8x64xbf16>, vector<8x64xf32> -> vector<8x64xf32>
    %52 = arith.truncf %51 : vector<8x64xf32> to vector<8x64xbf16>
    %c0_35 = arith.constant 0 : index
    %c0_36 = arith.constant 0 : index
    %c64_37 = arith.constant 64 : index
    %53 = vector.load %arg4[%c0_35, %c0_36, %c64_37] : memref<1x8x512xbf16, #tpu.memory_space<vmem>>, vector<1x8x64xbf16>
    %54 = vector.shape_cast %53 : vector<1x8x64xbf16> to vector<8x64xbf16>
    %55 = vector.shape_cast %52 : vector<8x64xbf16> to vector<1x8x64xbf16>
    tpu.vector_store %arg4[%c0_35, %c0_36, %c64_37], %55 {strides = array<i32>} : memref<1x8x512xbf16, #tpu.memory_space<vmem>>, vector<1x8x64xbf16>,
    %c0_38 = arith.constant 0 : index
    %c0_39 = arith.constant 0 : index
    %c128 = arith.constant 128 : index
    %56 = vector.load %arg1[%c0_38, %c0_39, %c128] : memref<1x8x512xbf16, #tpu.memory_space<vmem>>, vector<1x8x64xbf16>
    %57 = vector.shape_cast %56 : vector<1x8x64xbf16> to vector<8x64xbf16>
    %c0_40 = arith.constant 0 : index
    %c0_41 = arith.constant 0 : index
    %c128_42 = arith.constant 128 : index
    %58 = vector.load %arg2[%c0_40, %c0_41, %c128_42] : memref<1x8x512xbf16, #tpu.memory_space<vmem>>, vector<1x8x64xbf16>
    %59 = vector.shape_cast %58 : vector<1x8x64xbf16> to vector<8x64xbf16>
    %c0_43 = arith.constant 0 : index
    %c0_44 = arith.constant 0 : index
    %c128_45 = arith.constant 128 : index
    %60 = vector.load %arg3[%c0_43, %c0_44, %c128_45] : memref<1x8x512xbf16, #tpu.memory_space<vmem>>, vector<1x8x64xbf16>
    %61 = vector.shape_cast %60 : vector<1x8x64xbf16> to vector<8x64xbf16>
    %cst_46 = arith.constant dense<0.000000e+00> : vector<8x8xf32>
    %62 = tpu.matmul %57, %59, %cst_46 {dimension_numbers = #tpu.dot_dimension_numbers<[1], [1], [0], [0], [0, 0, 1, 0], [], []>} : vector<8x64xbf16>, vector<8x64xbf16>, vector<8x8xf32> -> vector<8x8xf32>
    %cst_47 = arith.constant 1.250000e-01 : f32
    %63 = vector.broadcast %cst_47 : f32 to vector<8x8xf32>
    %64 = arith.mulf %62, %63 : vector<8x8xf32>
    %cst_48 = arith.constant dense<0xFF800000> : vector<8xf32>
    %65 = vector.multi_reduction <maximumf>, %64, %cst_48 [1] : vector<8x8xf32> to vector<8xf32>
    %66 = vector.shape_cast %65 : vector<8xf32> to vector<8x1xf32>
    %67 = vector.broadcast %66 : vector<8x1xf32> to vector<8x8xf32>
    %68 = arith.subf %64, %67 : vector<8x8xf32>
    %69 = math.exp %68 : vector<8x8xf32>
    %cst_49 = arith.constant dense<0.000000e+00> : vector<8xf32>
    %70 = vector.multi_reduction <add>, %69, %cst_49 [1] : vector<8x8xf32> to vector<8xf32>
    %71 = vector.shape_cast %70 : vector<8xf32> to vector<8x1xf32>
    %72 = tpu.reciprocal %71 {approx = true} : vector<8x1xf32> -> vector<8x1xf32>
    %73 = vector.broadcast %72 : vector<8x1xf32> to vector<8x8xf32>
    %74 = arith.mulf %69, %73 : vector<8x8xf32>
    %c0_50 = arith.constant 0 : index
    %c2 = arith.constant 2 : index
    %c0_51 = arith.constant 0 : index
    %c0_52 = arith.constant 0 : index
    %75 = vector.load %arg5[%c0_50, %c2, %c0_51, %c0_52] : memref<1x8x8x8xf32, #tpu.memory_space<vmem>>, vector<1x1x8x8xf32>
    %76 = vector.shape_cast %75 : vector<1x1x8x8xf32> to vector<8x8xf32>
    %77 = vector.shape_cast %74 : vector<8x8xf32> to vector<1x1x8x8xf32>
    tpu.vector_store %arg5[%c0_50, %c2, %c0_51, %c0_52], %77 {strides = array<i32>} : memref<1x8x8x8xf32, #tpu.memory_space<vmem>>, vector<1x1x8x8xf32>,
    %78 = arith.truncf %74 : vector<8x8xf32> to vector<8x8xbf16>
    %cst_53 = arith.constant dense<0.000000e+00> : vector<8x64xf32>
    %79 = tpu.matmul %78, %61, %cst_53 {dimension_numbers = #tpu.dot_dimension_numbers<[1], [0], [0], [1], [0, 0, 1, 1], [], []>} : vector<8x8xbf16>, vector<8x64xbf16>, vector<8x64xf32> -> vector<8x64xf32>
    %80 = arith.truncf %79 : vector<8x64xf32> to vector<8x64xbf16>
    %c0_54 = arith.constant 0 : index
    %c0_55 = arith.constant 0 : index
    %c128_56 = arith.constant 128 : index
    %81 = vector.load %arg4[%c0_54, %c0_55, %c128_56] : memref<1x8x512xbf16, #tpu.memory_space<vmem>>, vector<1x8x64xbf16>
    %82 = vector.shape_cast %81 : vector<1x8x64xbf16> to vector<8x64xbf16>
    %83 = vector.shape_cast %80 : vector<8x64xbf16> to vector<1x8x64xbf16>
    tpu.vector_store %arg4[%c0_54, %c0_55, %c128_56], %83 {strides = array<i32>} : memref<1x8x512xbf16, #tpu.memory_space<vmem>>, vector<1x8x64xbf16>,
    %c0_57 = arith.constant 0 : index
    %c0_58 = arith.constant 0 : index
    %c192 = arith.constant 192 : index
    %84 = vector.load %arg1[%c0_57, %c0_58, %c192] : memref<1x8x512xbf16, #tpu.memory_space<vmem>>, vector<1x8x64xbf16>
    %85 = vector.shape_cast %84 : vector<1x8x64xbf16> to vector<8x64xbf16>
    %c0_59 = arith.constant 0 : index
    %c0_60 = arith.constant 0 : index
    %c192_61 = arith.constant 192 : index
    %86 = vector.load %arg2[%c0_59, %c0_60, %c192_61] : memref<1x8x512xbf16, #tpu.memory_space<vmem>>, vector<1x8x64xbf16>
    %87 = vector.shape_cast %86 : vector<1x8x64xbf16> to vector<8x64xbf16>
    %c0_62 = arith.constant 0 : index
    %c0_63 = arith.constant 0 : index
    %c192_64 = arith.constant 192 : index
    %88 = vector.load %arg3[%c0_62, %c0_63, %c192_64] : memref<1x8x512xbf16, #tpu.memory_space<vmem>>, vector<1x8x64xbf16>
    %89 = vector.shape_cast %88 : vector<1x8x64xbf16> to vector<8x64xbf16>
    %cst_65 = arith.constant dense<0.000000e+00> : vector<8x8xf32>
    %90 = tpu.matmul %85, %87, %cst_65 {dimension_numbers = #tpu.dot_dimension_numbers<[1], [1], [0], [0], [0, 0, 1, 0], [], []>} : vector<8x64xbf16>, vector<8x64xbf16>, vector<8x8xf32> -> vector<8x8xf32>
    %cst_66 = arith.constant 1.250000e-01 : f32
    %91 = vector.broadcast %cst_66 : f32 to vector<8x8xf32>
    %92 = arith.mulf %90, %91 : vector<8x8xf32>
    %cst_67 = arith.constant dense<0xFF800000> : vector<8xf32>
    %93 = vector.multi_reduction <maximumf>, %92, %cst_67 [1] : vector<8x8xf32> to vector<8xf32>
    %94 = vector.shape_cast %93 : vector<8xf32> to vector<8x1xf32>
    %95 = vector.broadcast %94 : vector<8x1xf32> to vector<8x8xf32>
    %96 = arith.subf %92, %95 : vector<8x8xf32>
    %97 = math.exp %96 : vector<8x8xf32>
    %cst_68 = arith.constant dense<0.000000e+00> : vector<8xf32>
    %98 = vector.multi_reduction <add>, %97, %cst_68 [1] : vector<8x8xf32> to vector<8xf32>
    %99 = vector.shape_cast %98 : vector<8xf32> to vector<8x1xf32>
    %100 = tpu.reciprocal %99 {approx = true} : vector<8x1xf32> -> vector<8x1xf32>
    %101 = vector.broadcast %100 : vector<8x1xf32> to vector<8x8xf32>
    %102 = arith.mulf %97, %101 : vector<8x8xf32>
    %c0_69 = arith.constant 0 : index
    %c3 = arith.constant 3 : index
    %c0_70 = arith.constant 0 : index
    %c0_71 = arith.constant 0 : index
    %103 = vector.load %arg5[%c0_69, %c3, %c0_70, %c0_71] : memref<1x8x8x8xf32, #tpu.memory_space<vmem>>, vector<1x1x8x8xf32>
    %104 = vector.shape_cast %103 : vector<1x1x8x8xf32> to vector<8x8xf32>
    %105 = vector.shape_cast %102 : vector<8x8xf32> to vector<1x1x8x8xf32>
    tpu.vector_store %arg5[%c0_69, %c3, %c0_70, %c0_71], %105 {strides = array<i32>} : memref<1x8x8x8xf32, #tpu.memory_space<vmem>>, vector<1x1x8x8xf32>,
    %106 = arith.truncf %102 : vector<8x8xf32> to vector<8x8xbf16>
    %cst_72 = arith.constant dense<0.000000e+00> : vector<8x64xf32>
    %107 = tpu.matmul %106, %89, %cst_72 {dimension_numbers = #tpu.dot_dimension_numbers<[1], [0], [0], [1], [0, 0, 1, 1], [], []>} : vector<8x8xbf16>, vector<8x64xbf16>, vector<8x64xf32> -> vector<8x64xf32>
    %108 = arith.truncf %107 : vector<8x64xf32> to vector<8x64xbf16>
    %c0_73 = arith.constant 0 : index
    %c0_74 = arith.constant 0 : index
    %c192_75 = arith.constant 192 : index
    %109 = vector.load %arg4[%c0_73, %c0_74, %c192_75] : memref<1x8x512xbf16, #tpu.memory_space<vmem>>, vector<1x8x64xbf16>
    %110 = vector.shape_cast %109 : vector<1x8x64xbf16> to vector<8x64xbf16>
    %111 = vector.shape_cast %108 : vector<8x64xbf16> to vector<1x8x64xbf16>
    tpu.vector_store %arg4[%c0_73, %c0_74, %c192_75], %111 {strides = array<i32>} : memref<1x8x512xbf16, #tpu.memory_space<vmem>>, vector<1x8x64xbf16>,
    %c0_76 = arith.constant 0 : index
    %c0_77 = arith.constant 0 : index
    %c256 = arith.constant 256 : index
    %112 = vector.load %arg1[%c0_76, %c0_77, %c256] : memref<1x8x512xbf16, #tpu.memory_space<vmem>>, vector<1x8x64xbf16>
    %113 = vector.shape_cast %112 : vector<1x8x64xbf16> to vector<8x64xbf16>
    %c0_78 = arith.constant 0 : index
    %c0_79 = arith.constant 0 : index
    %c256_80 = arith.constant 256 : index
    %114 = vector.load %arg2[%c0_78, %c0_79, %c256_80] : memref<1x8x512xbf16, #tpu.memory_space<vmem>>, vector<1x8x64xbf16>
    %115 = vector.shape_cast %114 : vector<1x8x64xbf16> to vector<8x64xbf16>
    %c0_81 = arith.constant 0 : index
    %c0_82 = arith.constant 0 : index
    %c256_83 = arith.constant 256 : index
    %116 = vector.load %arg3[%c0_81, %c0_82, %c256_83] : memref<1x8x512xbf16, #tpu.memory_space<vmem>>, vector<1x8x64xbf16>
    %117 = vector.shape_cast %116 : vector<1x8x64xbf16> to vector<8x64xbf16>
    %cst_84 = arith.constant dense<0.000000e+00> : vector<8x8xf32>
    %118 = tpu.matmul %113, %115, %cst_84 {dimension_numbers = #tpu.dot_dimension_numbers<[1], [1], [0], [0], [0, 0, 1, 0], [], []>} : vector<8x64xbf16>, vector<8x64xbf16>, vector<8x8xf32> -> vector<8x8xf32>
    %cst_85 = arith.constant 1.250000e-01 : f32
    %119 = vector.broadcast %cst_85 : f32 to vector<8x8xf32>
    %120 = arith.mulf %118, %119 : vector<8x8xf32>
    %cst_86 = arith.constant dense<0xFF800000> : vector<8xf32>
    %121 = vector.multi_reduction <maximumf>, %120, %cst_86 [1] : vector<8x8xf32> to vector<8xf32>
    %122 = vector.shape_cast %121 : vector<8xf32> to vector<8x1xf32>
    %123 = vector.broadcast %122 : vector<8x1xf32> to vector<8x8xf32>
    %124 = arith.subf %120, %123 : vector<8x8xf32>
    %125 = math.exp %124 : vector<8x8xf32>
    %cst_87 = arith.constant dense<0.000000e+00> : vector<8xf32>
    %126 = vector.multi_reduction <add>, %125, %cst_87 [1] : vector<8x8xf32> to vector<8xf32>
    %127 = vector.shape_cast %126 : vector<8xf32> to vector<8x1xf32>
    %128 = tpu.reciprocal %127 {approx = true} : vector<8x1xf32> -> vector<8x1xf32>
    %129 = vector.broadcast %128 : vector<8x1xf32> to vector<8x8xf32>
    %130 = arith.mulf %125, %129 : vector<8x8xf32>
    %c0_88 = arith.constant 0 : index
    %c4 = arith.constant 4 : index
    %c0_89 = arith.constant 0 : index
    %c0_90 = arith.constant 0 : index
    %131 = vector.load %arg5[%c0_88, %c4, %c0_89, %c0_90] : memref<1x8x8x8xf32, #tpu.memory_space<vmem>>, vector<1x1x8x8xf32>
    %132 = vector.shape_cast %131 : vector<1x1x8x8xf32> to vector<8x8xf32>
    %133 = vector.shape_cast %130 : vector<8x8xf32> to vector<1x1x8x8xf32>
    tpu.vector_store %arg5[%c0_88, %c4, %c0_89, %c0_90], %133 {strides = array<i32>} : memref<1x8x8x8xf32, #tpu.memory_space<vmem>>, vector<1x1x8x8xf32>,
    %134 = arith.truncf %130 : vector<8x8xf32> to vector<8x8xbf16>
    %cst_91 = arith.constant dense<0.000000e+00> : vector<8x64xf32>
    %135 = tpu.matmul %134, %117, %cst_91 {dimension_numbers = #tpu.dot_dimension_numbers<[1], [0], [0], [1], [0, 0, 1, 1], [], []>} : vector<8x8xbf16>, vector<8x64xbf16>, vector<8x64xf32> -> vector<8x64xf32>
    %136 = arith.truncf %135 : vector<8x64xf32> to vector<8x64xbf16>
    %c0_92 = arith.constant 0 : index
    %c0_93 = arith.constant 0 : index
    %c256_94 = arith.constant 256 : index
    %137 = vector.load %arg4[%c0_92, %c0_93, %c256_94] : memref<1x8x512xbf16, #tpu.memory_space<vmem>>, vector<1x8x64xbf16>
    %138 = vector.shape_cast %137 : vector<1x8x64xbf16> to vector<8x64xbf16>
    %139 = vector.shape_cast %136 : vector<8x64xbf16> to vector<1x8x64xbf16>
    tpu.vector_store %arg4[%c0_92, %c0_93, %c256_94], %139 {strides = array<i32>} : memref<1x8x512xbf16, #tpu.memory_space<vmem>>, vector<1x8x64xbf16>,
    %c0_95 = arith.constant 0 : index
    %c0_96 = arith.constant 0 : index
    %c320 = arith.constant 320 : index
    %140 = vector.load %arg1[%c0_95, %c0_96, %c320] : memref<1x8x512xbf16, #tpu.memory_space<vmem>>, vector<1x8x64xbf16>
    %141 = vector.shape_cast %140 : vector<1x8x64xbf16> to vector<8x64xbf16>
    %c0_97 = arith.constant 0 : index
    %c0_98 = arith.constant 0 : index
    %c320_99 = arith.constant 320 : index
    %142 = vector.load %arg2[%c0_97, %c0_98, %c320_99] : memref<1x8x512xbf16, #tpu.memory_space<vmem>>, vector<1x8x64xbf16>
    %143 = vector.shape_cast %142 : vector<1x8x64xbf16> to vector<8x64xbf16>
    %c0_100 = arith.constant 0 : index
    %c0_101 = arith.constant 0 : index
    %c320_102 = arith.constant 320 : index
    %144 = vector.load %arg3[%c0_100, %c0_101, %c320_102] : memref<1x8x512xbf16, #tpu.memory_space<vmem>>, vector<1x8x64xbf16>
    %145 = vector.shape_cast %144 : vector<1x8x64xbf16> to vector<8x64xbf16>
    %cst_103 = arith.constant dense<0.000000e+00> : vector<8x8xf32>
    %146 = tpu.matmul %141, %143, %cst_103 {dimension_numbers = #tpu.dot_dimension_numbers<[1], [1], [0], [0], [0, 0, 1, 0], [], []>} : vector<8x64xbf16>, vector<8x64xbf16>, vector<8x8xf32> -> vector<8x8xf32>
    %cst_104 = arith.constant 1.250000e-01 : f32
    %147 = vector.broadcast %cst_104 : f32 to vector<8x8xf32>
    %148 = arith.mulf %146, %147 : vector<8x8xf32>
    %cst_105 = arith.constant dense<0xFF800000> : vector<8xf32>
    %149 = vector.multi_reduction <maximumf>, %148, %cst_105 [1] : vector<8x8xf32> to vector<8xf32>
    %150 = vector.shape_cast %149 : vector<8xf32> to vector<8x1xf32>
    %151 = vector.broadcast %150 : vector<8x1xf32> to vector<8x8xf32>
    %152 = arith.subf %148, %151 : vector<8x8xf32>
    %153 = math.exp %152 : vector<8x8xf32>
    %cst_106 = arith.constant dense<0.000000e+00> : vector<8xf32>
    %154 = vector.multi_reduction <add>, %153, %cst_106 [1] : vector<8x8xf32> to vector<8xf32>
    %155 = vector.shape_cast %154 : vector<8xf32> to vector<8x1xf32>
    %156 = tpu.reciprocal %155 {approx = true} : vector<8x1xf32> -> vector<8x1xf32>
    %157 = vector.broadcast %156 : vector<8x1xf32> to vector<8x8xf32>
    %158 = arith.mulf %153, %157 : vector<8x8xf32>
    %c0_107 = arith.constant 0 : index
    %c5 = arith.constant 5 : index
    %c0_108 = arith.constant 0 : index
    %c0_109 = arith.constant 0 : index
    %159 = vector.load %arg5[%c0_107, %c5, %c0_108, %c0_109] : memref<1x8x8x8xf32, #tpu.memory_space<vmem>>, vector<1x1x8x8xf32>
    %160 = vector.shape_cast %159 : vector<1x1x8x8xf32> to vector<8x8xf32>
    %161 = vector.shape_cast %158 : vector<8x8xf32> to vector<1x1x8x8xf32>
    tpu.vector_store %arg5[%c0_107, %c5, %c0_108, %c0_109], %161 {strides = array<i32>} : memref<1x8x8x8xf32, #tpu.memory_space<vmem>>, vector<1x1x8x8xf32>,
    %162 = arith.truncf %158 : vector<8x8xf32> to vector<8x8xbf16>
    %cst_110 = arith.constant dense<0.000000e+00> : vector<8x64xf32>
    %163 = tpu.matmul %162, %145, %cst_110 {dimension_numbers = #tpu.dot_dimension_numbers<[1], [0], [0], [1], [0, 0, 1, 1], [], []>} : vector<8x8xbf16>, vector<8x64xbf16>, vector<8x64xf32> -> vector<8x64xf32>
    %164 = arith.truncf %163 : vector<8x64xf32> to vector<8x64xbf16>
    %c0_111 = arith.constant 0 : index
    %c0_112 = arith.constant 0 : index
    %c320_113 = arith.constant 320 : index
    %165 = vector.load %arg4[%c0_111, %c0_112, %c320_113] : memref<1x8x512xbf16, #tpu.memory_space<vmem>>, vector<1x8x64xbf16>
    %166 = vector.shape_cast %165 : vector<1x8x64xbf16> to vector<8x64xbf16>
    %167 = vector.shape_cast %164 : vector<8x64xbf16> to vector<1x8x64xbf16>
    tpu.vector_store %arg4[%c0_111, %c0_112, %c320_113], %167 {strides = array<i32>} : memref<1x8x512xbf16, #tpu.memory_space<vmem>>, vector<1x8x64xbf16>,
    %c0_114 = arith.constant 0 : index
    %c0_115 = arith.constant 0 : index
    %c384 = arith.constant 384 : index
    %168 = vector.load %arg1[%c0_114, %c0_115, %c384] : memref<1x8x512xbf16, #tpu.memory_space<vmem>>, vector<1x8x64xbf16>
    %169 = vector.shape_cast %168 : vector<1x8x64xbf16> to vector<8x64xbf16>
    %c0_116 = arith.constant 0 : index
    %c0_117 = arith.constant 0 : index
    %c384_118 = arith.constant 384 : index
    %170 = vector.load %arg2[%c0_116, %c0_117, %c384_118] : memref<1x8x512xbf16, #tpu.memory_space<vmem>>, vector<1x8x64xbf16>
    %171 = vector.shape_cast %170 : vector<1x8x64xbf16> to vector<8x64xbf16>
    %c0_119 = arith.constant 0 : index
    %c0_120 = arith.constant 0 : index
    %c384_121 = arith.constant 384 : index
    %172 = vector.load %arg3[%c0_119, %c0_120, %c384_121] : memref<1x8x512xbf16, #tpu.memory_space<vmem>>, vector<1x8x64xbf16>
    %173 = vector.shape_cast %172 : vector<1x8x64xbf16> to vector<8x64xbf16>
    %cst_122 = arith.constant dense<0.000000e+00> : vector<8x8xf32>
    %174 = tpu.matmul %169, %171, %cst_122 {dimension_numbers = #tpu.dot_dimension_numbers<[1], [1], [0], [0], [0, 0, 1, 0], [], []>} : vector<8x64xbf16>, vector<8x64xbf16>, vector<8x8xf32> -> vector<8x8xf32>
    %cst_123 = arith.constant 1.250000e-01 : f32
    %175 = vector.broadcast %cst_123 : f32 to vector<8x8xf32>
    %176 = arith.mulf %174, %175 : vector<8x8xf32>
    %cst_124 = arith.constant dense<0xFF800000> : vector<8xf32>
    %177 = vector.multi_reduction <maximumf>, %176, %cst_124 [1] : vector<8x8xf32> to vector<8xf32>
    %178 = vector.shape_cast %177 : vector<8xf32> to vector<8x1xf32>
    %179 = vector.broadcast %178 : vector<8x1xf32> to vector<8x8xf32>
    %180 = arith.subf %176, %179 : vector<8x8xf32>
    %181 = math.exp %180 : vector<8x8xf32>
    %cst_125 = arith.constant dense<0.000000e+00> : vector<8xf32>
    %182 = vector.multi_reduction <add>, %181, %cst_125 [1] : vector<8x8xf32> to vector<8xf32>
    %183 = vector.shape_cast %182 : vector<8xf32> to vector<8x1xf32>
    %184 = tpu.reciprocal %183 {approx = true} : vector<8x1xf32> -> vector<8x1xf32>
    %185 = vector.broadcast %184 : vector<8x1xf32> to vector<8x8xf32>
    %186 = arith.mulf %181, %185 : vector<8x8xf32>
    %c0_126 = arith.constant 0 : index
    %c6 = arith.constant 6 : index
    %c0_127 = arith.constant 0 : index
    %c0_128 = arith.constant 0 : index
    %187 = vector.load %arg5[%c0_126, %c6, %c0_127, %c0_128] : memref<1x8x8x8xf32, #tpu.memory_space<vmem>>, vector<1x1x8x8xf32>
    %188 = vector.shape_cast %187 : vector<1x1x8x8xf32> to vector<8x8xf32>
    %189 = vector.shape_cast %186 : vector<8x8xf32> to vector<1x1x8x8xf32>
    tpu.vector_store %arg5[%c0_126, %c6, %c0_127, %c0_128], %189 {strides = array<i32>} : memref<1x8x8x8xf32, #tpu.memory_space<vmem>>, vector<1x1x8x8xf32>,
    %190 = arith.truncf %186 : vector<8x8xf32> to vector<8x8xbf16>
    %cst_129 = arith.constant dense<0.000000e+00> : vector<8x64xf32>
    %191 = tpu.matmul %190, %173, %cst_129 {dimension_numbers = #tpu.dot_dimension_numbers<[1], [0], [0], [1], [0, 0, 1, 1], [], []>} : vector<8x8xbf16>, vector<8x64xbf16>, vector<8x64xf32> -> vector<8x64xf32>
    %192 = arith.truncf %191 : vector<8x64xf32> to vector<8x64xbf16>
    %c0_130 = arith.constant 0 : index
    %c0_131 = arith.constant 0 : index
    %c384_132 = arith.constant 384 : index
    %193 = vector.load %arg4[%c0_130, %c0_131, %c384_132] : memref<1x8x512xbf16, #tpu.memory_space<vmem>>, vector<1x8x64xbf16>
    %194 = vector.shape_cast %193 : vector<1x8x64xbf16> to vector<8x64xbf16>
    %195 = vector.shape_cast %192 : vector<8x64xbf16> to vector<1x8x64xbf16>
    tpu.vector_store %arg4[%c0_130, %c0_131, %c384_132], %195 {strides = array<i32>} : memref<1x8x512xbf16, #tpu.memory_space<vmem>>, vector<1x8x64xbf16>,
    %c0_133 = arith.constant 0 : index
    %c0_134 = arith.constant 0 : index
    %c448 = arith.constant 448 : index
    %196 = vector.load %arg1[%c0_133, %c0_134, %c448] : memref<1x8x512xbf16, #tpu.memory_space<vmem>>, vector<1x8x64xbf16>
    %197 = vector.shape_cast %196 : vector<1x8x64xbf16> to vector<8x64xbf16>
    %c0_135 = arith.constant 0 : index
    %c0_136 = arith.constant 0 : index
    %c448_137 = arith.constant 448 : index
    %198 = vector.load %arg2[%c0_135, %c0_136, %c448_137] : memref<1x8x512xbf16, #tpu.memory_space<vmem>>, vector<1x8x64xbf16>
    %199 = vector.shape_cast %198 : vector<1x8x64xbf16> to vector<8x64xbf16>
    %c0_138 = arith.constant 0 : index
    %c0_139 = arith.constant 0 : index
    %c448_140 = arith.constant 448 : index
    %200 = vector.load %arg3[%c0_138, %c0_139, %c448_140] : memref<1x8x512xbf16, #tpu.memory_space<vmem>>, vector<1x8x64xbf16>
    %201 = vector.shape_cast %200 : vector<1x8x64xbf16> to vector<8x64xbf16>
    %cst_141 = arith.constant dense<0.000000e+00> : vector<8x8xf32>
    %202 = tpu.matmul %197, %199, %cst_141 {dimension_numbers = #tpu.dot_dimension_numbers<[1], [1], [0], [0], [0, 0, 1, 0], [], []>} : vector<8x64xbf16>, vector<8x64xbf16>, vector<8x8xf32> -> vector<8x8xf32>
    %cst_142 = arith.constant 1.250000e-01 : f32
    %203 = vector.broadcast %cst_142 : f32 to vector<8x8xf32>
    %204 = arith.mulf %202, %203 : vector<8x8xf32>
    %cst_143 = arith.constant dense<0xFF800000> : vector<8xf32>
    %205 = vector.multi_reduction <maximumf>, %204, %cst_143 [1] : vector<8x8xf32> to vector<8xf32>
    %206 = vector.shape_cast %205 : vector<8xf32> to vector<8x1xf32>
    %207 = vector.broadcast %206 : vector<8x1xf32> to vector<8x8xf32>
    %208 = arith.subf %204, %207 : vector<8x8xf32>
    %209 = math.exp %208 : vector<8x8xf32>
    %cst_144 = arith.constant dense<0.000000e+00> : vector<8xf32>
    %210 = vector.multi_reduction <add>, %209, %cst_144 [1] : vector<8x8xf32> to vector<8xf32>
    %211 = vector.shape_cast %210 : vector<8xf32> to vector<8x1xf32>
    %212 = tpu.reciprocal %211 {approx = true} : vector<8x1xf32> -> vector<8x1xf32>
    %213 = vector.broadcast %212 : vector<8x1xf32> to vector<8x8xf32>
    %214 = arith.mulf %209, %213 : vector<8x8xf32>
    %c0_145 = arith.constant 0 : index
    %c7 = arith.constant 7 : index
    %c0_146 = arith.constant 0 : index
    %c0_147 = arith.constant 0 : index
    %215 = vector.load %arg5[%c0_145, %c7, %c0_146, %c0_147] : memref<1x8x8x8xf32, #tpu.memory_space<vmem>>, vector<1x1x8x8xf32>
    %216 = vector.shape_cast %215 : vector<1x1x8x8xf32> to vector<8x8xf32>
    %217 = vector.shape_cast %214 : vector<8x8xf32> to vector<1x1x8x8xf32>
    tpu.vector_store %arg5[%c0_145, %c7, %c0_146, %c0_147], %217 {strides = array<i32>} : memref<1x8x8x8xf32, #tpu.memory_space<vmem>>, vector<1x1x8x8xf32>,
    %218 = arith.truncf %214 : vector<8x8xf32> to vector<8x8xbf16>
    %cst_148 = arith.constant dense<0.000000e+00> : vector<8x64xf32>
    %219 = tpu.matmul %218, %201, %cst_148 {dimension_numbers = #tpu.dot_dimension_numbers<[1], [0], [0], [1], [0, 0, 1, 1], [], []>} : vector<8x8xbf16>, vector<8x64xbf16>, vector<8x64xf32> -> vector<8x64xf32>
    %220 = arith.truncf %219 : vector<8x64xf32> to vector<8x64xbf16>
    %c0_149 = arith.constant 0 : index
    %c0_150 = arith.constant 0 : index
    %c448_151 = arith.constant 448 : index
    %221 = vector.load %arg4[%c0_149, %c0_150, %c448_151] : memref<1x8x512xbf16, #tpu.memory_space<vmem>>, vector<1x8x64xbf16>
    %222 = vector.shape_cast %221 : vector<1x8x64xbf16> to vector<8x64xbf16>
    %223 = vector.shape_cast %220 : vector<8x64xbf16> to vector<1x8x64xbf16>
    tpu.vector_store %arg4[%c0_149, %c0_150, %c448_151], %223 {strides = array<i32>} : memref<1x8x512xbf16, #tpu.memory_space<vmem>>, vector<1x8x64xbf16>,
    return
  }
  func.func @transform_0(%arg0: i32) -> (i32, i32, i32) {
    %c0_i32 = arith.constant 0 : i32
    %c0_i32_0 = arith.constant 0 : i32
    %c0_i32_1 = arith.constant 0 : i32
    return %arg0, %c0_i32, %c0_i32_0 : i32, i32, i32
  }
  func.func @transform_1(%arg0: i32) -> (i32, i32, i32) {
    %c0_i32 = arith.constant 0 : i32
    %c0_i32_0 = arith.constant 0 : i32
    %c0_i32_1 = arith.constant 0 : i32
    return %arg0, %c0_i32, %c0_i32_0 : i32, i32, i32
  }
  func.func @transform_2(%arg0: i32) -> (i32, i32, i32) {
    %c0_i32 = arith.constant 0 : i32
    %c0_i32_0 = arith.constant 0 : i32
    %c0_i32_1 = arith.constant 0 : i32
    return %arg0, %c0_i32, %c0_i32_0 : i32, i32, i32
  }
  func.func @transform_3(%arg0: i32) -> (i32, i32, i32) {
    %c0_i32 = arith.constant 0 : i32
    %c0_i32_0 = arith.constant 0 : i32
    %c0_i32_1 = arith.constant 0 : i32
    return %arg0, %c0_i32, %c0_i32_0 : i32, i32, i32
  }
  func.func @transform_4(%arg0: i32) -> (i32, i32, i32, i32) {
    %c0_i32 = arith.constant 0 : i32
    %c0_i32_0 = arith.constant 0 : i32
    %c0_i32_1 = arith.constant 0 : i32
    %c0_i32_2 = arith.constant 0 : i32
    return %arg0, %c0_i32, %c0_i32_0, %c0_i32_1 : i32, i32, i32, i32
  }
}

</mosaic_0001>

<llo_original>
// kernel: multi_head_attention.4
$region0: #{multi_head_attention.4}
  #allocation0 [shape = 'u32[]', space=smem, size = 0x4, offset = 0x4, fixed_abs, tag = 'smem constant byte address 0x4 - core index']
  #allocation1 [shape = 'u32[72,128]{1,0:T(1,128)}', space=vmem, size = 0x9000, scoped, tag = 'internal scratch']
  %s0 = inlined_call_operand.vmem [shape: bf16[2,8,512], index: 0, kind: input, shape index: {}]
  %s1 = inlined_call_operand.vmem [shape: bf16[2,8,512], index: 1, kind: input, shape index: {}]
  %s2 = inlined_call_operand.vmem [shape: bf16[2,8,512], index: 2, kind: input, shape index: {}]
  %s3 = inlined_call_operand.vmem [shape: bf16[2,8,512], index: 3, kind: output, shape index: {0}]
  %s4 = inlined_call_operand.hbm [shape: f32[2,8,8,8], index: 4, kind: output, shape index: {1}]
  %5 = xla_tuple %s3, %s4
  %s6 = sld [smem:[#allocation0]]
  $region53: #{multi_head_attention.4} parent=0
    _
  %s8 = ssub.s32 1, %s6
  %s9 = scalar_select 0, %s8, %s6
  $region1: #{multi_head_attention.4} parent=0
    #allocation2 [shape = 'u8[65536]{0}', space=vmem, size = 0x10000, scoped, tag = 'output window, operand 1']
    #allocation3 [shape = 's32[2]{0}', space=sflag, size = 0x8, scoped, tag = 'scoped memory for multi_head_attention.4']
    %10 = vsyncpa [#allocation3], 0
    %s11 = scalar_lea.sflag [#allocation3], 1
    %12 = vsyncpa %s11, 0
    loop: start=0, step=1, limit=4
    $region2: #{multi_head_attention.4} parent=1 // loop_pre_header
      _
    $region3: #{multi_head_attention.4} parent=1 // loop_header
      %s14 = sphi 0, %s18
      %p15 = scmp.ge.s32.totalorder %s14, 4
      %s24 = sphi 0, %s26
      %s27 = sphi 0, %s24
      %s28 = sphi 0, %s27
      %s44 = sphi 0, %s28
      %s50 = sphi 0, %s52
      %s53 = sphi 0, %s50
      %s54 = sphi 0, %s53
      %s70 = sphi 0, %s54
      %s76 = sphi 0, %s78
      %s79 = sphi 0, %s76
      %s80 = sphi 0, %s79
      %s96 = sphi 0, %s80
      %s102 = sphi 0, %s104
      %s105 = sphi 0, %s102
      %s106 = sphi 0, %s105
      %s122 = sphi 0, %s106
      %s128 = sphi 0, %s130
      %s131 = sphi 0, %s128
      %s132 = sphi 0, %s131
      %s148 = sphi 0, %s132
    $region4: #{multi_head_attention.4} parent=1 // loop_header_branch
      %17 = sbr.rel (%p15) target = $region8
    $region5: #{multi_head_attention.4} parent=1 // loop_body
      %s19 = ssub.s32 %s14, 1
      %s20 = ssub.s32 %s14, 2
      %s21 = sadd.s32 %s14, 1
      %s22 = ssub.s32 %s14, %s21
      %p23 = scmp.eq.s32.totalorder %s22, 0
      %s25 = sadd.s32 %s24, 1
      %s26 = scalar_select %p23, %s24, %s25
      %p29 = pneg %p23
      %p30 = scmp.eq.s32.totalorder %s14, 1
      %p31 = por %p29, %p30
      %p32 = scmp.ne.s32.totalorder %s24, %s27
      %p33 = scmp.eq.s32.totalorder %s14, 0
      %p34 = por %p32, %p33
      %p35 = scmp.ne.s32.totalorder %s24, %s27
      %p36 = scmp.eq.s32.totalorder %s19, 1
      %p37 = por %p35, %p36
      %p38 = scmp.ne.s32.totalorder %s27, %s28
      %p39 = scmp.eq.s32.totalorder %s19, 0
      %p40 = por %p38, %p39
      %p41 = scmp.ne.s32.totalorder %s27, %s28
      %p42 = scmp.eq.s32.totalorder %s20, 1
      %p43 = por %p41, %p42
      %p45 = scmp.ne.s32.totalorder %s28, %s44
      %p46 = scmp.eq.s32.totalorder %s20, 0
      %p47 = por %p45, %p46
      %s48 = ssub.s32 %s14, %s21
      %p49 = scmp.eq.s32.totalorder %s48, 0
      %s51 = sadd.s32 %s50, 1
      %s52 = scalar_select %p49, %s50, %s51
      %p55 = pneg %p49
      %p56 = scmp.eq.s32.totalorder %s14, 1
      %p57 = por %p55, %p56
      %p58 = scmp.ne.s32.totalorder %s50, %s53
      %p59 = scmp.eq.s32.totalorder %s14, 0
      %p60 = por %p58, %p59
      %p61 = scmp.ne.s32.totalorder %s50, %s53
      %p62 = scmp.eq.s32.totalorder %s19, 1
      %p63 = por %p61, %p62
      %p64 = scmp.ne.s32.totalorder %s53, %s54
      %p65 = scmp.eq.s32.totalorder %s19, 0
      %p66 = por %p64, %p65
      %p67 = scmp.ne.s32.totalorder %s53, %s54
      %p68 = scmp.eq.s32.totalorder %s20, 1
      %p69 = por %p67, %p68
      %p71 = scmp.ne.s32.totalorder %s54, %s70
      %p72 = scmp.eq.s32.totalorder %s20, 0
      %p73 = por %p71, %p72
      %s74 = ssub.s32 %s14, %s21
      %p75 = scmp.eq.s32.totalorder %s74, 0
      %s77 = sadd.s32 %s76, 1
      %s78 = scalar_select %p75, %s76, %s77
      %p81 = pneg %p75
      %p82 = scmp.eq.s32.totalorder %s14, 1
      %p83 = por %p81, %p82
      %p84 = scmp.ne.s32.totalorder %s76, %s79
      %p85 = scmp.eq.s32.totalorder %s14, 0
      %p86 = por %p84, %p85
      %p87 = scmp.ne.s32.totalorder %s76, %s79
      %p88 = scmp.eq.s32.totalorder %s19, 1
      %p89 = por %p87, %p88
      %p90 = scmp.ne.s32.totalorder %s79, %s80
      %p91 = scmp.eq.s32.totalorder %s19, 0
      %p92 = por %p90, %p91
      %p93 = scmp.ne.s32.totalorder %s79, %s80
      %p94 = scmp.eq.s32.totalorder %s20, 1
      %p95 = por %p93, %p94
      %p97 = scmp.ne.s32.totalorder %s80, %s96
      %p98 = scmp.eq.s32.totalorder %s20, 0
      %p99 = por %p97, %p98
      %s100 = ssub.s32 %s14, %s21
      %p101 = scmp.eq.s32.totalorder %s100, 0
      %s103 = sadd.s32 %s102, 1
      %s104 = scalar_select %p101, %s102, %s103
      %p107 = pneg %p101
      %p108 = scmp.eq.s32.totalorder %s14, 1
      %p109 = por %p107, %p108
      %p110 = scmp.ne.s32.totalorder %s102, %s105
      %p111 = scmp.eq.s32.totalorder %s14, 0
      %p112 = por %p110, %p111
      %p113 = scmp.ne.s32.totalorder %s102, %s105
      %p114 = scmp.eq.s32.totalorder %s19, 1
      %p115 = por %p113, %p114
      %p116 = scmp.ne.s32.totalorder %s105, %s106
      %p117 = scmp.eq.s32.totalorder %s19, 0
      %p118 = por %p116, %p117
      %p119 = scmp.ne.s32.totalorder %s105, %s106
      %p120 = scmp.eq.s32.totalorder %s20, 1
      %p121 = por %p119, %p120
      %p123 = scmp.ne.s32.totalorder %s106, %s122
      %p124 = scmp.eq.s32.totalorder %s20, 0
      %p125 = por %p123, %p124
      %s126 = ssub.s32 %s14, %s21
      %p127 = scmp.eq.s32.totalorder %s126, 0
      %s129 = sadd.s32 %s128, 1
      %s130 = scalar_select %p127, %s128, %s129
      %p133 = pneg %p127
      %p134 = scmp.eq.s32.totalorder %s14, 1
      %p135 = por %p133, %p134
      %p136 = scmp.ne.s32.totalorder %s128, %s131
      %p137 = scmp.eq.s32.totalorder %s14, 0
      %p138 = por %p136, %p137
      %p139 = scmp.ne.s32.totalorder %s128, %s131
      %p140 = scmp.eq.s32.totalorder %s19, 1
      %p141 = por %p139, %p140
      %p142 = scmp.ne.s32.totalorder %s131, %s132
      %p143 = scmp.eq.s32.totalorder %s19, 0
      %p144 = por %p142, %p143
      %p145 = scmp.ne.s32.totalorder %s131, %s132
      %p146 = scmp.eq.s32.totalorder %s20, 1
      %p147 = por %p145, %p146
      %p149 = scmp.ne.s32.totalorder %s132, %s148
      %p150 = scmp.eq.s32.totalorder %s20, 0
      %p151 = por %p149, %p150
      %p152 = scmp.le.s32.totalorder 1, %s14
      %p153 = scmp.lt.s32.totalorder %s14, 3
      %p154 = pnand %p152, %p153
      %p155 = pneg %p154
      // Predicated region
      $region9: #{multi_head_attention.4} parent=5 // pred_check
        _
      $region10: #{multi_head_attention.4} parent=5 // pred_check_branch
        %157 = sbr.rel (%p154) target = $region12
      $region11: #{multi_head_attention.4} parent=5 // pred_region
        %s158 = ssub.s32 %s14, 1
      $region12: #{multi_head_attention.4} parent=5 // pred_fallthru
        _
      %p159 = scmp.lt.s32.totalorder %s14, 2
      // Predicated region
      $region13: #{multi_head_attention.4} parent=5 // pred_check
        %p160 = pneg %p159
      $region14: #{multi_head_attention.4} parent=5 // pred_check_branch
        %162 = sbr.rel (%p160) target = $region16
      $region15: #{multi_head_attention.4} parent=5 // pred_region
        // Predicated region
        $region17: #{multi_head_attention.4} parent=15 // pred_check
          %p163 = pneg %p34
        $region18: #{multi_head_attention.4} parent=15 // pred_check_branch
          %165 = sbr.rel (%p163) target = $region20
        $region19: #{multi_head_attention.4} parent=15 // pred_region
          %p166 = scmp.lt.s32.totalorder %s14, 1
          %s167 = scalar_select %p166, %s14, 1
          %s168 = smul.addr %s167, 4
          %s169 = smul.addr %s168, 4
          %s170 = scalar_lea.vmem %s0, %s169
        $region20: #{multi_head_attention.4} parent=15 // pred_fallthru
          _
        // Predicated region
        $region21: #{multi_head_attention.4} parent=15 // pred_check
          %p171 = pneg %p60
        $region22: #{multi_head_attention.4} parent=15 // pred_check_branch
          %173 = sbr.rel (%p171) target = $region24
        $region23: #{multi_head_attention.4} parent=15 // pred_region
          %p174 = scmp.lt.s32.totalorder %s14, 1
          %s175 = scalar_select %p174, %s14, 1
          %s176 = smul.addr %s175, 4
          %s177 = smul.addr %s176, 4
          %s178 = scalar_lea.vmem %s1, %s177
        $region24: #{multi_head_attention.4} parent=15 // pred_fallthru
          _
        // Predicated region
        $region25: #{multi_head_attention.4} parent=15 // pred_check
          %p179 = pneg %p86
        $region26: #{multi_head_attention.4} parent=15 // pred_check_branch
          %181 = sbr.rel (%p179) target = $region28
        $region27: #{multi_head_attention.4} parent=15 // pred_region
          %p182 = scmp.lt.s32.totalorder %s14, 1
          %s183 = scalar_select %p182, %s14, 1
          %s184 = smul.addr %s183, 4
          %s185 = smul.addr %s184, 4
          %s186 = scalar_lea.vmem %s2, %s185
        $region28: #{multi_head_attention.4} parent=15 // pred_fallthru
          _
      $region16: #{multi_head_attention.4} parent=5 // pred_fallthru
        _
      %p187 = scmp.le.s32.totalorder 1, %s14
      %p188 = scmp.lt.s32.totalorder %s14, 3
      %p189 = pnand %p187, %p188
      %p190 = pneg %p189
      // Predicated region
      $region29: #{multi_head_attention.4} parent=5 // pred_check
        _
      $region30: #{multi_head_attention.4} parent=5 // pred_check_branch
        %192 = sbr.rel (%p189) target = $region32
      $region31: #{multi_head_attention.4} parent=5 // pred_region
        %s193 = ssub.s32 %s14, 1
        %p194 = scmp.lt.s32.totalorder %s19, 1
        %s195 = scalar_select %p194, %s19, 1
        %s196 = smul.addr %s195, 4
        %s197 = smul.addr %s196, 4
        %s198 = scalar_lea.vmem %s0, %s197
        %p199 = pneg %p40
        %p200 = pneg %p37
        %p201 = scmp.lt.s32.totalorder %s19, 1
        %s202 = scalar_select %p201, %s19, 1
        %s203 = smul.addr %s202, 4
        %s204 = smul.addr %s203, 4
        %s205 = scalar_lea.vmem %s1, %s204
        %p206 = pneg %p66
        %p207 = pneg %p63
        %p208 = scmp.lt.s32.totalorder %s19, 1
        %s209 = scalar_select %p208, %s19, 1
        %s210 = smul.addr %s209, 4
        %s211 = smul.addr %s210, 4
        %s212 = scalar_lea.vmem %s2, %s211
        %p213 = pneg %p92
        %p214 = pneg %p89
        %p215 = pneg %p118
        %p216 = pneg %p115
        %p217 = scmp.lt.s32.totalorder %s19, 1
        %s218 = scalar_select %p217, %s19, 1
        %s219 = smul.addr %s218, 4
        %s220 = smul.addr %s219, 4
        %s221 = scalar_lea.vmem %s3, %s220
        %p222 = pneg %p144
        %p223 = pneg %p141
        %s224 = sand.u32 %s131, 1
        %s225 = scalar_lea.sflag [#allocation3], %s224
        %s226 = sand.u32 %s131, 1
        %s227 = smul.addr %s226, 64
        %s228 = scalar_lea.vmem [#allocation2], %s227
        %p229 = scmp.lt.s32.totalorder %s19, 1
        %s230 = scalar_select %p229, %s19, 1
        %s231 = smul.addr %s230, 4
        %s232 = smul.addr %s231, 4
        %s233 = scalar_lea.vmem %s0, %s232
        %p234 = scmp.lt.s32.totalorder %s19, 1
        %s235 = scalar_select %p234, %s19, 1
        %s236 = smul.addr %s235, 4
        %s237 = smul.addr %s236, 4
        %s238 = scalar_lea.vmem %s1, %s237
        %p239 = scmp.lt.s32.totalorder %s19, 1
        %s240 = scalar_select %p239, %s19, 1
        %s241 = smul.addr %s240, 4
        %s242 = smul.addr %s241, 4
        %s243 = scalar_lea.vmem %s2, %s242
        %p244 = scmp.lt.s32.totalorder %s19, 1
        %s245 = scalar_select %p244, %s19, 1
        %s246 = smul.addr %s245, 4
        %s247 = smul.addr %s246, 4
        %s248 = scalar_lea.vmem %s3, %s247
        %v250 = vld [vmem:[%s233] sm:$0xf]
        %v251 = vld [vmem:[%s238] sm:$0xf]
        %v252 = vld [vmem:[%s243] sm:$0xf]
        %vm253 = vcmask 523264
        %v255 = vsel %vm253, %v250, 0
        %v258 = vsel %vm253, %v251, 0
        %260 = vmatpush.bf16.xpose.msra.mxu0 0
        %261 = vmatpush.bf16.xpose.msra.mxu0 0
        %262 = vmatpush.bf16.xpose.msra.mxu0 0
        %263 = vmatpush.bf16.xpose.msra.mxu0 0
        %264 = vmatpush.bf16.xpose.msra.mxu0 0
        %265 = vmatpush.bf16.xpose.msra.mxu0 0
        %266 = vmatpush.bf16.xpose.msra.mxu0 0
        %267 = vmatpush.bf16.xpose.msra.mxu0 %v258
        %268 = vmatmul.bf16.gmra.mxu0 %v255
        %v269 = vpop.f32.mrf.mxu0
        %v270 = vadd.f32 0.0, %v269
        %v271 = vpop.f32.mrf.mxu0
        %272 = vdwg.mxu0
        %v273 = vmul.f32 %v270, 0.125
        %vm274 = vcmask 64512
        %v275 = vsel %vm274, %v273, -inf
        %276 = vmax.xlane.f32.xlu0 %v275
        %v277 = vpop.xlane.xlu0 %276
        %v278 = vsub.f32 %v273, %v277
        %v279 = vmul.f32 %v278, 1.442695
        %v280 = vpow.pop %v279
        %v281 = vsel %vm274, %v280, 0.0
        %282 = vadd.xlane.f32.xlu0 %v281
        %v283 = vpop.xlane.xlu0 %282
        %v284 = vrcp.pop %v283
        %v285 = vmul.f32 %v280, %v284
        %286 = vst.msk [vmem:[%s228] sm:$0xff] %vm274, %v285
        %v287 = vpack.c.bf16 %v285, %v285
        %v289 = vsel %vm274, %v287, 0
        %vm291 = vcmask 1043456
        %v293 = vsel %vm291, %v252, 0
        %295 = vmatpush.bf16.msra.mxu0 0
        %296 = vmatpush.bf16.msra.mxu0 0
        %297 = vmatpush.bf16.msra.mxu0 0
        %298 = vmatpush.bf16.msra.mxu0 0
        %299 = vmatpush.bf16.msra.mxu0 0
        %300 = vmatpush.bf16.msra.mxu0 0
        %301 = vmatpush.bf16.msra.mxu0 0
        %302 = vmatpush.bf16.msra.mxu0 %v293
        %303 = vmatmul.bf16.gmra.mxu0 %v289
        %v304 = vpop.f32.mrf.mxu0
        %v305 = vadd.f32 0.0, %v304
        %v306 = vpop.f32.mrf.mxu0
        %307 = vdwg.mxu0
        %v308 = vpack.c.bf16 %v305, %v305
        %vm309 = vcmask 519168
        %310 = vst.msk [vmem:[%s248] sm:$0xf] %vm309, %v308
        %v311 = vld [vmem:[%s233] sm:$0xf]
        %v312 = vld [vmem:[%s238] sm:$0xf]
        %v313 = vld [vmem:[%s243] sm:$0xf]
        %v315 = vunpack.c.l.b16 %v311
        %v316 = vpack.c.b16 %v315, %v315
        %317 = vrot.lane.b32.xlu0 %v316, 64
        %v318 = vpop.permute.xlu0 %317
        %v320 = vunpack.c.l.b16 %v312
        %v321 = vpack.c.b16 %v320, %v320
        %322 = vrot.lane.b32.xlu0 %v321, 64
        %v323 = vpop.permute.xlu0 %322
        %v325 = vsel %vm253, %v318, 0
        %v328 = vsel %vm253, %v323, 0
        %330 = vmatpush.bf16.xpose.msra.mxu0 0
        %331 = vmatpush.bf16.xpose.msra.mxu0 0
        %332 = vmatpush.bf16.xpose.msra.mxu0 0
        %333 = vmatpush.bf16.xpose.msra.mxu0 0
        %334 = vmatpush.bf16.xpose.msra.mxu0 0
        %335 = vmatpush.bf16.xpose.msra.mxu0 0
        %336 = vmatpush.bf16.xpose.msra.mxu0 0
        %337 = vmatpush.bf16.xpose.msra.mxu0 %v328
        %338 = vmatmul.bf16.gmra.mxu0 %v325
        %v339 = vpop.f32.mrf.mxu0
        %v340 = vadd.f32 0.0, %v339
        %v341 = vpop.f32.mrf.mxu0
        %342 = vdwg.mxu0
        %v343 = vmul.f32 %v340, 0.125
        %v344 = vsel %vm274, %v343, -inf
        %345 = vmax.xlane.f32.xlu0 %v344
        %v346 = vpop.xlane.xlu0 %345
        %v347 = vsub.f32 %v343, %v346
        %v348 = vmul.f32 %v347, 1.442695
        %v349 = vpow.pop %v348
        %v350 = vsel %vm274, %v349, 0.0
        %351 = vadd.xlane.f32.xlu0 %v350
        %v352 = vpop.xlane.xlu0 %351
        %v353 = vrcp.pop %v352
        %v354 = vmul.f32 %v349, %v353
        %s355 = scalar_lea.vmem %s228, 8 [#allocation2]
        %356 = vst.msk [vmem:[%s355] sm:$0xff] %vm274, %v354
        %v357 = vpack.c.bf16 %v354, %v354
        %v359 = vunpack.c.l.b16 %v313
        %v360 = vpack.c.b16 %v359, %v359
        %361 = vrot.lane.b32.xlu0 %v360, 64
        %v362 = vpop.permute.xlu0 %361
        %v364 = vsel %vm274, %v357, 0
        %v367 = vsel %vm291, %v362, 0
        %369 = vmatpush.bf16.msra.mxu0 0
        %370 = vmatpush.bf16.msra.mxu0 0
        %371 = vmatpush.bf16.msra.mxu0 0
        %372 = vmatpush.bf16.msra.mxu0 0
        %373 = vmatpush.bf16.msra.mxu0 0
        %374 = vmatpush.bf16.msra.mxu0 0
        %375 = vmatpush.bf16.msra.mxu0 0
        %376 = vmatpush.bf16.msra.mxu0 %v367
        %377 = vmatmul.bf16.gmra.mxu0 %v364
        %v378 = vpop.f32.mrf.mxu0
        %v379 = vadd.f32 0.0, %v378
        %v380 = vpop.f32.mrf.mxu0
        %381 = vdwg.mxu0
        %v382 = vpack.c.bf16 %v379, %v379
        %384 = vrot.lane.b32.xlu0 %v382, 64
        %v385 = vpop.permute.xlu0 %384
        %vm387 = vcmask 1043968
        %388 = vst.msk [vmem:[%s248] sm:$0xf] %vm387, %v385
        %v389 = vld [vmem:[%s233 + $0x4] sm:$0xf]
        %v390 = vld [vmem:[%s238 + $0x4] sm:$0xf]
        %v391 = vld [vmem:[%s243 + $0x4] sm:$0xf]
        %v393 = vsel %vm253, %v389, 0
        %v396 = vsel %vm253, %v390, 0
        %398 = vmatpush.bf16.xpose.msra.mxu0 0
        %399 = vmatpush.bf16.xpose.msra.mxu0 0
        %400 = vmatpush.bf16.xpose.msra.mxu0 0
        %401 = vmatpush.bf16.xpose.msra.mxu0 0
        %402 = vmatpush.bf16.xpose.msra.mxu0 0
        %403 = vmatpush.bf16.xpose.msra.mxu0 0
        %404 = vmatpush.bf16.xpose.msra.mxu0 0
        %405 = vmatpush.bf16.xpose.msra.mxu0 %v396
        %406 = vmatmul.bf16.gmra.mxu0 %v393
        %v407 = vpop.f32.mrf.mxu0
        %v408 = vadd.f32 0.0, %v407
        %v409 = vpop.f32.mrf.mxu0
        %410 = vdwg.mxu0
        %v411 = vmul.f32 %v408, 0.125
        %v412 = vsel %vm274, %v411, -inf
        %413 = vmax.xlane.f32.xlu0 %v412
        %v414 = vpop.xlane.xlu0 %413
        %v415 = vsub.f32 %v411, %v414
        %v416 = vmul.f32 %v415, 1.442695
        %v417 = vpow.pop %v416
        %v418 = vsel %vm274, %v417, 0.0
        %419 = vadd.xlane.f32.xlu0 %v418
        %v420 = vpop.xlane.xlu0 %419
        %v421 = vrcp.pop %v420
        %v422 = vmul.f32 %v417, %v421
        %s423 = scalar_lea.vmem %s228, 16 [#allocation2]
        %424 = vst.msk [vmem:[%s423] sm:$0xff] %vm274, %v422
        %v425 = vpack.c.bf16 %v422, %v422
        %v427 = vsel %vm274, %v425, 0
        %v430 = vsel %vm291, %v391, 0
        %432 = vmatpush.bf16.msra.mxu0 0
        %433 = vmatpush.bf16.msra.mxu0 0
        %434 = vmatpush.bf16.msra.mxu0 0
        %435 = vmatpush.bf16.msra.mxu0 0
        %436 = vmatpush.bf16.msra.mxu0 0
        %437 = vmatpush.bf16.msra.mxu0 0
        %438 = vmatpush.bf16.msra.mxu0 0
        %439 = vmatpush.bf16.msra.mxu0 %v430
        %440 = vmatmul.bf16.gmra.mxu0 %v427
        %v441 = vpop.f32.mrf.mxu0
        %v442 = vadd.f32 0.0, %v441
        %v443 = vpop.f32.mrf.mxu0
        %444 = vdwg.mxu0
        %v445 = vpack.c.bf16 %v442, %v442
        %446 = vst.msk [vmem:[%s248 + $0x4] sm:$0xf] %vm309, %v445
        %v447 = vld [vmem:[%s233 + $0x4] sm:$0xf]
        %v448 = vld [vmem:[%s238 + $0x4] sm:$0xf]
        %v449 = vld [vmem:[%s243 + $0x4] sm:$0xf]
        %v451 = vunpack.c.l.b16 %v447
        %v452 = vpack.c.b16 %v451, %v451
        %453 = vrot.lane.b32.xlu0 %v452, 64
        %v454 = vpop.permute.xlu0 %453
        %v456 = vunpack.c.l.b16 %v448
        %v457 = vpack.c.b16 %v456, %v456
        %458 = vrot.lane.b32.xlu0 %v457, 64
        %v459 = vpop.permute.xlu0 %458
        %v461 = vsel %vm253, %v454, 0
        %v464 = vsel %vm253, %v459, 0
        %466 = vmatpush.bf16.xpose.msra.mxu0 0
        %467 = vmatpush.bf16.xpose.msra.mxu0 0
        %468 = vmatpush.bf16.xpose.msra.mxu0 0
        %469 = vmatpush.bf16.xpose.msra.mxu0 0
        %470 = vmatpush.bf16.xpose.msra.mxu0 0
        %471 = vmatpush.bf16.xpose.msra.mxu0 0
        %472 = vmatpush.bf16.xpose.msra.mxu0 0
        %473 = vmatpush.bf16.xpose.msra.mxu0 %v464
        %474 = vmatmul.bf16.gmra.mxu0 %v461
        %v475 = vpop.f32.mrf.mxu0
        %v476 = vadd.f32 0.0, %v475
        %v477 = vpop.f32.mrf.mxu0
        %478 = vdwg.mxu0
        %v479 = vmul.f32 %v476, 0.125
        %v480 = vsel %vm274, %v479, -inf
        %481 = vmax.xlane.f32.xlu0 %v480
        %v482 = vpop.xlane.xlu0 %481
        %v483 = vsub.f32 %v479, %v482
        %v484 = vmul.f32 %v483, 1.442695
        %v485 = vpow.pop %v484
        %v486 = vsel %vm274, %v485, 0.0
        %487 = vadd.xlane.f32.xlu0 %v486
        %v488 = vpop.xlane.xlu0 %487
        %v489 = vrcp.pop %v488
        %v490 = vmul.f32 %v485, %v489
        %s491 = scalar_lea.vmem %s228, 24 [#allocation2]
        %492 = vst.msk [vmem:[%s491] sm:$0xff] %vm274, %v490
        %v493 = vpack.c.bf16 %v490, %v490
        %v495 = vunpack.c.l.b16 %v449
        %v496 = vpack.c.b16 %v495, %v495
        %497 = vrot.lane.b32.xlu0 %v496, 64
        %v498 = vpop.permute.xlu0 %497
        %v500 = vsel %vm274, %v493, 0
        %v503 = vsel %vm291, %v498, 0
        %505 = vmatpush.bf16.msra.mxu0 0
        %506 = vmatpush.bf16.msra.mxu0 0
        %507 = vmatpush.bf16.msra.mxu0 0
        %508 = vmatpush.bf16.msra.mxu0 0
        %509 = vmatpush.bf16.msra.mxu0 0
        %510 = vmatpush.bf16.msra.mxu0 0
        %511 = vmatpush.bf16.msra.mxu0 0
        %512 = vmatpush.bf16.msra.mxu0 %v503
        %513 = vmatmul.bf16.gmra.mxu0 %v500
        %v514 = vpop.f32.mrf.mxu0
        %v515 = vadd.f32 0.0, %v514
        %v516 = vpop.f32.mrf.mxu0
        %517 = vdwg.mxu0
        %v518 = vpack.c.bf16 %v515, %v515
        %520 = vrot.lane.b32.xlu0 %v518, 64
        %v521 = vpop.permute.xlu0 %520
        %523 = vst.msk [vmem:[%s248 + $0x4] sm:$0xf] %vm387, %v521
        %v524 = vld [vmem:[%s233 + $0x8] sm:$0xf]
        %v525 = vld [vmem:[%s238 + $0x8] sm:$0xf]
        %v526 = vld [vmem:[%s243 + $0x8] sm:$0xf]
        %v528 = vsel %vm253, %v524, 0
        %v531 = vsel %vm253, %v525, 0
        %533 = vmatpush.bf16.xpose.msra.mxu0 0
        %534 = vmatpush.bf16.xpose.msra.mxu0 0
        %535 = vmatpush.bf16.xpose.msra.mxu0 0
        %536 = vmatpush.bf16.xpose.msra.mxu0 0
        %537 = vmatpush.bf16.xpose.msra.mxu0 0
        %538 = vmatpush.bf16.xpose.msra.mxu0 0
        %539 = vmatpush.bf16.xpose.msra.mxu0 0
        %540 = vmatpush.bf16.xpose.msra.mxu0 %v531
        %541 = vmatmul.bf16.gmra.mxu0 %v528
        %v542 = vpop.f32.mrf.mxu0
        %v543 = vadd.f32 0.0, %v542
        %v544 = vpop.f32.mrf.mxu0
        %545 = vdwg.mxu0
        %v546 = vmul.f32 %v543, 0.125
        %v547 = vsel %vm274, %v546, -inf
        %548 = vmax.xlane.f32.xlu0 %v547
        %v549 = vpop.xlane.xlu0 %548
        %v550 = vsub.f32 %v546, %v549
        %v551 = vmul.f32 %v550, 1.442695
        %v552 = vpow.pop %v551
        %v553 = vsel %vm274, %v552, 0.0
        %554 = vadd.xlane.f32.xlu0 %v553
        %v555 = vpop.xlane.xlu0 %554
        %v556 = vrcp.pop %v555
        %v557 = vmul.f32 %v552, %v556
        %s558 = scalar_lea.vmem %s228, 32 [#allocation2]
        %559 = vst.msk [vmem:[%s558] sm:$0xff] %vm274, %v557
        %v560 = vpack.c.bf16 %v557, %v557
        %v562 = vsel %vm274, %v560, 0
        %v565 = vsel %vm291, %v526, 0
        %567 = vmatpush.bf16.msra.mxu0 0
        %568 = vmatpush.bf16.msra.mxu0 0
        %569 = vmatpush.bf16.msra.mxu0 0
        %570 = vmatpush.bf16.msra.mxu0 0
        %571 = vmatpush.bf16.msra.mxu0 0
        %572 = vmatpush.bf16.msra.mxu0 0
        %573 = vmatpush.bf16.msra.mxu0 0
        %574 = vmatpush.bf16.msra.mxu0 %v565
        %575 = vmatmul.bf16.gmra.mxu0 %v562
        %v576 = vpop.f32.mrf.mxu0
        %v577 = vadd.f32 0.0, %v576
        %v578 = vpop.f32.mrf.mxu0
        %579 = vdwg.mxu0
        %v580 = vpack.c.bf16 %v577, %v577
        %581 = vst.msk [vmem:[%s248 + $0x8] sm:$0xf] %vm309, %v580
        %v582 = vld [vmem:[%s233 + $0x8] sm:$0xf]
        %v583 = vld [vmem:[%s238 + $0x8] sm:$0xf]
        %v584 = vld [vmem:[%s243 + $0x8] sm:$0xf]
        %v586 = vunpack.c.l.b16 %v582
        %v587 = vpack.c.b16 %v586, %v586
        %588 = vrot.lane.b32.xlu0 %v587, 64
        %v589 = vpop.permute.xlu0 %588
        %v591 = vunpack.c.l.b16 %v583
        %v592 = vpack.c.b16 %v591, %v591
        %593 = vrot.lane.b32.xlu0 %v592, 64
        %v594 = vpop.permute.xlu0 %593
        %v596 = vsel %vm253, %v589, 0
        %v599 = vsel %vm253, %v594, 0
        %601 = vmatpush.bf16.xpose.msra.mxu0 0
        %602 = vmatpush.bf16.xpose.msra.mxu0 0
        %603 = vmatpush.bf16.xpose.msra.mxu0 0
        %604 = vmatpush.bf16.xpose.msra.mxu0 0
        %605 = vmatpush.bf16.xpose.msra.mxu0 0
        %606 = vmatpush.bf16.xpose.msra.mxu0 0
        %607 = vmatpush.bf16.xpose.msra.mxu0 0
        %608 = vmatpush.bf16.xpose.msra.mxu0 %v599
        %609 = vmatmul.bf16.gmra.mxu0 %v596
        %v610 = vpop.f32.mrf.mxu0
        %v611 = vadd.f32 0.0, %v610
        %v612 = vpop.f32.mrf.mxu0
        %613 = vdwg.mxu0
        %v614 = vmul.f32 %v611, 0.125
        %v615 = vsel %vm274, %v614, -inf
        %616 = vmax.xlane.f32.xlu0 %v615
        %v617 = vpop.xlane.xlu0 %616
        %v618 = vsub.f32 %v614, %v617
        %v619 = vmul.f32 %v618, 1.442695
        %v620 = vpow.pop %v619
        %v621 = vsel %vm274, %v620, 0.0
        %622 = vadd.xlane.f32.xlu0 %v621
        %v623 = vpop.xlane.xlu0 %622
        %v624 = vrcp.pop %v623
        %v625 = vmul.f32 %v620, %v624
        %s626 = scalar_lea.vmem %s228, 40 [#allocation2]
        %627 = vst.msk [vmem:[%s626] sm:$0xff] %vm274, %v625
        %v628 = vpack.c.bf16 %v625, %v625
        %v630 = vunpack.c.l.b16 %v584
        %v631 = vpack.c.b16 %v630, %v630
        %632 = vrot.lane.b32.xlu0 %v631, 64
        %v633 = vpop.permute.xlu0 %632
        %v635 = vsel %vm274, %v628, 0
        %v638 = vsel %vm291, %v633, 0
        %640 = vmatpush.bf16.msra.mxu0 0
        %641 = vmatpush.bf16.msra.mxu0 0
        %642 = vmatpush.bf16.msra.mxu0 0
        %643 = vmatpush.bf16.msra.mxu0 0
        %644 = vmatpush.bf16.msra.mxu0 0
        %645 = vmatpush.bf16.msra.mxu0 0
        %646 = vmatpush.bf16.msra.mxu0 0
        %647 = vmatpush.bf16.msra.mxu0 %v638
        %648 = vmatmul.bf16.gmra.mxu0 %v635
        %v649 = vpop.f32.mrf.mxu0
        %v650 = vadd.f32 0.0, %v649
        %v651 = vpop.f32.mrf.mxu0
        %652 = vdwg.mxu0
        %v653 = vpack.c.bf16 %v650, %v650
        %655 = vrot.lane.b32.xlu0 %v653, 64
        %v656 = vpop.permute.xlu0 %655
        %658 = vst.msk [vmem:[%s248 + $0x8] sm:$0xf] %vm387, %v656
        %v659 = vld [vmem:[%s233 + $0xc] sm:$0xf]
        %v660 = vld [vmem:[%s238 + $0xc] sm:$0xf]
        %v661 = vld [vmem:[%s243 + $0xc] sm:$0xf]
        %v663 = vsel %vm253, %v659, 0
        %v666 = vsel %vm253, %v660, 0
        %668 = vmatpush.bf16.xpose.msra.mxu0 0
        %669 = vmatpush.bf16.xpose.msra.mxu0 0
        %670 = vmatpush.bf16.xpose.msra.mxu0 0
        %671 = vmatpush.bf16.xpose.msra.mxu0 0
        %672 = vmatpush.bf16.xpose.msra.mxu0 0
        %673 = vmatpush.bf16.xpose.msra.mxu0 0
        %674 = vmatpush.bf16.xpose.msra.mxu0 0
        %675 = vmatpush.bf16.xpose.msra.mxu0 %v666
        %676 = vmatmul.bf16.gmra.mxu0 %v663
        %v677 = vpop.f32.mrf.mxu0
        %v678 = vadd.f32 0.0, %v677
        %v679 = vpop.f32.mrf.mxu0
        %680 = vdwg.mxu0
        %v681 = vmul.f32 %v678, 0.125
        %v682 = vsel %vm274, %v681, -inf
        %683 = vmax.xlane.f32.xlu0 %v682
        %v684 = vpop.xlane.xlu0 %683
        %v685 = vsub.f32 %v681, %v684
        %v686 = vmul.f32 %v685, 1.442695
        %v687 = vpow.pop %v686
        %v688 = vsel %vm274, %v687, 0.0
        %689 = vadd.xlane.f32.xlu0 %v688
        %v690 = vpop.xlane.xlu0 %689
        %v691 = vrcp.pop %v690
        %v692 = vmul.f32 %v687, %v691
        %s693 = scalar_lea.vmem %s228, 48 [#allocation2]
        %694 = vst.msk [vmem:[%s693] sm:$0xff] %vm274, %v692
        %v695 = vpack.c.bf16 %v692, %v692
        %v697 = vsel %vm274, %v695, 0
        %v700 = vsel %vm291, %v661, 0
        %702 = vmatpush.bf16.msra.mxu0 0
        %703 = vmatpush.bf16.msra.mxu0 0
        %704 = vmatpush.bf16.msra.mxu0 0
        %705 = vmatpush.bf16.msra.mxu0 0
        %706 = vmatpush.bf16.msra.mxu0 0
        %707 = vmatpush.bf16.msra.mxu0 0
        %708 = vmatpush.bf16.msra.mxu0 0
        %709 = vmatpush.bf16.msra.mxu0 %v700
        %710 = vmatmul.bf16.gmra.mxu0 %v697
        %v711 = vpop.f32.mrf.mxu0
        %v712 = vadd.f32 0.0, %v711
        %v713 = vpop.f32.mrf.mxu0
        %714 = vdwg.mxu0
        %v715 = vpack.c.bf16 %v712, %v712
        %716 = vst.msk [vmem:[%s248 + $0xc] sm:$0xf] %vm309, %v715
        %v717 = vld [vmem:[%s233 + $0xc] sm:$0xf]
        %v718 = vld [vmem:[%s238 + $0xc] sm:$0xf]
        %v719 = vld [vmem:[%s243 + $0xc] sm:$0xf]
        %v721 = vunpack.c.l.b16 %v717
        %v722 = vpack.c.b16 %v721, %v721
        %723 = vrot.lane.b32.xlu0 %v722, 64
        %v724 = vpop.permute.xlu0 %723
        %v726 = vunpack.c.l.b16 %v718
        %v727 = vpack.c.b16 %v726, %v726
        %728 = vrot.lane.b32.xlu0 %v727, 64
        %v729 = vpop.permute.xlu0 %728
        %v731 = vsel %vm253, %v724, 0
        %v734 = vsel %vm253, %v729, 0
        %736 = vmatpush.bf16.xpose.msra.mxu0 0
        %737 = vmatpush.bf16.xpose.msra.mxu0 0
        %738 = vmatpush.bf16.xpose.msra.mxu0 0
        %739 = vmatpush.bf16.xpose.msra.mxu0 0
        %740 = vmatpush.bf16.xpose.msra.mxu0 0
        %741 = vmatpush.bf16.xpose.msra.mxu0 0
        %742 = vmatpush.bf16.xpose.msra.mxu0 0
        %743 = vmatpush.bf16.xpose.msra.mxu0 %v734
        %744 = vmatmul.bf16.gmra.mxu0 %v731
        %v745 = vpop.f32.mrf.mxu0
        %v746 = vadd.f32 0.0, %v745
        %v747 = vpop.f32.mrf.mxu0
        %748 = vdwg.mxu0
        %v749 = vmul.f32 %v746, 0.125
        %v750 = vsel %vm274, %v749, -inf
        %751 = vmax.xlane.f32.xlu0 %v750
        %v752 = vpop.xlane.xlu0 %751
        %v753 = vsub.f32 %v749, %v752
        %v754 = vmul.f32 %v753, 1.442695
        %v755 = vpow.pop %v754
        %v756 = vsel %vm274, %v755, 0.0
        %757 = vadd.xlane.f32.xlu0 %v756
        %v758 = vpop.xlane.xlu0 %757
        %v759 = vrcp.pop %v758
        %v760 = vmul.f32 %v755, %v759
        %s761 = scalar_lea.vmem %s228, 56 [#allocation2]
        %762 = vst.msk [vmem:[%s761] sm:$0xff] %vm274, %v760
        %v763 = vpack.c.bf16 %v760, %v760
        %v765 = vunpack.c.l.b16 %v719
        %v766 = vpack.c.b16 %v765, %v765
        %767 = vrot.lane.b32.xlu0 %v766, 64
        %v768 = vpop.permute.xlu0 %767
        %v770 = vsel %vm274, %v763, 0
        %v773 = vsel %vm291, %v768, 0
        %775 = vmatpush.bf16.msra.mxu0 0
        %776 = vmatpush.bf16.msra.mxu0 0
        %777 = vmatpush.bf16.msra.mxu0 0
        %778 = vmatpush.bf16.msra.mxu0 0
        %779 = vmatpush.bf16.msra.mxu0 0
        %780 = vmatpush.bf16.msra.mxu0 0
        %781 = vmatpush.bf16.msra.mxu0 0
        %782 = vmatpush.bf16.msra.mxu0 %v773
        %783 = vmatmul.bf16.gmra.mxu0 %v770
        %v784 = vpop.f32.mrf.mxu0
        %v785 = vadd.f32 0.0, %v784
        %v786 = vpop.f32.mrf.mxu0
        %787 = vdwg.mxu0
        %v788 = vpack.c.bf16 %v785, %v785
        %790 = vrot.lane.b32.xlu0 %v788, 64
        %v791 = vpop.permute.xlu0 %790
        %793 = vst.msk [vmem:[%s248 + $0xc] sm:$0xf] %vm387, %v791
        %p794 = scmp.lt.s32.totalorder %s19, 1
        %s795 = scalar_select %p794, %s19, 1
        %s796 = smul.addr %s795, 4
        %s797 = smul.addr %s796, 4
        %s798 = scalar_lea.vmem %s3, %s797
        %s799 = sand.u32 %s131, 1
        %s800 = scalar_lea.sflag [#allocation3], %s799
        %s801 = sand.u32 %s131, 1
        %s802 = smul.addr %s801, 64
        %s803 = scalar_lea.vmem [#allocation2], %s802
        // Predicated region
        $region33: #{multi_head_attention.4} parent=31 // pred_check
          %p804 = pneg %p115
        $region34: #{multi_head_attention.4} parent=31 // pred_check_branch
          %806 = sbr.rel (%p804) target = $region36
        $region35: #{multi_head_attention.4} parent=31 // pred_region
          _
        $region36: #{multi_head_attention.4} parent=31 // pred_fallthru
          _
        // Predicated region
        $region37: #{multi_head_attention.4} parent=31 // pred_check
          %p807 = pneg %p141
        $region38: #{multi_head_attention.4} parent=31 // pred_check_branch
          %809 = sbr.rel (%p807) target = $region40
        $region39: #{multi_head_attention.4} parent=31 // pred_region
          %811 = vsyncadd %s800, 0
          %s812 = smul.addr %s19, 8
          %s813 = smul.addr %s812, 8
          %s814 = scalar_lea.hbm %s4, %s813
          %s815 = sshll.u32 %s803, 4
          %s816 = int_to_ptr.vmem [resolvable:$true] %s815
          %s817 = sshll.u32 %s814, 4
          %s818 = int_to_ptr.hbm [resolvable:$true] %s817
          %823 = dma.vmem_to_hbm [thread:$0]  %s816, 1024, %s818, %s800, 128, 128, 8
        $region40: #{multi_head_attention.4} parent=31 // pred_fallthru
          _
      $region32: #{multi_head_attention.4} parent=5 // pred_fallthru
        _
      %p824 = scmp.le.s32.totalorder 2, %s14
      // Predicated region
      $region41: #{multi_head_attention.4} parent=5 // pred_check
        %p825 = pneg %p824
      $region42: #{multi_head_attention.4} parent=5 // pred_check_branch
        %827 = sbr.rel (%p825) target = $region44
      $region43: #{multi_head_attention.4} parent=5 // pred_region
        %s828 = ssub.s32 %s14, 2
        // Predicated region
        $region45: #{multi_head_attention.4} parent=43 // pred_check
          %p829 = pneg %p121
        $region46: #{multi_head_attention.4} parent=43 // pred_check_branch
          %831 = sbr.rel (%p829) target = $region48
        $region47: #{multi_head_attention.4} parent=43 // pred_region
          %p832 = scmp.lt.s32.totalorder %s20, 1
          %s833 = scalar_select %p832, %s20, 1
          %s834 = smul.addr %s833, 4
          %s835 = smul.addr %s834, 4
          %s836 = scalar_lea.vmem %s3, %s835
        $region48: #{multi_head_attention.4} parent=43 // pred_fallthru
          _
        // Predicated region
        $region49: #{multi_head_attention.4} parent=43 // pred_check
          %p837 = pneg %p147
        $region50: #{multi_head_attention.4} parent=43 // pred_check_branch
          %839 = sbr.rel (%p837) target = $region52
        $region51: #{multi_head_attention.4} parent=43 // pred_region
          %s840 = sand.u32 %s132, 1
          %s841 = scalar_lea.sflag [#allocation3], %s840
          %s842 = sand.u32 %s132, 1
          %s843 = smul.addr %s842, 64
          %s844 = scalar_lea.vmem [#allocation2], %s843
          %846 = dma.done %s841, 1024
        $region52: #{multi_head_attention.4} parent=43 // pred_fallthru
          _
      $region44: #{multi_head_attention.4} parent=5 // pred_fallthru
        _
    $region6: #{multi_head_attention.4} parent=1 // loop_footer
      %s18 = sadd.s32 1, %s14
    $region7: #{multi_head_attention.4} parent=1 // loop_footer_branch
      %13 = sbr.rel target = $region3
    $region8: #{multi_head_attention.4} parent=1 // loop_exit
      _
    %847 = vsyncpa [#allocation3], 1
    %s848 = scalar_lea.sflag [#allocation3], 1
    %849 = vsyncpa %s848, 1

// kernel: multi_head_attention.5
$region0: #{multi_head_attention.5}
  #allocation0 [shape = 'u32[]', space=smem, size = 0x4, offset = 0x4, fixed_abs, tag = 'smem constant byte address 0x4 - core index']
  #allocation1 [shape = 'u32[72,128]{1,0:T(1,128)}', space=vmem, size = 0x9000, scoped, tag = 'internal scratch']
  %s0 = inlined_call_operand.vmem [shape: bf16[16,512], index: 0, kind: input, shape index: {}]
  %s1 = inlined_call_operand.hbm [shape: f32[16,512], index: 1, kind: input, shape index: {}]
  %s2 = inlined_call_operand.hbm [shape: bf16[512,512], index: 2, kind: input, shape index: {}]
  %s3 = inlined_call_operand.hbm [shape: f32[16,512], index: 3, kind: output, shape index: {}]
  %s4 = sld [smem:[#allocation0]]
  $region30: #{multi_head_attention.5} parent=0
    _
  %s6 = ssub.s32 1, %s4
  %s7 = scalar_select 0, %s6, %s4
  $region1: #{multi_head_attention.5} parent=0
    #allocation2 [shape = 'u8[32768]{0}', space=vmem, size = 0x8000, scoped, tag = 'input window, operand 1, single buffered']
    #allocation3 [shape = 's32[1]{0}', space=sflag, size = 0x4, scoped, tag = 'scoped memory for multi_head_attention.5']
    #allocation4 [shape = 's32[1]{0}', space=sflag, size = 0x4, scoped, tag = 'scoped memory for multi_head_attention.5']
    #allocation5 [shape = 'u8[524288]{0}', space=vmem, size = 0x80000, scoped, tag = 'input window, operand 2, single buffered']
    #allocation6 [shape = 's32[1]{0}', space=sflag, size = 0x4, scoped, tag = 'scoped memory for multi_head_attention.5']
    #allocation7 [shape = 'u8[32768]{0}', space=vmem, size = 0x8000, scoped, tag = 'output window, operand 0, single buffered']
    %8 = vsyncpa [#allocation3], 0
    %9 = vsyncpa [#allocation6], 0
    %10 = vsyncpa [#allocation4], 0
    // Predicated region
    $region2: #{multi_head_attention.5} parent=1 // pred_check
      _
    $region3: #{multi_head_attention.5} parent=1 // pred_check_branch
      %12 = sbr.rel (0) target = $region5
    $region4: #{multi_head_attention.5} parent=1 // pred_region
      _
    $region5: #{multi_head_attention.5} parent=1 // pred_fallthru
      _
    // Predicated region
    $region6: #{multi_head_attention.5} parent=1 // pred_check
      _
    $region7: #{multi_head_attention.5} parent=1 // pred_check_branch
      %14 = sbr.rel (0) target = $region9
    $region8: #{multi_head_attention.5} parent=1 // pred_region
      %16 = vsyncadd [#allocation3], 0
      %s17 = sshll.u32 %s1, 4
      %s18 = int_to_ptr.hbm [resolvable:$true] %s17
      %s19 = sshll.u32 [#allocation2], 4
      %s20 = int_to_ptr.vmem [resolvable:$true] %s19
      %25 = dma.hbm_to_vmem [thread:$0]  %s18, 1024, %s20, [#allocation3], 512, 512, 32
    $region9: #{multi_head_attention.5} parent=1 // pred_fallthru
      _
    // Predicated region
    $region10: #{multi_head_attention.5} parent=1 // pred_check
      _
    $region11: #{multi_head_attention.5} parent=1 // pred_check_branch
      %27 = sbr.rel (0) target = $region13
    $region12: #{multi_head_attention.5} parent=1 // pred_region
      %29 = vsyncadd [#allocation6], 0
      %s30 = sshll.u32 %s2, 4
      %s31 = int_to_ptr.hbm [resolvable:$true] %s30
      %s32 = sshll.u32 [#allocation5], 4
      %s33 = int_to_ptr.vmem [resolvable:$true] %s32
      %38 = dma.hbm_to_vmem [thread:$0]  %s31, 16384, %s33, [#allocation6], 256, 256, 16
    $region13: #{multi_head_attention.5} parent=1 // pred_fallthru
      _
    // Predicated region
    $region14: #{multi_head_attention.5} parent=1 // pred_check
      _
    $region15: #{multi_head_attention.5} parent=1 // pred_check_branch
      %40 = sbr.rel (0) target = $region17
    $region16: #{multi_head_attention.5} parent=1 // pred_region
      %42 = dma.done [#allocation3], 1024
    $region17: #{multi_head_attention.5} parent=1 // pred_fallthru
      _
    // Predicated region
    $region18: #{multi_head_attention.5} parent=1 // pred_check
      _
    $region19: #{multi_head_attention.5} parent=1 // pred_check_branch
      %44 = sbr.rel (0) target = $region21
    $region20: #{multi_head_attention.5} parent=1 // pred_region
      %46 = dma.done [#allocation6], 16384
    $region21: #{multi_head_attention.5} parent=1 // pred_fallthru
      _
    %v47 = vld [vmem:[%s0] sm:$0xff]
    %v48 = vld [vmem:[%s0 + $0x8] sm:$0xff]
    %v49 = vld [vmem:[%s0 + $0x10] sm:$0xff]
    %v50 = vld [vmem:[%s0 + $0x18] sm:$0xff]
    %v51 = vld [vmem:[#allocation5] sm:$0xff]
    %v52 = vld [vmem:[#allocation5 + $0x8] sm:$0xff]
    %v53 = vld [vmem:[#allocation5 + $0x10] sm:$0xff]
    %v54 = vld [vmem:[#allocation5 + $0x18] sm:$0xff]
    %v55 = vld [vmem:[#allocation5 + $0x20] sm:$0xff]
    %v56 = vld [vmem:[#allocation5 + $0x28] sm:$0xff]
    %v57 = vld [vmem:[#allocation5 + $0x30] sm:$0xff]
    %v58 = vld [vmem:[#allocation5 + $0x38] sm:$0xff]
    %v59 = vld [vmem:[#allocation5 + $0x40] sm:$0xff]
    %v60 = vld [vmem:[#allocation5 + $0x48] sm:$0xff]
    %v61 = vld [vmem:[#allocation5 + $0x50] sm:$0xff]
    %v62 = vld [vmem:[#allocation5 + $0x58] sm:$0xff]
    %v63 = vld [vmem:[#allocation5 + $0x60] sm:$0xff]
    %v64 = vld [vmem:[#allocation5 + $0x68] sm:$0xff]
    %v65 = vld [vmem:[#allocation5 + $0x70] sm:$0xff]
    %v66 = vld [vmem:[#allocation5 + $0x78] sm:$0xff]
    %v67 = vld [vmem:[#allocation5 + $0x80] sm:$0xff]
    %v68 = vld [vmem:[#allocation5 + $0x88] sm:$0xff]
    %v69 = vld [vmem:[#allocation5 + $0x90] sm:$0xff]
    %v70 = vld [vmem:[#allocation5 + $0x98] sm:$0xff]
    %v71 = vld [vmem:[#allocation5 + $0xa0] sm:$0xff]
    %v72 = vld [vmem:[#allocation5 + $0xa8] sm:$0xff]
    %v73 = vld [vmem:[#allocation5 + $0xb0] sm:$0xff]
    %v74 = vld [vmem:[#allocation5 + $0xb8] sm:$0xff]
    %v75 = vld [vmem:[#allocation5 + $0xc0] sm:$0xff]
    %v76 = vld [vmem:[#allocation5 + $0xc8] sm:$0xff]
    %v77 = vld [vmem:[#allocation5 + $0xd0] sm:$0xff]
    %v78 = vld [vmem:[#allocation5 + $0xd8] sm:$0xff]
    %v79 = vld [vmem:[#allocation5 + $0xe0] sm:$0xff]
    %v80 = vld [vmem:[#allocation5 + $0xe8] sm:$0xff]
    %v81 = vld [vmem:[#allocation5 + $0xf0] sm:$0xff]
    %v82 = vld [vmem:[#allocation5 + $0xf8] sm:$0xff]
    %v83 = vld [vmem:[#allocation5 + $0x100] sm:$0xff]
    %v84 = vld [vmem:[#allocation5 + $0x108] sm:$0xff]
    %v85 = vld [vmem:[#allocation5 + $0x110] sm:$0xff]
    %v86 = vld [vmem:[#allocation5 + $0x118] sm:$0xff]
    %v87 = vld [vmem:[#allocation5 + $0x120] sm:$0xff]
    %v88 = vld [vmem:[#allocation5 + $0x128] sm:$0xff]
    %v89 = vld [vmem:[#allocation5 + $0x130] sm:$0xff]
    %v90 = vld [vmem:[#allocation5 + $0x138] sm:$0xff]
    %v91 = vld [vmem:[#allocation5 + $0x140] sm:$0xff]
    %v92 = vld [vmem:[#allocation5 + $0x148] sm:$0xff]
    %v93 = vld [vmem:[#allocation5 + $0x150] sm:$0xff]
    %v94 = vld [vmem:[#allocation5 + $0x158] sm:$0xff]
    %v95 = vld [vmem:[#allocation5 + $0x160] sm:$0xff]
    %v96 = vld [vmem:[#allocation5 + $0x168] sm:$0xff]
    %v97 = vld [vmem:[#allocation5 + $0x170] sm:$0xff]
    %v98 = vld [vmem:[#allocation5 + $0x178] sm:$0xff]
    %v99 = vld [vmem:[#allocation5 + $0x180] sm:$0xff]
    %v100 = vld [vmem:[#allocation5 + $0x188] sm:$0xff]
    %v101 = vld [vmem:[#allocation5 + $0x190] sm:$0xff]
    %v102 = vld [vmem:[#allocation5 + $0x198] sm:$0xff]
    %v103 = vld [vmem:[#allocation5 + $0x1a0] sm:$0xff]
    %v104 = vld [vmem:[#allocation5 + $0x1a8] sm:$0xff]
    %v105 = vld [vmem:[#allocation5 + $0x1b0] sm:$0xff]
    %v106 = vld [vmem:[#allocation5 + $0x1b8] sm:$0xff]
    %v107 = vld [vmem:[#allocation5 + $0x1c0] sm:$0xff]
    %v108 = vld [vmem:[#allocation5 + $0x1c8] sm:$0xff]
    %v109 = vld [vmem:[#allocation5 + $0x1d0] sm:$0xff]
    %v110 = vld [vmem:[#allocation5 + $0x1d8] sm:$0xff]
    %v111 = vld [vmem:[#allocation5 + $0x1e0] sm:$0xff]
    %v112 = vld [vmem:[#allocation5 + $0x1e8] sm:$0xff]
    %v113 = vld [vmem:[#allocation5 + $0x1f0] sm:$0xff]
    %v114 = vld [vmem:[#allocation5 + $0x1f8] sm:$0xff]
    %v115 = vld [vmem:[#allocation5 + $0x200] sm:$0xff]
    %v116 = vld [vmem:[#allocation5 + $0x208] sm:$0xff]
    %v117 = vld [vmem:[#allocation5 + $0x210] sm:$0xff]
    %v118 = vld [vmem:[#allocation5 + $0x218] sm:$0xff]
    %v119 = vld [vmem:[#allocation5 + $0x220] sm:$0xff]
    %v120 = vld [vmem:[#allocation5 + $0x228] sm:$0xff]
    %v121 = vld [vmem:[#allocation5 + $0x230] sm:$0xff]
    %v122 = vld [vmem:[#allocation5 + $0x238] sm:$0xff]
    %v123 = vld [vmem:[#allocation5 + $0x240] sm:$0xff]
    %v124 = vld [vmem:[#allocation5 + $0x248] sm:$0xff]
    %v125 = vld [vmem:[#allocation5 + $0x250] sm:$0xff]
    %v126 = vld [vmem:[#allocation5 + $0x258] sm:$0xff]
    %v127 = vld [vmem:[#allocation5 + $0x260] sm:$0xff]
    %v128 = vld [vmem:[#allocation5 + $0x268] sm:$0xff]
    %v129 = vld [vmem:[#allocation5 + $0x270] sm:$0xff]
    %v130 = vld [vmem:[#allocation5 + $0x278] sm:$0xff]
    %v131 = vld [vmem:[#allocation5 + $0x280] sm:$0xff]
    %v132 = vld [vmem:[#allocation5 + $0x288] sm:$0xff]
    %v133 = vld [vmem:[#allocation5 + $0x290] sm:$0xff]
    %v134 = vld [vmem:[#allocation5 + $0x298] sm:$0xff]
    %v135 = vld [vmem:[#allocation5 + $0x2a0] sm:$0xff]
    %v136 = vld [vmem:[#allocation5 + $0x2a8] sm:$0xff]
    %v137 = vld [vmem:[#allocation5 + $0x2b0] sm:$0xff]
    %v138 = vld [vmem:[#allocation5 + $0x2b8] sm:$0xff]
    %v139 = vld [vmem:[#allocation5 + $0x2c0] sm:$0xff]
    %v140 = vld [vmem:[#allocation5 + $0x2c8] sm:$0xff]
    %v141 = vld [vmem:[#allocation5 + $0x2d0] sm:$0xff]
    %v142 = vld [vmem:[#allocation5 + $0x2d8] sm:$0xff]
    %v143 = vld [vmem:[#allocation5 + $0x2e0] sm:$0xff]
    %v144 = vld [vmem:[#allocation5 + $0x2e8] sm:$0xff]
    %v145 = vld [vmem:[#allocation5 + $0x2f0] sm:$0xff]
    %v146 = vld [vmem:[#allocation5 + $0x2f8] sm:$0xff]
    %v147 = vld [vmem:[#allocation5 + $0x300] sm:$0xff]
    %v148 = vld [vmem:[#allocation5 + $0x308] sm:$0xff]
    %v149 = vld [vmem:[#allocation5 + $0x310] sm:$0xff]
    %v150 = vld [vmem:[#allocation5 + $0x318] sm:$0xff]
    %v151 = vld [vmem:[#allocation5 + $0x320] sm:$0xff]
    %v152 = vld [vmem:[#allocation5 + $0x328] sm:$0xff]
    %v153 = vld [vmem:[#allocation5 + $0x330] sm:$0xff]
    %v154 = vld [vmem:[#allocation5 + $0x338] sm:$0xff]
    %v155 = vld [vmem:[#allocation5 + $0x340] sm:$0xff]
    %v156 = vld [vmem:[#allocation5 + $0x348] sm:$0xff]
    %v157 = vld [vmem:[#allocation5 + $0x350] sm:$0xff]
    %v158 = vld [vmem:[#allocation5 + $0x358] sm:$0xff]
    %v159 = vld [vmem:[#allocation5 + $0x360] sm:$0xff]
    %v160 = vld [vmem:[#allocation5 + $0x368] sm:$0xff]
    %v161 = vld [vmem:[#allocation5 + $0x370] sm:$0xff]
    %v162 = vld [vmem:[#allocation5 + $0x378] sm:$0xff]
    %v163 = vld [vmem:[#allocation5 + $0x380] sm:$0xff]
    %v164 = vld [vmem:[#allocation5 + $0x388] sm:$0xff]
    %v165 = vld [vmem:[#allocation5 + $0x390] sm:$0xff]
    %v166 = vld [vmem:[#allocation5 + $0x398] sm:$0xff]
    %v167 = vld [vmem:[#allocation5 + $0x3a0] sm:$0xff]
    %v168 = vld [vmem:[#allocation5 + $0x3a8] sm:$0xff]
    %v169 = vld [vmem:[#allocation5 + $0x3b0] sm:$0xff]
    %v170 = vld [vmem:[#allocation5 + $0x3b8] sm:$0xff]
    %v171 = vld [vmem:[#allocation5 + $0x3c0] sm:$0xff]
    %v172 = vld [vmem:[#allocation5 + $0x3c8] sm:$0xff]
    %v173 = vld [vmem:[#allocation5 + $0x3d0] sm:$0xff]
    %v174 = vld [vmem:[#allocation5 + $0x3d8] sm:$0xff]
    %v175 = vld [vmem:[#allocation5 + $0x3e0] sm:$0xff]
    %v176 = vld [vmem:[#allocation5 + $0x3e8] sm:$0xff]
    %v177 = vld [vmem:[#allocation5 + $0x3f0] sm:$0xff]
    %v178 = vld [vmem:[#allocation5 + $0x3f8] sm:$0xff]
    %v179 = vld [vmem:[#allocation2] sm:$0xff]
    %v180 = vld [vmem:[#allocation2 + $0x8] sm:$0xff]
    %v181 = vld [vmem:[#allocation2 + $0x10] sm:$0xff]
    %v182 = vld [vmem:[#allocation2 + $0x18] sm:$0xff]
    %v183 = vld [vmem:[#allocation2 + $0x20] sm:$0xff]
    %v184 = vld [vmem:[#allocation2 + $0x28] sm:$0xff]
    %v185 = vld [vmem:[#allocation2 + $0x30] sm:$0xff]
    %v186 = vld [vmem:[#allocation2 + $0x38] sm:$0xff]
    %v191 = vunpack.c.l.b16 %v47
    %v192 = vunpack.c.h.b16 %v47
    %v193 = vunpack.c.l.b16 %v48
    %v194 = vunpack.c.h.b16 %v48
    %v195 = vunpack.c.l.b16 %v49
    %v196 = vunpack.c.h.b16 %v49
    %v197 = vunpack.c.l.b16 %v50
    %v198 = vunpack.c.h.b16 %v50
    %v199 = vpack.c.b16 %v195, %v191
    %v200 = vpack.c.b16 %v196, %v192
    %v201 = vpack.c.b16 %v197, %v193
    %v202 = vpack.c.b16 %v198, %v194
    %v335 = vunpack.c.l.b16 %v51
    %v336 = vunpack.c.h.b16 %v51
    %v337 = vunpack.c.l.b16 %v52
    %v338 = vunpack.c.h.b16 %v52
    %v339 = vunpack.c.l.b16 %v53
    %v340 = vunpack.c.h.b16 %v53
    %v341 = vunpack.c.l.b16 %v54
    %v342 = vunpack.c.h.b16 %v54
    %v343 = vunpack.c.l.b16 %v55
    %v344 = vunpack.c.h.b16 %v55
    %v345 = vunpack.c.l.b16 %v56
    %v346 = vunpack.c.h.b16 %v56
    %v347 = vunpack.c.l.b16 %v57
    %v348 = vunpack.c.h.b16 %v57
    %v349 = vunpack.c.l.b16 %v58
    %v350 = vunpack.c.h.b16 %v58
    %v351 = vunpack.c.l.b16 %v59
    %v352 = vunpack.c.h.b16 %v59
    %v353 = vunpack.c.l.b16 %v60
    %v354 = vunpack.c.h.b16 %v60
    %v355 = vunpack.c.l.b16 %v61
    %v356 = vunpack.c.h.b16 %v61
    %v357 = vunpack.c.l.b16 %v62
    %v358 = vunpack.c.h.b16 %v62
    %v359 = vunpack.c.l.b16 %v63
    %v360 = vunpack.c.h.b16 %v63
    %v361 = vunpack.c.l.b16 %v64
    %v362 = vunpack.c.h.b16 %v64
    %v363 = vunpack.c.l.b16 %v65
    %v364 = vunpack.c.h.b16 %v65
    %v365 = vunpack.c.l.b16 %v66
    %v366 = vunpack.c.h.b16 %v66
    %v367 = vunpack.c.l.b16 %v67
    %v368 = vunpack.c.h.b16 %v67
    %v369 = vunpack.c.l.b16 %v68
    %v370 = vunpack.c.h.b16 %v68
    %v371 = vunpack.c.l.b16 %v69
    %v372 = vunpack.c.h.b16 %v69
    %v373 = vunpack.c.l.b16 %v70
    %v374 = vunpack.c.h.b16 %v70
    %v375 = vunpack.c.l.b16 %v71
    %v376 = vunpack.c.h.b16 %v71
    %v377 = vunpack.c.l.b16 %v72
    %v378 = vunpack.c.h.b16 %v72
    %v379 = vunpack.c.l.b16 %v73
    %v380 = vunpack.c.h.b16 %v73
    %v381 = vunpack.c.l.b16 %v74
    %v382 = vunpack.c.h.b16 %v74
    %v383 = vunpack.c.l.b16 %v75
    %v384 = vunpack.c.h.b16 %v75
    %v385 = vunpack.c.l.b16 %v76
    %v386 = vunpack.c.h.b16 %v76
    %v387 = vunpack.c.l.b16 %v77
    %v388 = vunpack.c.h.b16 %v77
    %v389 = vunpack.c.l.b16 %v78
    %v390 = vunpack.c.h.b16 %v78
    %v391 = vunpack.c.l.b16 %v79
    %v392 = vunpack.c.h.b16 %v79
    %v393 = vunpack.c.l.b16 %v80
    %v394 = vunpack.c.h.b16 %v80
    %v395 = vunpack.c.l.b16 %v81
    %v396 = vunpack.c.h.b16 %v81
    %v397 = vunpack.c.l.b16 %v82
    %v398 = vunpack.c.h.b16 %v82
    %v399 = vunpack.c.l.b16 %v83
    %v400 = vunpack.c.h.b16 %v83
    %v401 = vunpack.c.l.b16 %v84
    %v402 = vunpack.c.h.b16 %v84
    %v403 = vunpack.c.l.b16 %v85
    %v404 = vunpack.c.h.b16 %v85
    %v405 = vunpack.c.l.b16 %v86
    %v406 = vunpack.c.h.b16 %v86
    %v407 = vunpack.c.l.b16 %v87
    %v408 = vunpack.c.h.b16 %v87
    %v409 = vunpack.c.l.b16 %v88
    %v410 = vunpack.c.h.b16 %v88
    %v411 = vunpack.c.l.b16 %v89
    %v412 = vunpack.c.h.b16 %v89
    %v413 = vunpack.c.l.b16 %v90
    %v414 = vunpack.c.h.b16 %v90
    %v415 = vunpack.c.l.b16 %v91
    %v416 = vunpack.c.h.b16 %v91
    %v417 = vunpack.c.l.b16 %v92
    %v418 = vunpack.c.h.b16 %v92
    %v419 = vunpack.c.l.b16 %v93
    %v420 = vunpack.c.h.b16 %v93
    %v421 = vunpack.c.l.b16 %v94
    %v422 = vunpack.c.h.b16 %v94
    %v423 = vunpack.c.l.b16 %v95
    %v424 = vunpack.c.h.b16 %v95
    %v425 = vunpack.c.l.b16 %v96
    %v426 = vunpack.c.h.b16 %v96
    %v427 = vunpack.c.l.b16 %v97
    %v428 = vunpack.c.h.b16 %v97
    %v429 = vunpack.c.l.b16 %v98
    %v430 = vunpack.c.h.b16 %v98
    %v431 = vunpack.c.l.b16 %v99
    %v432 = vunpack.c.h.b16 %v99
    %v433 = vunpack.c.l.b16 %v100
    %v434 = vunpack.c.h.b16 %v100
    %v435 = vunpack.c.l.b16 %v101
    %v436 = vunpack.c.h.b16 %v101
    %v437 = vunpack.c.l.b16 %v102
    %v438 = vunpack.c.h.b16 %v102
    %v439 = vunpack.c.l.b16 %v103
    %v440 = vunpack.c.h.b16 %v103
    %v441 = vunpack.c.l.b16 %v104
    %v442 = vunpack.c.h.b16 %v104
    %v443 = vunpack.c.l.b16 %v105
    %v444 = vunpack.c.h.b16 %v105
    %v445 = vunpack.c.l.b16 %v106
    %v446 = vunpack.c.h.b16 %v106
    %v447 = vunpack.c.l.b16 %v107
    %v448 = vunpack.c.h.b16 %v107
    %v449 = vunpack.c.l.b16 %v108
    %v450 = vunpack.c.h.b16 %v108
    %v451 = vunpack.c.l.b16 %v109
    %v452 = vunpack.c.h.b16 %v109
    %v453 = vunpack.c.l.b16 %v110
    %v454 = vunpack.c.h.b16 %v110
    %v455 = vunpack.c.l.b16 %v111
    %v456 = vunpack.c.h.b16 %v111
    %v457 = vunpack.c.l.b16 %v112
    %v458 = vunpack.c.h.b16 %v112
    %v459 = vunpack.c.l.b16 %v113
    %v460 = vunpack.c.h.b16 %v113
    %v461 = vunpack.c.l.b16 %v114
    %v462 = vunpack.c.h.b16 %v114
    %v463 = vunpack.c.l.b16 %v115
    %v464 = vunpack.c.h.b16 %v115
    %v465 = vunpack.c.l.b16 %v116
    %v466 = vunpack.c.h.b16 %v116
    %v467 = vunpack.c.l.b16 %v117
    %v468 = vunpack.c.h.b16 %v117
    %v469 = vunpack.c.l.b16 %v118
    %v470 = vunpack.c.h.b16 %v118
    %v471 = vunpack.c.l.b16 %v119
    %v472 = vunpack.c.h.b16 %v119
    %v473 = vunpack.c.l.b16 %v120
    %v474 = vunpack.c.h.b16 %v120
    %v475 = vunpack.c.l.b16 %v121
    %v476 = vunpack.c.h.b16 %v121
    %v477 = vunpack.c.l.b16 %v122
    %v478 = vunpack.c.h.b16 %v122
    %v479 = vunpack.c.l.b16 %v123
    %v480 = vunpack.c.h.b16 %v123
    %v481 = vunpack.c.l.b16 %v124
    %v482 = vunpack.c.h.b16 %v124
    %v483 = vunpack.c.l.b16 %v125
    %v484 = vunpack.c.h.b16 %v125
    %v485 = vunpack.c.l.b16 %v126
    %v486 = vunpack.c.h.b16 %v126
    %v487 = vunpack.c.l.b16 %v127
    %v488 = vunpack.c.h.b16 %v127
    %v489 = vunpack.c.l.b16 %v128
    %v490 = vunpack.c.h.b16 %v128
    %v491 = vunpack.c.l.b16 %v129
    %v492 = vunpack.c.h.b16 %v129
    %v493 = vunpack.c.l.b16 %v130
    %v494 = vunpack.c.h.b16 %v130
    %v495 = vunpack.c.l.b16 %v131
    %v496 = vunpack.c.h.b16 %v131
    %v497 = vunpack.c.l.b16 %v132
    %v498 = vunpack.c.h.b16 %v132
    %v499 = vunpack.c.l.b16 %v133
    %v500 = vunpack.c.h.b16 %v133
    %v501 = vunpack.c.l.b16 %v134
    %v502 = vunpack.c.h.b16 %v134
    %v503 = vunpack.c.l.b16 %v135
    %v504 = vunpack.c.h.b16 %v135
    %v505 = vunpack.c.l.b16 %v136
    %v506 = vunpack.c.h.b16 %v136
    %v507 = vunpack.c.l.b16 %v137
    %v508 = vunpack.c.h.b16 %v137
    %v509 = vunpack.c.l.b16 %v138
    %v510 = vunpack.c.h.b16 %v138
    %v511 = vunpack.c.l.b16 %v139
    %v512 = vunpack.c.h.b16 %v139
    %v513 = vunpack.c.l.b16 %v140
    %v514 = vunpack.c.h.b16 %v140
    %v515 = vunpack.c.l.b16 %v141
    %v516 = vunpack.c.h.b16 %v141
    %v517 = vunpack.c.l.b16 %v142
    %v518 = vunpack.c.h.b16 %v142
    %v519 = vunpack.c.l.b16 %v143
    %v520 = vunpack.c.h.b16 %v143
    %v521 = vunpack.c.l.b16 %v144
    %v522 = vunpack.c.h.b16 %v144
    %v523 = vunpack.c.l.b16 %v145
    %v524 = vunpack.c.h.b16 %v145
    %v525 = vunpack.c.l.b16 %v146
    %v526 = vunpack.c.h.b16 %v146
    %v527 = vunpack.c.l.b16 %v147
    %v528 = vunpack.c.h.b16 %v147
    %v529 = vunpack.c.l.b16 %v148
    %v530 = vunpack.c.h.b16 %v148
    %v531 = vunpack.c.l.b16 %v149
    %v532 = vunpack.c.h.b16 %v149
    %v533 = vunpack.c.l.b16 %v150
    %v534 = vunpack.c.h.b16 %v150
    %v535 = vunpack.c.l.b16 %v151
    %v536 = vunpack.c.h.b16 %v151
    %v537 = vunpack.c.l.b16 %v152
    %v538 = vunpack.c.h.b16 %v152
    %v539 = vunpack.c.l.b16 %v153
    %v540 = vunpack.c.h.b16 %v153
    %v541 = vunpack.c.l.b16 %v154
    %v542 = vunpack.c.h.b16 %v154
    %v543 = vunpack.c.l.b16 %v155
    %v544 = vunpack.c.h.b16 %v155
    %v545 = vunpack.c.l.b16 %v156
    %v546 = vunpack.c.h.b16 %v156
    %v547 = vunpack.c.l.b16 %v157
    %v548 = vunpack.c.h.b16 %v157
    %v549 = vunpack.c.l.b16 %v158
    %v550 = vunpack.c.h.b16 %v158
    %v551 = vunpack.c.l.b16 %v159
    %v552 = vunpack.c.h.b16 %v159
    %v553 = vunpack.c.l.b16 %v160
    %v554 = vunpack.c.h.b16 %v160
    %v555 = vunpack.c.l.b16 %v161
    %v556 = vunpack.c.h.b16 %v161
    %v557 = vunpack.c.l.b16 %v162
    %v558 = vunpack.c.h.b16 %v162
    %v559 = vunpack.c.l.b16 %v163
    %v560 = vunpack.c.h.b16 %v163
    %v561 = vunpack.c.l.b16 %v164
    %v562 = vunpack.c.h.b16 %v164
    %v563 = vunpack.c.l.b16 %v165
    %v564 = vunpack.c.h.b16 %v165
    %v565 = vunpack.c.l.b16 %v166
    %v566 = vunpack.c.h.b16 %v166
    %v567 = vunpack.c.l.b16 %v167
    %v568 = vunpack.c.h.b16 %v167
    %v569 = vunpack.c.l.b16 %v168
    %v570 = vunpack.c.h.b16 %v168
    %v571 = vunpack.c.l.b16 %v169
    %v572 = vunpack.c.h.b16 %v169
    %v573 = vunpack.c.l.b16 %v170
    %v574 = vunpack.c.h.b16 %v170
    %v575 = vunpack.c.l.b16 %v171
    %v576 = vunpack.c.h.b16 %v171
    %v577 = vunpack.c.l.b16 %v172
    %v578 = vunpack.c.h.b16 %v172
    %v579 = vunpack.c.l.b16 %v173
    %v580 = vunpack.c.h.b16 %v173
    %v581 = vunpack.c.l.b16 %v174
    %v582 = vunpack.c.h.b16 %v174
    %v583 = vunpack.c.l.b16 %v175
    %v584 = vunpack.c.h.b16 %v175
    %v585 = vunpack.c.l.b16 %v176
    %v586 = vunpack.c.h.b16 %v176
    %v587 = vunpack.c.l.b16 %v177
    %v588 = vunpack.c.h.b16 %v177
    %v589 = vunpack.c.l.b16 %v178
    %v590 = vunpack.c.h.b16 %v178
    %v591 = vpack.c.b16 %v339, %v335
    %v592 = vpack.c.b16 %v340, %v336
    %v593 = vpack.c.b16 %v341, %v337
    %v594 = vpack.c.b16 %v342, %v338
    %v595 = vpack.c.b16 %v347, %v343
    %v596 = vpack.c.b16 %v348, %v344
    %v597 = vpack.c.b16 %v349, %v345
    %v598 = vpack.c.b16 %v350, %v346
    %v599 = vpack.c.b16 %v355, %v351
    %v600 = vpack.c.b16 %v356, %v352
    %v601 = vpack.c.b16 %v357, %v353
    %v602 = vpack.c.b16 %v358, %v354
    %v603 = vpack.c.b16 %v363, %v359
    %v604 = vpack.c.b16 %v364, %v360
    %v605 = vpack.c.b16 %v365, %v361
    %v606 = vpack.c.b16 %v366, %v362
    %v607 = vpack.c.b16 %v371, %v367
    %v608 = vpack.c.b16 %v372, %v368
    %v609 = vpack.c.b16 %v373, %v369
    %v610 = vpack.c.b16 %v374, %v370
    %v611 = vpack.c.b16 %v379, %v375
    %v612 = vpack.c.b16 %v380, %v376
    %v613 = vpack.c.b16 %v381, %v377
    %v614 = vpack.c.b16 %v382, %v378
    %v615 = vpack.c.b16 %v387, %v383
    %v616 = vpack.c.b16 %v388, %v384
    %v617 = vpack.c.b16 %v389, %v385
    %v618 = vpack.c.b16 %v390, %v386
    %v619 = vpack.c.b16 %v395, %v391
    %v620 = vpack.c.b16 %v396, %v392
    %v621 = vpack.c.b16 %v397, %v393
    %v622 = vpack.c.b16 %v398, %v394
    %v623 = vpack.c.b16 %v403, %v399
    %v624 = vpack.c.b16 %v404, %v400
    %v625 = vpack.c.b16 %v405, %v401
    %v626 = vpack.c.b16 %v406, %v402
    %v627 = vpack.c.b16 %v411, %v407
    %v628 = vpack.c.b16 %v412, %v408
    %v629 = vpack.c.b16 %v413, %v409
    %v630 = vpack.c.b16 %v414, %v410
    %v631 = vpack.c.b16 %v419, %v415
    %v632 = vpack.c.b16 %v420, %v416
    %v633 = vpack.c.b16 %v421, %v417
    %v634 = vpack.c.b16 %v422, %v418
    %v635 = vpack.c.b16 %v427, %v423
    %v636 = vpack.c.b16 %v428, %v424
    %v637 = vpack.c.b16 %v429, %v425
    %v638 = vpack.c.b16 %v430, %v426
    %v639 = vpack.c.b16 %v435, %v431
    %v640 = vpack.c.b16 %v436, %v432
    %v641 = vpack.c.b16 %v437, %v433
    %v642 = vpack.c.b16 %v438, %v434
    %v643 = vpack.c.b16 %v443, %v439
    %v644 = vpack.c.b16 %v444, %v440
    %v645 = vpack.c.b16 %v445, %v441
    %v646 = vpack.c.b16 %v446, %v442
    %v647 = vpack.c.b16 %v451, %v447
    %v648 = vpack.c.b16 %v452, %v448
    %v649 = vpack.c.b16 %v453, %v449
    %v650 = vpack.c.b16 %v454, %v450
    %v651 = vpack.c.b16 %v459, %v455
    %v652 = vpack.c.b16 %v460, %v456
    %v653 = vpack.c.b16 %v461, %v457
    %v654 = vpack.c.b16 %v462, %v458
    %v655 = vpack.c.b16 %v467, %v463
    %v656 = vpack.c.b16 %v468, %v464
    %v657 = vpack.c.b16 %v469, %v465
    %v658 = vpack.c.b16 %v470, %v466
    %v659 = vpack.c.b16 %v475, %v471
    %v660 = vpack.c.b16 %v476, %v472
    %v661 = vpack.c.b16 %v477, %v473
    %v662 = vpack.c.b16 %v478, %v474
    %v663 = vpack.c.b16 %v483, %v479
    %v664 = vpack.c.b16 %v484, %v480
    %v665 = vpack.c.b16 %v485, %v481
    %v666 = vpack.c.b16 %v486, %v482
    %v667 = vpack.c.b16 %v491, %v487
    %v668 = vpack.c.b16 %v492, %v488
    %v669 = vpack.c.b16 %v493, %v489
    %v670 = vpack.c.b16 %v494, %v490
    %v671 = vpack.c.b16 %v499, %v495
    %v672 = vpack.c.b16 %v500, %v496
    %v673 = vpack.c.b16 %v501, %v497
    %v674 = vpack.c.b16 %v502, %v498
    %v675 = vpack.c.b16 %v507, %v503
    %v676 = vpack.c.b16 %v508, %v504
    %v677 = vpack.c.b16 %v509, %v505
    %v678 = vpack.c.b16 %v510, %v506
    %v679 = vpack.c.b16 %v515, %v511
    %v680 = vpack.c.b16 %v516, %v512
    %v681 = vpack.c.b16 %v517, %v513
    %v682 = vpack.c.b16 %v518, %v514
    %v683 = vpack.c.b16 %v523, %v519
    %v684 = vpack.c.b16 %v524, %v520
    %v685 = vpack.c.b16 %v525, %v521
    %v686 = vpack.c.b16 %v526, %v522
    %v687 = vpack.c.b16 %v531, %v527
    %v688 = vpack.c.b16 %v532, %v528
    %v689 = vpack.c.b16 %v533, %v529
    %v690 = vpack.c.b16 %v534, %v530
    %v691 = vpack.c.b16 %v539, %v535
    %v692 = vpack.c.b16 %v540, %v536
    %v693 = vpack.c.b16 %v541, %v537
    %v694 = vpack.c.b16 %v542, %v538
    %v695 = vpack.c.b16 %v547, %v543
    %v696 = vpack.c.b16 %v548, %v544
    %v697 = vpack.c.b16 %v549, %v545
    %v698 = vpack.c.b16 %v550, %v546
    %v699 = vpack.c.b16 %v555, %v551
    %v700 = vpack.c.b16 %v556, %v552
    %v701 = vpack.c.b16 %v557, %v553
    %v702 = vpack.c.b16 %v558, %v554
    %v703 = vpack.c.b16 %v563, %v559
    %v704 = vpack.c.b16 %v564, %v560
    %v705 = vpack.c.b16 %v565, %v561
    %v706 = vpack.c.b16 %v566, %v562
    %v707 = vpack.c.b16 %v571, %v567
    %v708 = vpack.c.b16 %v572, %v568
    %v709 = vpack.c.b16 %v573, %v569
    %v710 = vpack.c.b16 %v574, %v570
    %v711 = vpack.c.b16 %v579, %v575
    %v712 = vpack.c.b16 %v580, %v576
    %v713 = vpack.c.b16 %v581, %v577
    %v714 = vpack.c.b16 %v582, %v578
    %v715 = vpack.c.b16 %v587, %v583
    %v716 = vpack.c.b16 %v588, %v584
    %v717 = vpack.c.b16 %v589, %v585
    %v718 = vpack.c.b16 %v590, %v586
    %847 = vmatpush.bf16.msra.mxu0 %v619
    %848 = vmatpush.bf16.msra.mxu0 %v615
    %849 = vmatpush.bf16.msra.mxu0 %v611
    %850 = vmatpush.bf16.msra.mxu0 %v607
    %851 = vmatpush.bf16.msra.mxu0 %v603
    %852 = vmatpush.bf16.msra.mxu0 %v599
    %853 = vmatpush.bf16.msra.mxu0 %v595
    %854 = vmatpush.bf16.msra.mxu0 %v591
    %855 = vmatmul.bf16.gmra.mxu0 %v199
    %v856 = vpop.f32.mrf.mxu0
    %v857 = vadd.f32 %v179, %v856
    %v858 = vpop.f32.mrf.mxu0
    %v859 = vadd.f32 %v183, %v858
    %860 = vdwg.mxu0
    %861 = vmatpush.bf16.msra.mxu0 %v651
    %862 = vmatpush.bf16.msra.mxu0 %v647
    %863 = vmatpush.bf16.msra.mxu0 %v643
    %864 = vmatpush.bf16.msra.mxu0 %v639
    %865 = vmatpush.bf16.msra.mxu0 %v635
    %866 = vmatpush.bf16.msra.mxu0 %v631
    %867 = vmatpush.bf16.msra.mxu0 %v627
    %868 = vmatpush.bf16.msra.mxu0 %v623
    %869 = vmatmul.bf16.gmra.mxu0 %v200
    %v870 = vpop.f32.mrf.mxu0
    %v871 = vadd.f32 %v857, %v870
    %v872 = vpop.f32.mrf.mxu0
    %v873 = vadd.f32 %v859, %v872
    %874 = vdwg.mxu0
    %875 = vmatpush.bf16.msra.mxu0 %v683
    %876 = vmatpush.bf16.msra.mxu0 %v679
    %877 = vmatpush.bf16.msra.mxu0 %v675
    %878 = vmatpush.bf16.msra.mxu0 %v671
    %879 = vmatpush.bf16.msra.mxu0 %v667
    %880 = vmatpush.bf16.msra.mxu0 %v663
    %881 = vmatpush.bf16.msra.mxu0 %v659
    %882 = vmatpush.bf16.msra.mxu0 %v655
    %883 = vmatmul.bf16.gmra.mxu0 %v201
    %v884 = vpop.f32.mrf.mxu0
    %v885 = vadd.f32 %v871, %v884
    %v886 = vpop.f32.mrf.mxu0
    %v887 = vadd.f32 %v873, %v886
    %888 = vdwg.mxu0
    %889 = vmatpush.bf16.msra.mxu0 %v715
    %890 = vmatpush.bf16.msra.mxu0 %v711
    %891 = vmatpush.bf16.msra.mxu0 %v707
    %892 = vmatpush.bf16.msra.mxu0 %v703
    %893 = vmatpush.bf16.msra.mxu0 %v699
    %894 = vmatpush.bf16.msra.mxu0 %v695
    %895 = vmatpush.bf16.msra.mxu0 %v691
    %896 = vmatpush.bf16.msra.mxu0 %v687
    %897 = vmatmul.bf16.gmra.mxu0 %v202
    %v898 = vpop.f32.mrf.mxu0
    %v899 = vadd.f32 %v885, %v898
    %v900 = vpop.f32.mrf.mxu0
    %v901 = vadd.f32 %v887, %v900
    %902 = vdwg.mxu0
    %903 = vmatpush.bf16.msra.mxu0 %v620
    %904 = vmatpush.bf16.msra.mxu0 %v616
    %905 = vmatpush.bf16.msra.mxu0 %v612
    %906 = vmatpush.bf16.msra.mxu0 %v608
    %907 = vmatpush.bf16.msra.mxu0 %v604
    %908 = vmatpush.bf16.msra.mxu0 %v600
    %909 = vmatpush.bf16.msra.mxu0 %v596
    %910 = vmatpush.bf16.msra.mxu0 %v592
    %911 = vmatmul.bf16.gmra.mxu0 %v199
    %v912 = vpop.f32.mrf.mxu0
    %v913 = vadd.f32 %v180, %v912
    %v914 = vpop.f32.mrf.mxu0
    %v915 = vadd.f32 %v184, %v914
    %916 = vdwg.mxu0
    %917 = vmatpush.bf16.msra.mxu0 %v652
    %918 = vmatpush.bf16.msra.mxu0 %v648
    %919 = vmatpush.bf16.msra.mxu0 %v644
    %920 = vmatpush.bf16.msra.mxu0 %v640
    %921 = vmatpush.bf16.msra.mxu0 %v636
    %922 = vmatpush.bf16.msra.mxu0 %v632
    %923 = vmatpush.bf16.msra.mxu0 %v628
    %924 = vmatpush.bf16.msra.mxu0 %v624
    %925 = vmatmul.bf16.gmra.mxu0 %v200
    %v926 = vpop.f32.mrf.mxu0
    %v927 = vadd.f32 %v913, %v926
    %v928 = vpop.f32.mrf.mxu0
    %v929 = vadd.f32 %v915, %v928
    %930 = vdwg.mxu0
    %931 = vmatpush.bf16.msra.mxu0 %v684
    %932 = vmatpush.bf16.msra.mxu0 %v680
    %933 = vmatpush.bf16.msra.mxu0 %v676
    %934 = vmatpush.bf16.msra.mxu0 %v672
    %935 = vmatpush.bf16.msra.mxu0 %v668
    %936 = vmatpush.bf16.msra.mxu0 %v664
    %937 = vmatpush.bf16.msra.mxu0 %v660
    %938 = vmatpush.bf16.msra.mxu0 %v656
    %939 = vmatmul.bf16.gmra.mxu0 %v201
    %v940 = vpop.f32.mrf.mxu0
    %v941 = vadd.f32 %v927, %v940
    %v942 = vpop.f32.mrf.mxu0
    %v943 = vadd.f32 %v929, %v942
    %944 = vdwg.mxu0
    %945 = vmatpush.bf16.msra.mxu0 %v716
    %946 = vmatpush.bf16.msra.mxu0 %v712
    %947 = vmatpush.bf16.msra.mxu0 %v708
    %948 = vmatpush.bf16.msra.mxu0 %v704
    %949 = vmatpush.bf16.msra.mxu0 %v700
    %950 = vmatpush.bf16.msra.mxu0 %v696
    %951 = vmatpush.bf16.msra.mxu0 %v692
    %952 = vmatpush.bf16.msra.mxu0 %v688
    %953 = vmatmul.bf16.gmra.mxu0 %v202
    %v954 = vpop.f32.mrf.mxu0
    %v955 = vadd.f32 %v941, %v954
    %v956 = vpop.f32.mrf.mxu0
    %v957 = vadd.f32 %v943, %v956
    %958 = vdwg.mxu0
    %959 = vmatpush.bf16.msra.mxu0 %v621
    %960 = vmatpush.bf16.msra.mxu0 %v617
    %961 = vmatpush.bf16.msra.mxu0 %v613
    %962 = vmatpush.bf16.msra.mxu0 %v609
    %963 = vmatpush.bf16.msra.mxu0 %v605
    %964 = vmatpush.bf16.msra.mxu0 %v601
    %965 = vmatpush.bf16.msra.mxu0 %v597
    %966 = vmatpush.bf16.msra.mxu0 %v593
    %967 = vmatmul.bf16.gmra.mxu0 %v199
    %v968 = vpop.f32.mrf.mxu0
    %v969 = vadd.f32 %v181, %v968
    %v970 = vpop.f32.mrf.mxu0
    %v971 = vadd.f32 %v185, %v970
    %972 = vdwg.mxu0
    %973 = vmatpush.bf16.msra.mxu0 %v653
    %974 = vmatpush.bf16.msra.mxu0 %v649
    %975 = vmatpush.bf16.msra.mxu0 %v645
    %976 = vmatpush.bf16.msra.mxu0 %v641
    %977 = vmatpush.bf16.msra.mxu0 %v637
    %978 = vmatpush.bf16.msra.mxu0 %v633
    %979 = vmatpush.bf16.msra.mxu0 %v629
    %980 = vmatpush.bf16.msra.mxu0 %v625
    %981 = vmatmul.bf16.gmra.mxu0 %v200
    %v982 = vpop.f32.mrf.mxu0
    %v983 = vadd.f32 %v969, %v982
    %v984 = vpop.f32.mrf.mxu0
    %v985 = vadd.f32 %v971, %v984
    %986 = vdwg.mxu0
    %987 = vmatpush.bf16.msra.mxu0 %v685
    %988 = vmatpush.bf16.msra.mxu0 %v681
    %989 = vmatpush.bf16.msra.mxu0 %v677
    %990 = vmatpush.bf16.msra.mxu0 %v673
    %991 = vmatpush.bf16.msra.mxu0 %v669
    %992 = vmatpush.bf16.msra.mxu0 %v665
    %993 = vmatpush.bf16.msra.mxu0 %v661
    %994 = vmatpush.bf16.msra.mxu0 %v657
    %995 = vmatmul.bf16.gmra.mxu0 %v201
    %v996 = vpop.f32.mrf.mxu0
    %v997 = vadd.f32 %v983, %v996
    %v998 = vpop.f32.mrf.mxu0
    %v999 = vadd.f32 %v985, %v998
    %1000 = vdwg.mxu0
    %1001 = vmatpush.bf16.msra.mxu0 %v717
    %1002 = vmatpush.bf16.msra.mxu0 %v713
    %1003 = vmatpush.bf16.msra.mxu0 %v709
    %1004 = vmatpush.bf16.msra.mxu0 %v705
    %1005 = vmatpush.bf16.msra.mxu0 %v701
    %1006 = vmatpush.bf16.msra.mxu0 %v697
    %1007 = vmatpush.bf16.msra.mxu0 %v693
    %1008 = vmatpush.bf16.msra.mxu0 %v689
    %1009 = vmatmul.bf16.gmra.mxu0 %v202
    %v1010 = vpop.f32.mrf.mxu0
    %v1011 = vadd.f32 %v997, %v1010
    %v1012 = vpop.f32.mrf.mxu0
    %v1013 = vadd.f32 %v999, %v1012
    %1014 = vdwg.mxu0
    %1015 = vmatpush.bf16.msra.mxu0 %v622
    %1016 = vmatpush.bf16.msra.mxu0 %v618
    %1017 = vmatpush.bf16.msra.mxu0 %v614
    %1018 = vmatpush.bf16.msra.mxu0 %v610
    %1019 = vmatpush.bf16.msra.mxu0 %v606
    %1020 = vmatpush.bf16.msra.mxu0 %v602
    %1021 = vmatpush.bf16.msra.mxu0 %v598
    %1022 = vmatpush.bf16.msra.mxu0 %v594
    %1023 = vmatmul.bf16.gmra.mxu0 %v199
    %v1024 = vpop.f32.mrf.mxu0
    %v1025 = vadd.f32 %v182, %v1024
    %v1026 = vpop.f32.mrf.mxu0
    %v1027 = vadd.f32 %v186, %v1026
    %1028 = vdwg.mxu0
    %1029 = vmatpush.bf16.msra.mxu0 %v654
    %1030 = vmatpush.bf16.msra.mxu0 %v650
    %1031 = vmatpush.bf16.msra.mxu0 %v646
    %1032 = vmatpush.bf16.msra.mxu0 %v642
    %1033 = vmatpush.bf16.msra.mxu0 %v638
    %1034 = vmatpush.bf16.msra.mxu0 %v634
    %1035 = vmatpush.bf16.msra.mxu0 %v630
    %1036 = vmatpush.bf16.msra.mxu0 %v626
    %1037 = vmatmul.bf16.gmra.mxu0 %v200
    %v1038 = vpop.f32.mrf.mxu0
    %v1039 = vadd.f32 %v1025, %v1038
    %v1040 = vpop.f32.mrf.mxu0
    %v1041 = vadd.f32 %v1027, %v1040
    %1042 = vdwg.mxu0
    %1043 = vmatpush.bf16.msra.mxu0 %v686
    %1044 = vmatpush.bf16.msra.mxu0 %v682
    %1045 = vmatpush.bf16.msra.mxu0 %v678
    %1046 = vmatpush.bf16.msra.mxu0 %v674
    %1047 = vmatpush.bf16.msra.mxu0 %v670
    %1048 = vmatpush.bf16.msra.mxu0 %v666
    %1049 = vmatpush.bf16.msra.mxu0 %v662
    %1050 = vmatpush.bf16.msra.mxu0 %v658
    %1051 = vmatmul.bf16.gmra.mxu0 %v201
    %v1052 = vpop.f32.mrf.mxu0
    %v1053 = vadd.f32 %v1039, %v1052
    %v1054 = vpop.f32.mrf.mxu0
    %v1055 = vadd.f32 %v1041, %v1054
    %1056 = vdwg.mxu0
    %1057 = vmatpush.bf16.msra.mxu0 %v718
    %1058 = vmatpush.bf16.msra.mxu0 %v714
    %1059 = vmatpush.bf16.msra.mxu0 %v710
    %1060 = vmatpush.bf16.msra.mxu0 %v706
    %1061 = vmatpush.bf16.msra.mxu0 %v702
    %1062 = vmatpush.bf16.msra.mxu0 %v698
    %1063 = vmatpush.bf16.msra.mxu0 %v694
    %1064 = vmatpush.bf16.msra.mxu0 %v690
    %1065 = vmatmul.bf16.gmra.mxu0 %v202
    %v1066 = vpop.f32.mrf.mxu0
    %v1067 = vadd.f32 %v1053, %v1066
    %v1068 = vpop.f32.mrf.mxu0
    %v1069 = vadd.f32 %v1055, %v1068
    %1070 = vdwg.mxu0
    %v1071 = vadd.f32 %v899, %v955
    %v1072 = vadd.f32 %v1071, %v1011
    %v1073 = vadd.f32 %v1072, %v1067
    %1074 = vadd.xlane.f32.xlu0 %v1073
    %v1075 = vpop.xlane.xlu0 %1074
    %v1076 = vadd.f32 %v901, %v957
    %v1077 = vadd.f32 %v1076, %v1013
    %v1078 = vadd.f32 %v1077, %v1069
    %1079 = vadd.xlane.f32.xlu0 %v1078
    %v1080 = vpop.xlane.xlu0 %1079
    %v1081 = vrcp.pop 512.0
    %v1082 = vmul.f32 512.0, %v1081
    %v1083 = vsub.f32 1.0, %v1082
    %v1084 = vmul.f32 %v1081, %v1083
    %v1085 = vadd.f32 %v1081, %v1084
    %vm1086 = vweird.f32 %v1081
    %v1087 = vsel %vm1086, %v1081, %v1085
    %v1088 = vmul.f32 %v1075, %v1087
    %v1089 = vmul.f32 %v1080, %v1087
    %v1090 = vsub.f32 %v899, %v1088
    %v1091 = vsub.f32 %v955, %v1088
    %v1092 = vsub.f32 %v1011, %v1088
    %v1093 = vsub.f32 %v1067, %v1088
    %v1094 = vsub.f32 %v901, %v1089
    %v1095 = vsub.f32 %v957, %v1089
    %v1096 = vsub.f32 %v1013, %v1089
    %v1097 = vsub.f32 %v1069, %v1089
    %v1098 = vmul.f32 %v1090, %v1090
    %v1099 = vmul.f32 %v1091, %v1091
    %v1100 = vmul.f32 %v1092, %v1092
    %v1101 = vmul.f32 %v1093, %v1093
    %v1102 = vmul.f32 %v1094, %v1094
    %v1103 = vmul.f32 %v1095, %v1095
    %v1104 = vmul.f32 %v1096, %v1096
    %v1105 = vmul.f32 %v1097, %v1097
    %v1106 = vadd.f32 %v1098, %v1099
    %v1107 = vadd.f32 %v1106, %v1100
    %v1108 = vadd.f32 %v1107, %v1101
    %1109 = vadd.xlane.f32.xlu0 %v1108
    %v1110 = vpop.xlane.xlu0 %1109
    %v1111 = vadd.f32 %v1102, %v1103
    %v1112 = vadd.f32 %v1111, %v1104
    %v1113 = vadd.f32 %v1112, %v1105
    %1114 = vadd.xlane.f32.xlu0 %v1113
    %v1115 = vpop.xlane.xlu0 %1114
    %v1116 = vmul.f32 %v1110, %v1087
    %v1117 = vmul.f32 %v1115, %v1087
    %v1118 = vadd.f32 %v1116, 1e-05
    %v1119 = vadd.f32 %v1117, 1e-05
    %v1120 = vrsqrt.pop %v1118
    %v1121 = vmul.f32 %v1120, %v1118
    %v1122 = vmul.f32 %v1121, %v1120
    %v1123 = vmul.f32 0.5, %v1122
    %v1124 = vsub.f32 1.5, %v1123
    %v1125 = vmul.f32 %v1120, %v1124
    %vm1126 = vweird.f32 %v1118
    %vm1127 = vweird.f32 %v1120
    %vm1128 = vmor %vm1126, %vm1127
    %v1129 = vsel %vm1128, %v1120, %v1125
    %v1130 = vrsqrt.pop %v1119
    %v1131 = vmul.f32 %v1130, %v1119
    %v1132 = vmul.f32 %v1131, %v1130
    %v1133 = vmul.f32 0.5, %v1132
    %v1134 = vsub.f32 1.5, %v1133
    %v1135 = vmul.f32 %v1130, %v1134
    %vm1136 = vweird.f32 %v1119
    %vm1137 = vweird.f32 %v1130
    %vm1138 = vmor %vm1136, %vm1137
    %v1139 = vsel %vm1138, %v1130, %v1135
    %v1140 = vmul.f32 %v1090, %v1129
    %v1141 = vmul.f32 %v1091, %v1129
    %v1142 = vmul.f32 %v1092, %v1129
    %v1143 = vmul.f32 %v1093, %v1129
    %v1144 = vmul.f32 %v1094, %v1139
    %v1145 = vmul.f32 %v1095, %v1139
    %v1146 = vmul.f32 %v1096, %v1139
    %v1147 = vmul.f32 %v1097, %v1139
    %1148 = vst [vmem:[#allocation7] sm:$0xff] %v1140
    %1149 = vst [vmem:[#allocation7 + $0x8] sm:$0xff] %v1141
    %1150 = vst [vmem:[#allocation7 + $0x10] sm:$0xff] %v1142
    %1151 = vst [vmem:[#allocation7 + $0x18] sm:$0xff] %v1143
    %1152 = vst [vmem:[#allocation7 + $0x20] sm:$0xff] %v1144
    %1153 = vst [vmem:[#allocation7 + $0x28] sm:$0xff] %v1145
    %1154 = vst [vmem:[#allocation7 + $0x30] sm:$0xff] %v1146
    %1155 = vst [vmem:[#allocation7 + $0x38] sm:$0xff] %v1147
    // Predicated region
    $region22: #{multi_head_attention.5} parent=1 // pred_check
      _
    $region23: #{multi_head_attention.5} parent=1 // pred_check_branch
      %1157 = sbr.rel (0) target = $region25
    $region24: #{multi_head_attention.5} parent=1 // pred_region
      %1159 = vsyncadd [#allocation4], 0
      %s1160 = sshll.u32 [#allocation7], 4
      %s1161 = int_to_ptr.vmem [resolvable:$true] %s1160
      %s1162 = sshll.u32 %s3, 4
      %s1163 = int_to_ptr.hbm [resolvable:$true] %s1162
      %1168 = dma.vmem_to_hbm [thread:$0]  %s1161, 1024, %s1163, [#allocation4], 512, 512, 32
    $region25: #{multi_head_attention.5} parent=1 // pred_fallthru
      _
    // Predicated region
    $region26: #{multi_head_attention.5} parent=1 // pred_check
      _
    $region27: #{multi_head_attention.5} parent=1 // pred_check_branch
      %1170 = sbr.rel (0) target = $region29
    $region28: #{multi_head_attention.5} parent=1 // pred_region
      %1172 = dma.done [#allocation4], 1024
    $region29: #{multi_head_attention.5} parent=1 // pred_fallthru
      _
    %1173 = vsyncpa [#allocation3], 1
    %1174 = vsyncpa [#allocation6], 1
    %1175 = vsyncpa [#allocation4], 1

// kernel: multi_head_attention.3
$region0: #{multi_head_attention.3}
  #allocation0 [shape = 'u32[]', space=smem, size = 0x4, offset = 0x4, fixed_abs, tag = 'smem constant byte address 0x4 - core index']
  #allocation1 [shape = 'u32[72,128]{1,0:T(1,128)}', space=vmem, size = 0x9000, scoped, tag = 'internal scratch']
  %s0 = inlined_call_operand.hbm [shape: f32[16,512], index: 0, kind: input, shape index: {}]
  %s1 = inlined_call_operand.hbm [shape: f32[16,512], index: 1, kind: input, shape index: {}]
  %s2 = inlined_call_operand.hbm [shape: f32[16,512], index: 2, kind: input, shape index: {}]
  %s3 = inlined_call_operand.hbm [shape: bf16[512,512], index: 3, kind: input, shape index: {}]
  %s4 = inlined_call_operand.hbm [shape: bf16[512,512], index: 4, kind: input, shape index: {}]
  %s5 = inlined_call_operand.hbm [shape: bf16[512,512], index: 5, kind: input, shape index: {}]
  %s6 = inlined_call_operand.vmem [shape: bf16[16,512], index: 6, kind: output, shape index: {0}]
  %s7 = inlined_call_operand.vmem [shape: bf16[16,512], index: 7, kind: output, shape index: {1}]
  %s8 = inlined_call_operand.vmem [shape: bf16[16,512], index: 8, kind: output, shape index: {2}]
  %9 = xla_tuple %s6, %s7, %s8
  %s10 = sld [smem:[#allocation0]]
  $region74: #{multi_head_attention.3} parent=0
    _
  %s12 = ssub.s32 1, %s10
  %s13 = scalar_select 0, %s12, %s10
  $region1: #{multi_head_attention.3} parent=0
    #allocation2 [shape = 'u8[32768]{0}', space=vmem, size = 0x8000, scoped, tag = 'input window, operand 0, single buffered']
    #allocation3 [shape = 's32[1]{0}', space=sflag, size = 0x4, scoped, tag = 'scoped memory for multi_head_attention.3']
    #allocation4 [shape = 'u8[32768]{0}', space=vmem, size = 0x8000, scoped, tag = 'input window, operand 1, single buffered']
    #allocation5 [shape = 's32[1]{0}', space=sflag, size = 0x4, scoped, tag = 'scoped memory for multi_head_attention.3']
    #allocation6 [shape = 'u8[32768]{0}', space=vmem, size = 0x8000, scoped, tag = 'input window, operand 2, single buffered']
    #allocation7 [shape = 'u8[524288]{0}', space=vmem, size = 0x80000, scoped, tag = 'input window, operand 3, single buffered']
    #allocation8 [shape = 's32[1]{0}', space=sflag, size = 0x4, scoped, tag = 'scoped memory for multi_head_attention.3']
    #allocation9 [shape = 'u8[524288]{0}', space=vmem, size = 0x80000, scoped, tag = 'input window, operand 4, single buffered']
    #allocation10 [shape = 'u8[524288]{0}', space=vmem, size = 0x80000, scoped, tag = 'input window, operand 5, single buffered']
    #allocation11 [shape = 's32[1]{0}', space=sflag, size = 0x4, scoped, tag = 'scoped memory for multi_head_attention.3']
    %14 = vsyncpa [#allocation3], 0
    %15 = vsyncpa [#allocation5], 0
    %16 = vsyncpa [#allocation8], 0
    %17 = vsyncpa [#allocation11], 0
    // Predicated region
    $region2: #{multi_head_attention.3} parent=1 // pred_check
      _
    $region3: #{multi_head_attention.3} parent=1 // pred_check_branch
      %19 = sbr.rel (0) target = $region5
    $region4: #{multi_head_attention.3} parent=1 // pred_region
      %21 = vsyncadd [#allocation3], 0
      %s22 = sshll.u32 %s0, 4
      %s23 = int_to_ptr.hbm [resolvable:$true] %s22
      %s24 = sshll.u32 [#allocation2], 4
      %s25 = int_to_ptr.vmem [resolvable:$true] %s24
      %30 = dma.hbm_to_vmem [thread:$0]  %s23, 1024, %s25, [#allocation3], 512, 512, 32
    $region5: #{multi_head_attention.3} parent=1 // pred_fallthru
      _
    // Predicated region
    $region6: #{multi_head_attention.3} parent=1 // pred_check
      _
    $region7: #{multi_head_attention.3} parent=1 // pred_check_branch
      %32 = sbr.rel (0) target = $region9
    $region8: #{multi_head_attention.3} parent=1 // pred_region
      %34 = vsyncadd [#allocation5], 0
      %s35 = sshll.u32 %s1, 4
      %s36 = int_to_ptr.hbm [resolvable:$true] %s35
      %s37 = sshll.u32 [#allocation4], 4
      %s38 = int_to_ptr.vmem [resolvable:$true] %s37
      %43 = dma.hbm_to_vmem [thread:$0]  %s36, 1024, %s38, [#allocation5], 512, 512, 32
    $region9: #{multi_head_attention.3} parent=1 // pred_fallthru
      _
    // Predicated region
    $region10: #{multi_head_attention.3} parent=1 // pred_check
      _
    $region11: #{multi_head_attention.3} parent=1 // pred_check_branch
      %45 = sbr.rel (0) target = $region13
    $region12: #{multi_head_attention.3} parent=1 // pred_region
      %47 = vsyncadd [#allocation5], 0
      %s48 = sshll.u32 %s2, 4
      %s49 = int_to_ptr.hbm [resolvable:$true] %s48
      %s50 = sshll.u32 [#allocation6], 4
      %s51 = int_to_ptr.vmem [resolvable:$true] %s50
      %56 = dma.hbm_to_vmem [thread:$0]  %s49, 1024, %s51, [#allocation5], 512, 512, 32
    $region13: #{multi_head_attention.3} parent=1 // pred_fallthru
      _
    // Predicated region
    $region14: #{multi_head_attention.3} parent=1 // pred_check
      _
    $region15: #{multi_head_attention.3} parent=1 // pred_check_branch
      %58 = sbr.rel (0) target = $region17
    $region16: #{multi_head_attention.3} parent=1 // pred_region
      %60 = vsyncadd [#allocation8], 0
      %s61 = sshll.u32 %s3, 4
      %s62 = int_to_ptr.hbm [resolvable:$true] %s61
      %s63 = sshll.u32 [#allocation7], 4
      %s64 = int_to_ptr.vmem [resolvable:$true] %s63
      %69 = dma.hbm_to_vmem [thread:$0]  %s62, 16384, %s64, [#allocation8], 256, 256, 16
    $region17: #{multi_head_attention.3} parent=1 // pred_fallthru
      _
    // Predicated region
    $region18: #{multi_head_attention.3} parent=1 // pred_check
      _
    $region19: #{multi_head_attention.3} parent=1 // pred_check_branch
      %71 = sbr.rel (0) target = $region21
    $region20: #{multi_head_attention.3} parent=1 // pred_region
      %73 = vsyncadd [#allocation8], 0
      %s74 = sshll.u32 %s4, 4
      %s75 = int_to_ptr.hbm [resolvable:$true] %s74
      %s76 = sshll.u32 [#allocation9], 4
      %s77 = int_to_ptr.vmem [resolvable:$true] %s76
      %82 = dma.hbm_to_vmem [thread:$0]  %s75, 16384, %s77, [#allocation8], 256, 256, 16
    $region21: #{multi_head_attention.3} parent=1 // pred_fallthru
      _
    // Predicated region
    $region22: #{multi_head_attention.3} parent=1 // pred_check
      _
    $region23: #{multi_head_attention.3} parent=1 // pred_check_branch
      %84 = sbr.rel (0) target = $region25
    $region24: #{multi_head_attention.3} parent=1 // pred_region
      %86 = vsyncadd [#allocation11], 0
      %s87 = sshll.u32 %s5, 4
      %s88 = int_to_ptr.hbm [resolvable:$true] %s87
      %s89 = sshll.u32 [#allocation10], 4
      %s90 = int_to_ptr.vmem [resolvable:$true] %s89
      %95 = dma.hbm_to_vmem [thread:$0]  %s88, 16384, %s90, [#allocation11], 256, 256, 16
    $region25: #{multi_head_attention.3} parent=1 // pred_fallthru
      _
    // Predicated region
    $region26: #{multi_head_attention.3} parent=1 // pred_check
      _
    $region27: #{multi_head_attention.3} parent=1 // pred_check_branch
      %97 = sbr.rel (0) target = $region29
    $region28: #{multi_head_attention.3} parent=1 // pred_region
      %99 = dma.done [#allocation3], 1024
    $region29: #{multi_head_attention.3} parent=1 // pred_fallthru
      _
    // Predicated region
    $region30: #{multi_head_attention.3} parent=1 // pred_check
      _
    $region31: #{multi_head_attention.3} parent=1 // pred_check_branch
      %101 = sbr.rel (0) target = $region33
    $region32: #{multi_head_attention.3} parent=1 // pred_region
      %103 = dma.done [#allocation5], 1024
    $region33: #{multi_head_attention.3} parent=1 // pred_fallthru
      _
    // Predicated region
    $region34: #{multi_head_attention.3} parent=1 // pred_check
      _
    $region35: #{multi_head_attention.3} parent=1 // pred_check_branch
      %105 = sbr.rel (0) target = $region37
    $region36: #{multi_head_attention.3} parent=1 // pred_region
      %107 = dma.done [#allocation5], 1024
    $region37: #{multi_head_attention.3} parent=1 // pred_fallthru
      _
    // Predicated region
    $region38: #{multi_head_attention.3} parent=1 // pred_check
      _
    $region39: #{multi_head_attention.3} parent=1 // pred_check_branch
      %109 = sbr.rel (0) target = $region41
    $region40: #{multi_head_attention.3} parent=1 // pred_region
      %111 = dma.done [#allocation8], 16384
    $region41: #{multi_head_attention.3} parent=1 // pred_fallthru
      _
    // Predicated region
    $region42: #{multi_head_attention.3} parent=1 // pred_check
      _
    $region43: #{multi_head_attention.3} parent=1 // pred_check_branch
      %113 = sbr.rel (0) target = $region45
    $region44: #{multi_head_attention.3} parent=1 // pred_region
      %115 = dma.done [#allocation8], 16384
    $region45: #{multi_head_attention.3} parent=1 // pred_fallthru
      _
    // Predicated region
    $region46: #{multi_head_attention.3} parent=1 // pred_check
      _
    $region47: #{multi_head_attention.3} parent=1 // pred_check_branch
      %117 = sbr.rel (0) target = $region49
    $region48: #{multi_head_attention.3} parent=1 // pred_region
      %119 = dma.done [#allocation11], 16384
    $region49: #{multi_head_attention.3} parent=1 // pred_fallthru
      _
    %v120 = vld [vmem:[#allocation2] sm:$0xff]
    %v121 = vld [vmem:[#allocation2 + $0x8] sm:$0xff]
    %v122 = vld [vmem:[#allocation2 + $0x10] sm:$0xff]
    %v123 = vld [vmem:[#allocation2 + $0x18] sm:$0xff]
    %v124 = vld [vmem:[#allocation2 + $0x20] sm:$0xff]
    %v125 = vld [vmem:[#allocation2 + $0x28] sm:$0xff]
    %v126 = vld [vmem:[#allocation2 + $0x30] sm:$0xff]
    %v127 = vld [vmem:[#allocation2 + $0x38] sm:$0xff]
    %v128 = vpack.c.bf16 %v124, %v120
    %v129 = vpack.c.bf16 %v125, %v121
    %v130 = vpack.c.bf16 %v126, %v122
    %v131 = vpack.c.bf16 %v127, %v123
    %v132 = vld [vmem:[#allocation7] sm:$0xff]
    %v133 = vld [vmem:[#allocation7 + $0x8] sm:$0xff]
    %v134 = vld [vmem:[#allocation7 + $0x10] sm:$0xff]
    %v135 = vld [vmem:[#allocation7 + $0x18] sm:$0xff]
    %v136 = vld [vmem:[#allocation7 + $0x20] sm:$0xff]
    %v137 = vld [vmem:[#allocation7 + $0x28] sm:$0xff]
    %v138 = vld [vmem:[#allocation7 + $0x30] sm:$0xff]
    %v139 = vld [vmem:[#allocation7 + $0x38] sm:$0xff]
    %v140 = vld [vmem:[#allocation7 + $0x40] sm:$0xff]
    %v141 = vld [vmem:[#allocation7 + $0x48] sm:$0xff]
    %v142 = vld [vmem:[#allocation7 + $0x50] sm:$0xff]
    %v143 = vld [vmem:[#allocation7 + $0x58] sm:$0xff]
    %v144 = vld [vmem:[#allocation7 + $0x60] sm:$0xff]
    %v145 = vld [vmem:[#allocation7 + $0x68] sm:$0xff]
    %v146 = vld [vmem:[#allocation7 + $0x70] sm:$0xff]
    %v147 = vld [vmem:[#allocation7 + $0x78] sm:$0xff]
    %v148 = vld [vmem:[#allocation7 + $0x80] sm:$0xff]
    %v149 = vld [vmem:[#allocation7 + $0x88] sm:$0xff]
    %v150 = vld [vmem:[#allocation7 + $0x90] sm:$0xff]
    %v151 = vld [vmem:[#allocation7 + $0x98] sm:$0xff]
    %v152 = vld [vmem:[#allocation7 + $0xa0] sm:$0xff]
    %v153 = vld [vmem:[#allocation7 + $0xa8] sm:$0xff]
    %v154 = vld [vmem:[#allocation7 + $0xb0] sm:$0xff]
    %v155 = vld [vmem:[#allocation7 + $0xb8] sm:$0xff]
    %v156 = vld [vmem:[#allocation7 + $0xc0] sm:$0xff]
    %v157 = vld [vmem:[#allocation7 + $0xc8] sm:$0xff]
    %v158 = vld [vmem:[#allocation7 + $0xd0] sm:$0xff]
    %v159 = vld [vmem:[#allocation7 + $0xd8] sm:$0xff]
    %v160 = vld [vmem:[#allocation7 + $0xe0] sm:$0xff]
    %v161 = vld [vmem:[#allocation7 + $0xe8] sm:$0xff]
    %v162 = vld [vmem:[#allocation7 + $0xf0] sm:$0xff]
    %v163 = vld [vmem:[#allocation7 + $0xf8] sm:$0xff]
    %v164 = vld [vmem:[#allocation7 + $0x100] sm:$0xff]
    %v165 = vld [vmem:[#allocation7 + $0x108] sm:$0xff]
    %v166 = vld [vmem:[#allocation7 + $0x110] sm:$0xff]
    %v167 = vld [vmem:[#allocation7 + $0x118] sm:$0xff]
    %v168 = vld [vmem:[#allocation7 + $0x120] sm:$0xff]
    %v169 = vld [vmem:[#allocation7 + $0x128] sm:$0xff]
    %v170 = vld [vmem:[#allocation7 + $0x130] sm:$0xff]
    %v171 = vld [vmem:[#allocation7 + $0x138] sm:$0xff]
    %v172 = vld [vmem:[#allocation7 + $0x140] sm:$0xff]
    %v173 = vld [vmem:[#allocation7 + $0x148] sm:$0xff]
    %v174 = vld [vmem:[#allocation7 + $0x150] sm:$0xff]
    %v175 = vld [vmem:[#allocation7 + $0x158] sm:$0xff]
    %v176 = vld [vmem:[#allocation7 + $0x160] sm:$0xff]
    %v177 = vld [vmem:[#allocation7 + $0x168] sm:$0xff]
    %v178 = vld [vmem:[#allocation7 + $0x170] sm:$0xff]
    %v179 = vld [vmem:[#allocation7 + $0x178] sm:$0xff]
    %v180 = vld [vmem:[#allocation7 + $0x180] sm:$0xff]
    %v181 = vld [vmem:[#allocation7 + $0x188] sm:$0xff]
    %v182 = vld [vmem:[#allocation7 + $0x190] sm:$0xff]
    %v183 = vld [vmem:[#allocation7 + $0x198] sm:$0xff]
    %v184 = vld [vmem:[#allocation7 + $0x1a0] sm:$0xff]
    %v185 = vld [vmem:[#allocation7 + $0x1a8] sm:$0xff]
    %v186 = vld [vmem:[#allocation7 + $0x1b0] sm:$0xff]
    %v187 = vld [vmem:[#allocation7 + $0x1b8] sm:$0xff]
    %v188 = vld [vmem:[#allocation7 + $0x1c0] sm:$0xff]
    %v189 = vld [vmem:[#allocation7 + $0x1c8] sm:$0xff]
    %v190 = vld [vmem:[#allocation7 + $0x1d0] sm:$0xff]
    %v191 = vld [vmem:[#allocation7 + $0x1d8] sm:$0xff]
    %v192 = vld [vmem:[#allocation7 + $0x1e0] sm:$0xff]
    %v193 = vld [vmem:[#allocation7 + $0x1e8] sm:$0xff]
    %v194 = vld [vmem:[#allocation7 + $0x1f0] sm:$0xff]
    %v195 = vld [vmem:[#allocation7 + $0x1f8] sm:$0xff]
    %v196 = vld [vmem:[#allocation7 + $0x200] sm:$0xff]
    %v197 = vld [vmem:[#allocation7 + $0x208] sm:$0xff]
    %v198 = vld [vmem:[#allocation7 + $0x210] sm:$0xff]
    %v199 = vld [vmem:[#allocation7 + $0x218] sm:$0xff]
    %v200 = vld [vmem:[#allocation7 + $0x220] sm:$0xff]
    %v201 = vld [vmem:[#allocation7 + $0x228] sm:$0xff]
    %v202 = vld [vmem:[#allocation7 + $0x230] sm:$0xff]
    %v203 = vld [vmem:[#allocation7 + $0x238] sm:$0xff]
    %v204 = vld [vmem:[#allocation7 + $0x240] sm:$0xff]
    %v205 = vld [vmem:[#allocation7 + $0x248] sm:$0xff]
    %v206 = vld [vmem:[#allocation7 + $0x250] sm:$0xff]
    %v207 = vld [vmem:[#allocation7 + $0x258] sm:$0xff]
    %v208 = vld [vmem:[#allocation7 + $0x260] sm:$0xff]
    %v209 = vld [vmem:[#allocation7 + $0x268] sm:$0xff]
    %v210 = vld [vmem:[#allocation7 + $0x270] sm:$0xff]
    %v211 = vld [vmem:[#allocation7 + $0x278] sm:$0xff]
    %v212 = vld [vmem:[#allocation7 + $0x280] sm:$0xff]
    %v213 = vld [vmem:[#allocation7 + $0x288] sm:$0xff]
    %v214 = vld [vmem:[#allocation7 + $0x290] sm:$0xff]
    %v215 = vld [vmem:[#allocation7 + $0x298] sm:$0xff]
    %v216 = vld [vmem:[#allocation7 + $0x2a0] sm:$0xff]
    %v217 = vld [vmem:[#allocation7 + $0x2a8] sm:$0xff]
    %v218 = vld [vmem:[#allocation7 + $0x2b0] sm:$0xff]
    %v219 = vld [vmem:[#allocation7 + $0x2b8] sm:$0xff]
    %v220 = vld [vmem:[#allocation7 + $0x2c0] sm:$0xff]
    %v221 = vld [vmem:[#allocation7 + $0x2c8] sm:$0xff]
    %v222 = vld [vmem:[#allocation7 + $0x2d0] sm:$0xff]
    %v223 = vld [vmem:[#allocation7 + $0x2d8] sm:$0xff]
    %v224 = vld [vmem:[#allocation7 + $0x2e0] sm:$0xff]
    %v225 = vld [vmem:[#allocation7 + $0x2e8] sm:$0xff]
    %v226 = vld [vmem:[#allocation7 + $0x2f0] sm:$0xff]
    %v227 = vld [vmem:[#allocation7 + $0x2f8] sm:$0xff]
    %v228 = vld [vmem:[#allocation7 + $0x300] sm:$0xff]
    %v229 = vld [vmem:[#allocation7 + $0x308] sm:$0xff]
    %v230 = vld [vmem:[#allocation7 + $0x310] sm:$0xff]
    %v231 = vld [vmem:[#allocation7 + $0x318] sm:$0xff]
    %v232 = vld [vmem:[#allocation7 + $0x320] sm:$0xff]
    %v233 = vld [vmem:[#allocation7 + $0x328] sm:$0xff]
    %v234 = vld [vmem:[#allocation7 + $0x330] sm:$0xff]
    %v235 = vld [vmem:[#allocation7 + $0x338] sm:$0xff]
    %v236 = vld [vmem:[#allocation7 + $0x340] sm:$0xff]
    %v237 = vld [vmem:[#allocation7 + $0x348] sm:$0xff]
    %v238 = vld [vmem:[#allocation7 + $0x350] sm:$0xff]
    %v239 = vld [vmem:[#allocation7 + $0x358] sm:$0xff]
    %v240 = vld [vmem:[#allocation7 + $0x360] sm:$0xff]
    %v241 = vld [vmem:[#allocation7 + $0x368] sm:$0xff]
    %v242 = vld [vmem:[#allocation7 + $0x370] sm:$0xff]
    %v243 = vld [vmem:[#allocation7 + $0x378] sm:$0xff]
    %v244 = vld [vmem:[#allocation7 + $0x380] sm:$0xff]
    %v245 = vld [vmem:[#allocation7 + $0x388] sm:$0xff]
    %v246 = vld [vmem:[#allocation7 + $0x390] sm:$0xff]
    %v247 = vld [vmem:[#allocation7 + $0x398] sm:$0xff]
    %v248 = vld [vmem:[#allocation7 + $0x3a0] sm:$0xff]
    %v249 = vld [vmem:[#allocation7 + $0x3a8] sm:$0xff]
    %v250 = vld [vmem:[#allocation7 + $0x3b0] sm:$0xff]
    %v251 = vld [vmem:[#allocation7 + $0x3b8] sm:$0xff]
    %v252 = vld [vmem:[#allocation7 + $0x3c0] sm:$0xff]
    %v253 = vld [vmem:[#allocation7 + $0x3c8] sm:$0xff]
    %v254 = vld [vmem:[#allocation7 + $0x3d0] sm:$0xff]
    %v255 = vld [vmem:[#allocation7 + $0x3d8] sm:$0xff]
    %v256 = vld [vmem:[#allocation7 + $0x3e0] sm:$0xff]
    %v257 = vld [vmem:[#allocation7 + $0x3e8] sm:$0xff]
    %v258 = vld [vmem:[#allocation7 + $0x3f0] sm:$0xff]
    %v259 = vld [vmem:[#allocation7 + $0x3f8] sm:$0xff]
    %v388 = vunpack.c.l.b16 %v132
    %v389 = vunpack.c.h.b16 %v132
    %v390 = vunpack.c.l.b16 %v133
    %v391 = vunpack.c.h.b16 %v133
    %v392 = vunpack.c.l.b16 %v134
    %v393 = vunpack.c.h.b16 %v134
    %v394 = vunpack.c.l.b16 %v135
    %v395 = vunpack.c.h.b16 %v135
    %v396 = vunpack.c.l.b16 %v136
    %v397 = vunpack.c.h.b16 %v136
    %v398 = vunpack.c.l.b16 %v137
    %v399 = vunpack.c.h.b16 %v137
    %v400 = vunpack.c.l.b16 %v138
    %v401 = vunpack.c.h.b16 %v138
    %v402 = vunpack.c.l.b16 %v139
    %v403 = vunpack.c.h.b16 %v139
    %v404 = vunpack.c.l.b16 %v140
    %v405 = vunpack.c.h.b16 %v140
    %v406 = vunpack.c.l.b16 %v141
    %v407 = vunpack.c.h.b16 %v141
    %v408 = vunpack.c.l.b16 %v142
    %v409 = vunpack.c.h.b16 %v142
    %v410 = vunpack.c.l.b16 %v143
    %v411 = vunpack.c.h.b16 %v143
    %v412 = vunpack.c.l.b16 %v144
    %v413 = vunpack.c.h.b16 %v144
    %v414 = vunpack.c.l.b16 %v145
    %v415 = vunpack.c.h.b16 %v145
    %v416 = vunpack.c.l.b16 %v146
    %v417 = vunpack.c.h.b16 %v146
    %v418 = vunpack.c.l.b16 %v147
    %v419 = vunpack.c.h.b16 %v147
    %v420 = vunpack.c.l.b16 %v148
    %v421 = vunpack.c.h.b16 %v148
    %v422 = vunpack.c.l.b16 %v149
    %v423 = vunpack.c.h.b16 %v149
    %v424 = vunpack.c.l.b16 %v150
    %v425 = vunpack.c.h.b16 %v150
    %v426 = vunpack.c.l.b16 %v151
    %v427 = vunpack.c.h.b16 %v151
    %v428 = vunpack.c.l.b16 %v152
    %v429 = vunpack.c.h.b16 %v152
    %v430 = vunpack.c.l.b16 %v153
    %v431 = vunpack.c.h.b16 %v153
    %v432 = vunpack.c.l.b16 %v154
    %v433 = vunpack.c.h.b16 %v154
    %v434 = vunpack.c.l.b16 %v155
    %v435 = vunpack.c.h.b16 %v155
    %v436 = vunpack.c.l.b16 %v156
    %v437 = vunpack.c.h.b16 %v156
    %v438 = vunpack.c.l.b16 %v157
    %v439 = vunpack.c.h.b16 %v157
    %v440 = vunpack.c.l.b16 %v158
    %v441 = vunpack.c.h.b16 %v158
    %v442 = vunpack.c.l.b16 %v159
    %v443 = vunpack.c.h.b16 %v159
    %v444 = vunpack.c.l.b16 %v160
    %v445 = vunpack.c.h.b16 %v160
    %v446 = vunpack.c.l.b16 %v161
    %v447 = vunpack.c.h.b16 %v161
    %v448 = vunpack.c.l.b16 %v162
    %v449 = vunpack.c.h.b16 %v162
    %v450 = vunpack.c.l.b16 %v163
    %v451 = vunpack.c.h.b16 %v163
    %v452 = vunpack.c.l.b16 %v164
    %v453 = vunpack.c.h.b16 %v164
    %v454 = vunpack.c.l.b16 %v165
    %v455 = vunpack.c.h.b16 %v165
    %v456 = vunpack.c.l.b16 %v166
    %v457 = vunpack.c.h.b16 %v166
    %v458 = vunpack.c.l.b16 %v167
    %v459 = vunpack.c.h.b16 %v167
    %v460 = vunpack.c.l.b16 %v168
    %v461 = vunpack.c.h.b16 %v168
    %v462 = vunpack.c.l.b16 %v169
    %v463 = vunpack.c.h.b16 %v169
    %v464 = vunpack.c.l.b16 %v170
    %v465 = vunpack.c.h.b16 %v170
    %v466 = vunpack.c.l.b16 %v171
    %v467 = vunpack.c.h.b16 %v171
    %v468 = vunpack.c.l.b16 %v172
    %v469 = vunpack.c.h.b16 %v172
    %v470 = vunpack.c.l.b16 %v173
    %v471 = vunpack.c.h.b16 %v173
    %v472 = vunpack.c.l.b16 %v174
    %v473 = vunpack.c.h.b16 %v174
    %v474 = vunpack.c.l.b16 %v175
    %v475 = vunpack.c.h.b16 %v175
    %v476 = vunpack.c.l.b16 %v176
    %v477 = vunpack.c.h.b16 %v176
    %v478 = vunpack.c.l.b16 %v177
    %v479 = vunpack.c.h.b16 %v177
    %v480 = vunpack.c.l.b16 %v178
    %v481 = vunpack.c.h.b16 %v178
    %v482 = vunpack.c.l.b16 %v179
    %v483 = vunpack.c.h.b16 %v179
    %v484 = vunpack.c.l.b16 %v180
    %v485 = vunpack.c.h.b16 %v180
    %v486 = vunpack.c.l.b16 %v181
    %v487 = vunpack.c.h.b16 %v181
    %v488 = vunpack.c.l.b16 %v182
    %v489 = vunpack.c.h.b16 %v182
    %v490 = vunpack.c.l.b16 %v183
    %v491 = vunpack.c.h.b16 %v183
    %v492 = vunpack.c.l.b16 %v184
    %v493 = vunpack.c.h.b16 %v184
    %v494 = vunpack.c.l.b16 %v185
    %v495 = vunpack.c.h.b16 %v185
    %v496 = vunpack.c.l.b16 %v186
    %v497 = vunpack.c.h.b16 %v186
    %v498 = vunpack.c.l.b16 %v187
    %v499 = vunpack.c.h.b16 %v187
    %v500 = vunpack.c.l.b16 %v188
    %v501 = vunpack.c.h.b16 %v188
    %v502 = vunpack.c.l.b16 %v189
    %v503 = vunpack.c.h.b16 %v189
    %v504 = vunpack.c.l.b16 %v190
    %v505 = vunpack.c.h.b16 %v190
    %v506 = vunpack.c.l.b16 %v191
    %v507 = vunpack.c.h.b16 %v191
    %v508 = vunpack.c.l.b16 %v192
    %v509 = vunpack.c.h.b16 %v192
    %v510 = vunpack.c.l.b16 %v193
    %v511 = vunpack.c.h.b16 %v193
    %v512 = vunpack.c.l.b16 %v194
    %v513 = vunpack.c.h.b16 %v194
    %v514 = vunpack.c.l.b16 %v195
    %v515 = vunpack.c.h.b16 %v195
    %v516 = vunpack.c.l.b16 %v196
    %v517 = vunpack.c.h.b16 %v196
    %v518 = vunpack.c.l.b16 %v197
    %v519 = vunpack.c.h.b16 %v197
    %v520 = vunpack.c.l.b16 %v198
    %v521 = vunpack.c.h.b16 %v198
    %v522 = vunpack.c.l.b16 %v199
    %v523 = vunpack.c.h.b16 %v199
    %v524 = vunpack.c.l.b16 %v200
    %v525 = vunpack.c.h.b16 %v200
    %v526 = vunpack.c.l.b16 %v201
    %v527 = vunpack.c.h.b16 %v201
    %v528 = vunpack.c.l.b16 %v202
    %v529 = vunpack.c.h.b16 %v202
    %v530 = vunpack.c.l.b16 %v203
    %v531 = vunpack.c.h.b16 %v203
    %v532 = vunpack.c.l.b16 %v204
    %v533 = vunpack.c.h.b16 %v204
    %v534 = vunpack.c.l.b16 %v205
    %v535 = vunpack.c.h.b16 %v205
    %v536 = vunpack.c.l.b16 %v206
    %v537 = vunpack.c.h.b16 %v206
    %v538 = vunpack.c.l.b16 %v207
    %v539 = vunpack.c.h.b16 %v207
    %v540 = vunpack.c.l.b16 %v208
    %v541 = vunpack.c.h.b16 %v208
    %v542 = vunpack.c.l.b16 %v209
    %v543 = vunpack.c.h.b16 %v209
    %v544 = vunpack.c.l.b16 %v210
    %v545 = vunpack.c.h.b16 %v210
    %v546 = vunpack.c.l.b16 %v211
    %v547 = vunpack.c.h.b16 %v211
    %v548 = vunpack.c.l.b16 %v212
    %v549 = vunpack.c.h.b16 %v212
    %v550 = vunpack.c.l.b16 %v213
    %v551 = vunpack.c.h.b16 %v213
    %v552 = vunpack.c.l.b16 %v214
    %v553 = vunpack.c.h.b16 %v214
    %v554 = vunpack.c.l.b16 %v215
    %v555 = vunpack.c.h.b16 %v215
    %v556 = vunpack.c.l.b16 %v216
    %v557 = vunpack.c.h.b16 %v216
    %v558 = vunpack.c.l.b16 %v217
    %v559 = vunpack.c.h.b16 %v217
    %v560 = vunpack.c.l.b16 %v218
    %v561 = vunpack.c.h.b16 %v218
    %v562 = vunpack.c.l.b16 %v219
    %v563 = vunpack.c.h.b16 %v219
    %v564 = vunpack.c.l.b16 %v220
    %v565 = vunpack.c.h.b16 %v220
    %v566 = vunpack.c.l.b16 %v221
    %v567 = vunpack.c.h.b16 %v221
    %v568 = vunpack.c.l.b16 %v222
    %v569 = vunpack.c.h.b16 %v222
    %v570 = vunpack.c.l.b16 %v223
    %v571 = vunpack.c.h.b16 %v223
    %v572 = vunpack.c.l.b16 %v224
    %v573 = vunpack.c.h.b16 %v224
    %v574 = vunpack.c.l.b16 %v225
    %v575 = vunpack.c.h.b16 %v225
    %v576 = vunpack.c.l.b16 %v226
    %v577 = vunpack.c.h.b16 %v226
    %v578 = vunpack.c.l.b16 %v227
    %v579 = vunpack.c.h.b16 %v227
    %v580 = vunpack.c.l.b16 %v228
    %v581 = vunpack.c.h.b16 %v228
    %v582 = vunpack.c.l.b16 %v229
    %v583 = vunpack.c.h.b16 %v229
    %v584 = vunpack.c.l.b16 %v230
    %v585 = vunpack.c.h.b16 %v230
    %v586 = vunpack.c.l.b16 %v231
    %v587 = vunpack.c.h.b16 %v231
    %v588 = vunpack.c.l.b16 %v232
    %v589 = vunpack.c.h.b16 %v232
    %v590 = vunpack.c.l.b16 %v233
    %v591 = vunpack.c.h.b16 %v233
    %v592 = vunpack.c.l.b16 %v234
    %v593 = vunpack.c.h.b16 %v234
    %v594 = vunpack.c.l.b16 %v235
    %v595 = vunpack.c.h.b16 %v235
    %v596 = vunpack.c.l.b16 %v236
    %v597 = vunpack.c.h.b16 %v236
    %v598 = vunpack.c.l.b16 %v237
    %v599 = vunpack.c.h.b16 %v237
    %v600 = vunpack.c.l.b16 %v238
    %v601 = vunpack.c.h.b16 %v238
    %v602 = vunpack.c.l.b16 %v239
    %v603 = vunpack.c.h.b16 %v239
    %v604 = vunpack.c.l.b16 %v240
    %v605 = vunpack.c.h.b16 %v240
    %v606 = vunpack.c.l.b16 %v241
    %v607 = vunpack.c.h.b16 %v241
    %v608 = vunpack.c.l.b16 %v242
    %v609 = vunpack.c.h.b16 %v242
    %v610 = vunpack.c.l.b16 %v243
    %v611 = vunpack.c.h.b16 %v243
    %v612 = vunpack.c.l.b16 %v244
    %v613 = vunpack.c.h.b16 %v244
    %v614 = vunpack.c.l.b16 %v245
    %v615 = vunpack.c.h.b16 %v245
    %v616 = vunpack.c.l.b16 %v246
    %v617 = vunpack.c.h.b16 %v246
    %v618 = vunpack.c.l.b16 %v247
    %v619 = vunpack.c.h.b16 %v247
    %v620 = vunpack.c.l.b16 %v248
    %v621 = vunpack.c.h.b16 %v248
    %v622 = vunpack.c.l.b16 %v249
    %v623 = vunpack.c.h.b16 %v249
    %v624 = vunpack.c.l.b16 %v250
    %v625 = vunpack.c.h.b16 %v250
    %v626 = vunpack.c.l.b16 %v251
    %v627 = vunpack.c.h.b16 %v251
    %v628 = vunpack.c.l.b16 %v252
    %v629 = vunpack.c.h.b16 %v252
    %v630 = vunpack.c.l.b16 %v253
    %v631 = vunpack.c.h.b16 %v253
    %v632 = vunpack.c.l.b16 %v254
    %v633 = vunpack.c.h.b16 %v254
    %v634 = vunpack.c.l.b16 %v255
    %v635 = vunpack.c.h.b16 %v255
    %v636 = vunpack.c.l.b16 %v256
    %v637 = vunpack.c.h.b16 %v256
    %v638 = vunpack.c.l.b16 %v257
    %v639 = vunpack.c.h.b16 %v257
    %v640 = vunpack.c.l.b16 %v258
    %v641 = vunpack.c.h.b16 %v258
    %v642 = vunpack.c.l.b16 %v259
    %v643 = vunpack.c.h.b16 %v259
    %v644 = vpack.c.b16 %v392, %v388
    %v645 = vpack.c.b16 %v393, %v389
    %v646 = vpack.c.b16 %v394, %v390
    %v647 = vpack.c.b16 %v395, %v391
    %v648 = vpack.c.b16 %v400, %v396
    %v649 = vpack.c.b16 %v401, %v397
    %v650 = vpack.c.b16 %v402, %v398
    %v651 = vpack.c.b16 %v403, %v399
    %v652 = vpack.c.b16 %v408, %v404
    %v653 = vpack.c.b16 %v409, %v405
    %v654 = vpack.c.b16 %v410, %v406
    %v655 = vpack.c.b16 %v411, %v407
    %v656 = vpack.c.b16 %v416, %v412
    %v657 = vpack.c.b16 %v417, %v413
    %v658 = vpack.c.b16 %v418, %v414
    %v659 = vpack.c.b16 %v419, %v415
    %v660 = vpack.c.b16 %v424, %v420
    %v661 = vpack.c.b16 %v425, %v421
    %v662 = vpack.c.b16 %v426, %v422
    %v663 = vpack.c.b16 %v427, %v423
    %v664 = vpack.c.b16 %v432, %v428
    %v665 = vpack.c.b16 %v433, %v429
    %v666 = vpack.c.b16 %v434, %v430
    %v667 = vpack.c.b16 %v435, %v431
    %v668 = vpack.c.b16 %v440, %v436
    %v669 = vpack.c.b16 %v441, %v437
    %v670 = vpack.c.b16 %v442, %v438
    %v671 = vpack.c.b16 %v443, %v439
    %v672 = vpack.c.b16 %v448, %v444
    %v673 = vpack.c.b16 %v449, %v445
    %v674 = vpack.c.b16 %v450, %v446
    %v675 = vpack.c.b16 %v451, %v447
    %v676 = vpack.c.b16 %v456, %v452
    %v677 = vpack.c.b16 %v457, %v453
    %v678 = vpack.c.b16 %v458, %v454
    %v679 = vpack.c.b16 %v459, %v455
    %v680 = vpack.c.b16 %v464, %v460
    %v681 = vpack.c.b16 %v465, %v461
    %v682 = vpack.c.b16 %v466, %v462
    %v683 = vpack.c.b16 %v467, %v463
    %v684 = vpack.c.b16 %v472, %v468
    %v685 = vpack.c.b16 %v473, %v469
    %v686 = vpack.c.b16 %v474, %v470
    %v687 = vpack.c.b16 %v475, %v471
    %v688 = vpack.c.b16 %v480, %v476
    %v689 = vpack.c.b16 %v481, %v477
    %v690 = vpack.c.b16 %v482, %v478
    %v691 = vpack.c.b16 %v483, %v479
    %v692 = vpack.c.b16 %v488, %v484
    %v693 = vpack.c.b16 %v489, %v485
    %v694 = vpack.c.b16 %v490, %v486
    %v695 = vpack.c.b16 %v491, %v487
    %v696 = vpack.c.b16 %v496, %v492
    %v697 = vpack.c.b16 %v497, %v493
    %v698 = vpack.c.b16 %v498, %v494
    %v699 = vpack.c.b16 %v499, %v495
    %v700 = vpack.c.b16 %v504, %v500
    %v701 = vpack.c.b16 %v505, %v501
    %v702 = vpack.c.b16 %v506, %v502
    %v703 = vpack.c.b16 %v507, %v503
    %v704 = vpack.c.b16 %v512, %v508
    %v705 = vpack.c.b16 %v513, %v509
    %v706 = vpack.c.b16 %v514, %v510
    %v707 = vpack.c.b16 %v515, %v511
    %v708 = vpack.c.b16 %v520, %v516
    %v709 = vpack.c.b16 %v521, %v517
    %v710 = vpack.c.b16 %v522, %v518
    %v711 = vpack.c.b16 %v523, %v519
    %v712 = vpack.c.b16 %v528, %v524
    %v713 = vpack.c.b16 %v529, %v525
    %v714 = vpack.c.b16 %v530, %v526
    %v715 = vpack.c.b16 %v531, %v527
    %v716 = vpack.c.b16 %v536, %v532
    %v717 = vpack.c.b16 %v537, %v533
    %v718 = vpack.c.b16 %v538, %v534
    %v719 = vpack.c.b16 %v539, %v535
    %v720 = vpack.c.b16 %v544, %v540
    %v721 = vpack.c.b16 %v545, %v541
    %v722 = vpack.c.b16 %v546, %v542
    %v723 = vpack.c.b16 %v547, %v543
    %v724 = vpack.c.b16 %v552, %v548
    %v725 = vpack.c.b16 %v553, %v549
    %v726 = vpack.c.b16 %v554, %v550
    %v727 = vpack.c.b16 %v555, %v551
    %v728 = vpack.c.b16 %v560, %v556
    %v729 = vpack.c.b16 %v561, %v557
    %v730 = vpack.c.b16 %v562, %v558
    %v731 = vpack.c.b16 %v563, %v559
    %v732 = vpack.c.b16 %v568, %v564
    %v733 = vpack.c.b16 %v569, %v565
    %v734 = vpack.c.b16 %v570, %v566
    %v735 = vpack.c.b16 %v571, %v567
    %v736 = vpack.c.b16 %v576, %v572
    %v737 = vpack.c.b16 %v577, %v573
    %v738 = vpack.c.b16 %v578, %v574
    %v739 = vpack.c.b16 %v579, %v575
    %v740 = vpack.c.b16 %v584, %v580
    %v741 = vpack.c.b16 %v585, %v581
    %v742 = vpack.c.b16 %v586, %v582
    %v743 = vpack.c.b16 %v587, %v583
    %v744 = vpack.c.b16 %v592, %v588
    %v745 = vpack.c.b16 %v593, %v589
    %v746 = vpack.c.b16 %v594, %v590
    %v747 = vpack.c.b16 %v595, %v591
    %v748 = vpack.c.b16 %v600, %v596
    %v749 = vpack.c.b16 %v601, %v597
    %v750 = vpack.c.b16 %v602, %v598
    %v751 = vpack.c.b16 %v603, %v599
    %v752 = vpack.c.b16 %v608, %v604
    %v753 = vpack.c.b16 %v609, %v605
    %v754 = vpack.c.b16 %v610, %v606
    %v755 = vpack.c.b16 %v611, %v607
    %v756 = vpack.c.b16 %v616, %v612
    %v757 = vpack.c.b16 %v617, %v613
    %v758 = vpack.c.b16 %v618, %v614
    %v759 = vpack.c.b16 %v619, %v615
    %v760 = vpack.c.b16 %v624, %v620
    %v761 = vpack.c.b16 %v625, %v621
    %v762 = vpack.c.b16 %v626, %v622
    %v763 = vpack.c.b16 %v627, %v623
    %v764 = vpack.c.b16 %v632, %v628
    %v765 = vpack.c.b16 %v633, %v629
    %v766 = vpack.c.b16 %v634, %v630
    %v767 = vpack.c.b16 %v635, %v631
    %v768 = vpack.c.b16 %v640, %v636
    %v769 = vpack.c.b16 %v641, %v637
    %v770 = vpack.c.b16 %v642, %v638
    %v771 = vpack.c.b16 %v643, %v639
    %900 = vmatpush.bf16.msra.mxu0 %v672
    %901 = vmatpush.bf16.msra.mxu0 %v668
    %902 = vmatpush.bf16.msra.mxu0 %v664
    %903 = vmatpush.bf16.msra.mxu0 %v660
    %904 = vmatpush.bf16.msra.mxu0 %v656
    %905 = vmatpush.bf16.msra.mxu0 %v652
    %906 = vmatpush.bf16.msra.mxu0 %v648
    %907 = vmatpush.bf16.msra.mxu0 %v644
    %908 = vmatmul.bf16.gmra.mxu0 %v128
    %v909 = vpop.f32.mrf.mxu0
    %v910 = vadd.f32 0.0, %v909
    %v911 = vpop.f32.mrf.mxu0
    %v912 = vadd.f32 0.0, %v911
    %913 = vdwg.mxu0
    %914 = vmatpush.bf16.msra.mxu0 %v704
    %915 = vmatpush.bf16.msra.mxu0 %v700
    %916 = vmatpush.bf16.msra.mxu0 %v696
    %917 = vmatpush.bf16.msra.mxu0 %v692
    %918 = vmatpush.bf16.msra.mxu0 %v688
    %919 = vmatpush.bf16.msra.mxu0 %v684
    %920 = vmatpush.bf16.msra.mxu0 %v680
    %921 = vmatpush.bf16.msra.mxu0 %v676
    %922 = vmatmul.bf16.gmra.mxu0 %v129
    %v923 = vpop.f32.mrf.mxu0
    %v924 = vadd.f32 %v910, %v923
    %v925 = vpop.f32.mrf.mxu0
    %v926 = vadd.f32 %v912, %v925
    %927 = vdwg.mxu0
    %928 = vmatpush.bf16.msra.mxu0 %v736
    %929 = vmatpush.bf16.msra.mxu0 %v732
    %930 = vmatpush.bf16.msra.mxu0 %v728
    %931 = vmatpush.bf16.msra.mxu0 %v724
    %932 = vmatpush.bf16.msra.mxu0 %v720
    %933 = vmatpush.bf16.msra.mxu0 %v716
    %934 = vmatpush.bf16.msra.mxu0 %v712
    %935 = vmatpush.bf16.msra.mxu0 %v708
    %936 = vmatmul.bf16.gmra.mxu0 %v130
    %v937 = vpop.f32.mrf.mxu0
    %v938 = vadd.f32 %v924, %v937
    %v939 = vpop.f32.mrf.mxu0
    %v940 = vadd.f32 %v926, %v939
    %941 = vdwg.mxu0
    %942 = vmatpush.bf16.msra.mxu0 %v768
    %943 = vmatpush.bf16.msra.mxu0 %v764
    %944 = vmatpush.bf16.msra.mxu0 %v760
    %945 = vmatpush.bf16.msra.mxu0 %v756
    %946 = vmatpush.bf16.msra.mxu0 %v752
    %947 = vmatpush.bf16.msra.mxu0 %v748
    %948 = vmatpush.bf16.msra.mxu0 %v744
    %949 = vmatpush.bf16.msra.mxu0 %v740
    %950 = vmatmul.bf16.gmra.mxu0 %v131
    %v951 = vpop.f32.mrf.mxu0
    %v952 = vadd.f32 %v938, %v951
    %v953 = vpop.f32.mrf.mxu0
    %v954 = vadd.f32 %v940, %v953
    %955 = vdwg.mxu0
    %956 = vmatpush.bf16.msra.mxu0 %v673
    %957 = vmatpush.bf16.msra.mxu0 %v669
    %958 = vmatpush.bf16.msra.mxu0 %v665
    %959 = vmatpush.bf16.msra.mxu0 %v661
    %960 = vmatpush.bf16.msra.mxu0 %v657
    %961 = vmatpush.bf16.msra.mxu0 %v653
    %962 = vmatpush.bf16.msra.mxu0 %v649
    %963 = vmatpush.bf16.msra.mxu0 %v645
    %964 = vmatmul.bf16.gmra.mxu0 %v128
    %v965 = vpop.f32.mrf.mxu0
    %v966 = vadd.f32 0.0, %v965
    %v967 = vpop.f32.mrf.mxu0
    %v968 = vadd.f32 0.0, %v967
    %969 = vdwg.mxu0
    %970 = vmatpush.bf16.msra.mxu0 %v705
    %971 = vmatpush.bf16.msra.mxu0 %v701
    %972 = vmatpush.bf16.msra.mxu0 %v697
    %973 = vmatpush.bf16.msra.mxu0 %v693
    %974 = vmatpush.bf16.msra.mxu0 %v689
    %975 = vmatpush.bf16.msra.mxu0 %v685
    %976 = vmatpush.bf16.msra.mxu0 %v681
    %977 = vmatpush.bf16.msra.mxu0 %v677
    %978 = vmatmul.bf16.gmra.mxu0 %v129
    %v979 = vpop.f32.mrf.mxu0
    %v980 = vadd.f32 %v966, %v979
    %v981 = vpop.f32.mrf.mxu0
    %v982 = vadd.f32 %v968, %v981
    %983 = vdwg.mxu0
    %984 = vmatpush.bf16.msra.mxu0 %v737
    %985 = vmatpush.bf16.msra.mxu0 %v733
    %986 = vmatpush.bf16.msra.mxu0 %v729
    %987 = vmatpush.bf16.msra.mxu0 %v725
    %988 = vmatpush.bf16.msra.mxu0 %v721
    %989 = vmatpush.bf16.msra.mxu0 %v717
    %990 = vmatpush.bf16.msra.mxu0 %v713
    %991 = vmatpush.bf16.msra.mxu0 %v709
    %992 = vmatmul.bf16.gmra.mxu0 %v130
    %v993 = vpop.f32.mrf.mxu0
    %v994 = vadd.f32 %v980, %v993
    %v995 = vpop.f32.mrf.mxu0
    %v996 = vadd.f32 %v982, %v995
    %997 = vdwg.mxu0
    %998 = vmatpush.bf16.msra.mxu0 %v769
    %999 = vmatpush.bf16.msra.mxu0 %v765
    %1000 = vmatpush.bf16.msra.mxu0 %v761
    %1001 = vmatpush.bf16.msra.mxu0 %v757
    %1002 = vmatpush.bf16.msra.mxu0 %v753
    %1003 = vmatpush.bf16.msra.mxu0 %v749
    %1004 = vmatpush.bf16.msra.mxu0 %v745
    %1005 = vmatpush.bf16.msra.mxu0 %v741
    %1006 = vmatmul.bf16.gmra.mxu0 %v131
    %v1007 = vpop.f32.mrf.mxu0
    %v1008 = vadd.f32 %v994, %v1007
    %v1009 = vpop.f32.mrf.mxu0
    %v1010 = vadd.f32 %v996, %v1009
    %1011 = vdwg.mxu0
    %1012 = vmatpush.bf16.msra.mxu0 %v674
    %1013 = vmatpush.bf16.msra.mxu0 %v670
    %1014 = vmatpush.bf16.msra.mxu0 %v666
    %1015 = vmatpush.bf16.msra.mxu0 %v662
    %1016 = vmatpush.bf16.msra.mxu0 %v658
    %1017 = vmatpush.bf16.msra.mxu0 %v654
    %1018 = vmatpush.bf16.msra.mxu0 %v650
    %1019 = vmatpush.bf16.msra.mxu0 %v646
    %1020 = vmatmul.bf16.gmra.mxu0 %v128
    %v1021 = vpop.f32.mrf.mxu0
    %v1022 = vadd.f32 0.0, %v1021
    %v1023 = vpop.f32.mrf.mxu0
    %v1024 = vadd.f32 0.0, %v1023
    %1025 = vdwg.mxu0
    %1026 = vmatpush.bf16.msra.mxu0 %v706
    %1027 = vmatpush.bf16.msra.mxu0 %v702
    %1028 = vmatpush.bf16.msra.mxu0 %v698
    %1029 = vmatpush.bf16.msra.mxu0 %v694
    %1030 = vmatpush.bf16.msra.mxu0 %v690
    %1031 = vmatpush.bf16.msra.mxu0 %v686
    %1032 = vmatpush.bf16.msra.mxu0 %v682
    %1033 = vmatpush.bf16.msra.mxu0 %v678
    %1034 = vmatmul.bf16.gmra.mxu0 %v129
    %v1035 = vpop.f32.mrf.mxu0
    %v1036 = vadd.f32 %v1022, %v1035
    %v1037 = vpop.f32.mrf.mxu0
    %v1038 = vadd.f32 %v1024, %v1037
    %1039 = vdwg.mxu0
    %1040 = vmatpush.bf16.msra.mxu0 %v738
    %1041 = vmatpush.bf16.msra.mxu0 %v734
    %1042 = vmatpush.bf16.msra.mxu0 %v730
    %1043 = vmatpush.bf16.msra.mxu0 %v726
    %1044 = vmatpush.bf16.msra.mxu0 %v722
    %1045 = vmatpush.bf16.msra.mxu0 %v718
    %1046 = vmatpush.bf16.msra.mxu0 %v714
    %1047 = vmatpush.bf16.msra.mxu0 %v710
    %1048 = vmatmul.bf16.gmra.mxu0 %v130
    %v1049 = vpop.f32.mrf.mxu0
    %v1050 = vadd.f32 %v1036, %v1049
    %v1051 = vpop.f32.mrf.mxu0
    %v1052 = vadd.f32 %v1038, %v1051
    %1053 = vdwg.mxu0
    %1054 = vmatpush.bf16.msra.mxu0 %v770
    %1055 = vmatpush.bf16.msra.mxu0 %v766
    %1056 = vmatpush.bf16.msra.mxu0 %v762
    %1057 = vmatpush.bf16.msra.mxu0 %v758
    %1058 = vmatpush.bf16.msra.mxu0 %v754
    %1059 = vmatpush.bf16.msra.mxu0 %v750
    %1060 = vmatpush.bf16.msra.mxu0 %v746
    %1061 = vmatpush.bf16.msra.mxu0 %v742
    %1062 = vmatmul.bf16.gmra.mxu0 %v131
    %v1063 = vpop.f32.mrf.mxu0
    %v1064 = vadd.f32 %v1050, %v1063
    %v1065 = vpop.f32.mrf.mxu0
    %v1066 = vadd.f32 %v1052, %v1065
    %1067 = vdwg.mxu0
    %1068 = vmatpush.bf16.msra.mxu0 %v675
    %1069 = vmatpush.bf16.msra.mxu0 %v671
    %1070 = vmatpush.bf16.msra.mxu0 %v667
    %1071 = vmatpush.bf16.msra.mxu0 %v663
    %1072 = vmatpush.bf16.msra.mxu0 %v659
    %1073 = vmatpush.bf16.msra.mxu0 %v655
    %1074 = vmatpush.bf16.msra.mxu0 %v651
    %1075 = vmatpush.bf16.msra.mxu0 %v647
    %1076 = vmatmul.bf16.gmra.mxu0 %v128
    %v1077 = vpop.f32.mrf.mxu0
    %v1078 = vadd.f32 0.0, %v1077
    %v1079 = vpop.f32.mrf.mxu0
    %v1080 = vadd.f32 0.0, %v1079
    %1081 = vdwg.mxu0
    %1082 = vmatpush.bf16.msra.mxu0 %v707
    %1083 = vmatpush.bf16.msra.mxu0 %v703
    %1084 = vmatpush.bf16.msra.mxu0 %v699
    %1085 = vmatpush.bf16.msra.mxu0 %v695
    %1086 = vmatpush.bf16.msra.mxu0 %v691
    %1087 = vmatpush.bf16.msra.mxu0 %v687
    %1088 = vmatpush.bf16.msra.mxu0 %v683
    %1089 = vmatpush.bf16.msra.mxu0 %v679
    %1090 = vmatmul.bf16.gmra.mxu0 %v129
    %v1091 = vpop.f32.mrf.mxu0
    %v1092 = vadd.f32 %v1078, %v1091
    %v1093 = vpop.f32.mrf.mxu0
    %v1094 = vadd.f32 %v1080, %v1093
    %1095 = vdwg.mxu0
    %1096 = vmatpush.bf16.msra.mxu0 %v739
    %1097 = vmatpush.bf16.msra.mxu0 %v735
    %1098 = vmatpush.bf16.msra.mxu0 %v731
    %1099 = vmatpush.bf16.msra.mxu0 %v727
    %1100 = vmatpush.bf16.msra.mxu0 %v723
    %1101 = vmatpush.bf16.msra.mxu0 %v719
    %1102 = vmatpush.bf16.msra.mxu0 %v715
    %1103 = vmatpush.bf16.msra.mxu0 %v711
    %1104 = vmatmul.bf16.gmra.mxu0 %v130
    %v1105 = vpop.f32.mrf.mxu0
    %v1106 = vadd.f32 %v1092, %v1105
    %v1107 = vpop.f32.mrf.mxu0
    %v1108 = vadd.f32 %v1094, %v1107
    %1109 = vdwg.mxu0
    %1110 = vmatpush.bf16.msra.mxu0 %v771
    %1111 = vmatpush.bf16.msra.mxu0 %v767
    %1112 = vmatpush.bf16.msra.mxu0 %v763
    %1113 = vmatpush.bf16.msra.mxu0 %v759
    %1114 = vmatpush.bf16.msra.mxu0 %v755
    %1115 = vmatpush.bf16.msra.mxu0 %v751
    %1116 = vmatpush.bf16.msra.mxu0 %v747
    %1117 = vmatpush.bf16.msra.mxu0 %v743
    %1118 = vmatmul.bf16.gmra.mxu0 %v131
    %v1119 = vpop.f32.mrf.mxu0
    %v1120 = vadd.f32 %v1106, %v1119
    %v1121 = vpop.f32.mrf.mxu0
    %v1122 = vadd.f32 %v1108, %v1121
    %1123 = vdwg.mxu0
    %v1124 = vpack.c.bf16 %v1008, %v952
    %v1125 = vpack.c.bf16 %v1120, %v1064
    %v1126 = vpack.c.bf16 %v1010, %v954
    %v1127 = vpack.c.bf16 %v1122, %v1066
    %1128 = vst [vmem:[%s6] sm:$0xff] %v1124
    %1129 = vst [vmem:[%s6 + $0x8] sm:$0xff] %v1125
    %1130 = vst [vmem:[%s6 + $0x10] sm:$0xff] %v1126
    %1131 = vst [vmem:[%s6 + $0x18] sm:$0xff] %v1127
    %v1132 = vld [vmem:[#allocation4] sm:$0xff]
    %v1133 = vld [vmem:[#allocation4 + $0x8] sm:$0xff]
    %v1134 = vld [vmem:[#allocation4 + $0x10] sm:$0xff]
    %v1135 = vld [vmem:[#allocation4 + $0x18] sm:$0xff]
    %v1136 = vld [vmem:[#allocation4 + $0x20] sm:$0xff]
    %v1137 = vld [vmem:[#allocation4 + $0x28] sm:$0xff]
    %v1138 = vld [vmem:[#allocation4 + $0x30] sm:$0xff]
    %v1139 = vld [vmem:[#allocation4 + $0x38] sm:$0xff]
    %v1140 = vpack.c.bf16 %v1136, %v1132
    %v1141 = vpack.c.bf16 %v1137, %v1133
    %v1142 = vpack.c.bf16 %v1138, %v1134
    %v1143 = vpack.c.bf16 %v1139, %v1135
    %v1144 = vld [vmem:[#allocation9] sm:$0xff]
    %v1145 = vld [vmem:[#allocation9 + $0x8] sm:$0xff]
    %v1146 = vld [vmem:[#allocation9 + $0x10] sm:$0xff]
    %v1147 = vld [vmem:[#allocation9 + $0x18] sm:$0xff]
    %v1148 = vld [vmem:[#allocation9 + $0x20] sm:$0xff]
    %v1149 = vld [vmem:[#allocation9 + $0x28] sm:$0xff]
    %v1150 = vld [vmem:[#allocation9 + $0x30] sm:$0xff]
    %v1151 = vld [vmem:[#allocation9 + $0x38] sm:$0xff]
    %v1152 = vld [vmem:[#allocation9 + $0x40] sm:$0xff]
    %v1153 = vld [vmem:[#allocation9 + $0x48] sm:$0xff]
    %v1154 = vld [vmem:[#allocation9 + $0x50] sm:$0xff]
    %v1155 = vld [vmem:[#allocation9 + $0x58] sm:$0xff]
    %v1156 = vld [vmem:[#allocation9 + $0x60] sm:$0xff]
    %v1157 = vld [vmem:[#allocation9 + $0x68] sm:$0xff]
    %v1158 = vld [vmem:[#allocation9 + $0x70] sm:$0xff]
    %v1159 = vld [vmem:[#allocation9 + $0x78] sm:$0xff]
    %v1160 = vld [vmem:[#allocation9 + $0x80] sm:$0xff]
    %v1161 = vld [vmem:[#allocation9 + $0x88] sm:$0xff]
    %v1162 = vld [vmem:[#allocation9 + $0x90] sm:$0xff]
    %v1163 = vld [vmem:[#allocation9 + $0x98] sm:$0xff]
    %v1164 = vld [vmem:[#allocation9 + $0xa0] sm:$0xff]
    %v1165 = vld [vmem:[#allocation9 + $0xa8] sm:$0xff]
    %v1166 = vld [vmem:[#allocation9 + $0xb0] sm:$0xff]
    %v1167 = vld [vmem:[#allocation9 + $0xb8] sm:$0xff]
    %v1168 = vld [vmem:[#allocation9 + $0xc0] sm:$0xff]
    %v1169 = vld [vmem:[#allocation9 + $0xc8] sm:$0xff]
    %v1170 = vld [vmem:[#allocation9 + $0xd0] sm:$0xff]
    %v1171 = vld [vmem:[#allocation9 + $0xd8] sm:$0xff]
    %v1172 = vld [vmem:[#allocation9 + $0xe0] sm:$0xff]
    %v1173 = vld [vmem:[#allocation9 + $0xe8] sm:$0xff]
    %v1174 = vld [vmem:[#allocation9 + $0xf0] sm:$0xff]
    %v1175 = vld [vmem:[#allocation9 + $0xf8] sm:$0xff]
    %v1176 = vld [vmem:[#allocation9 + $0x100] sm:$0xff]
    %v1177 = vld [vmem:[#allocation9 + $0x108] sm:$0xff]
    %v1178 = vld [vmem:[#allocation9 + $0x110] sm:$0xff]
    %v1179 = vld [vmem:[#allocation9 + $0x118] sm:$0xff]
    %v1180 = vld [vmem:[#allocation9 + $0x120] sm:$0xff]
    %v1181 = vld [vmem:[#allocation9 + $0x128] sm:$0xff]
    %v1182 = vld [vmem:[#allocation9 + $0x130] sm:$0xff]
    %v1183 = vld [vmem:[#allocation9 + $0x138] sm:$0xff]
    %v1184 = vld [vmem:[#allocation9 + $0x140] sm:$0xff]
    %v1185 = vld [vmem:[#allocation9 + $0x148] sm:$0xff]
    %v1186 = vld [vmem:[#allocation9 + $0x150] sm:$0xff]
    %v1187 = vld [vmem:[#allocation9 + $0x158] sm:$0xff]
    %v1188 = vld [vmem:[#allocation9 + $0x160] sm:$0xff]
    %v1189 = vld [vmem:[#allocation9 + $0x168] sm:$0xff]
    %v1190 = vld [vmem:[#allocation9 + $0x170] sm:$0xff]
    %v1191 = vld [vmem:[#allocation9 + $0x178] sm:$0xff]
    %v1192 = vld [vmem:[#allocation9 + $0x180] sm:$0xff]
    %v1193 = vld [vmem:[#allocation9 + $0x188] sm:$0xff]
    %v1194 = vld [vmem:[#allocation9 + $0x190] sm:$0xff]
    %v1195 = vld [vmem:[#allocation9 + $0x198] sm:$0xff]
    %v1196 = vld [vmem:[#allocation9 + $0x1a0] sm:$0xff]
    %v1197 = vld [vmem:[#allocation9 + $0x1a8] sm:$0xff]
    %v1198 = vld [vmem:[#allocation9 + $0x1b0] sm:$0xff]
    %v1199 = vld [vmem:[#allocation9 + $0x1b8] sm:$0xff]
    %v1200 = vld [vmem:[#allocation9 + $0x1c0] sm:$0xff]
    %v1201 = vld [vmem:[#allocation9 + $0x1c8] sm:$0xff]
    %v1202 = vld [vmem:[#allocation9 + $0x1d0] sm:$0xff]
    %v1203 = vld [vmem:[#allocation9 + $0x1d8] sm:$0xff]
    %v1204 = vld [vmem:[#allocation9 + $0x1e0] sm:$0xff]
    %v1205 = vld [vmem:[#allocation9 + $0x1e8] sm:$0xff]
    %v1206 = vld [vmem:[#allocation9 + $0x1f0] sm:$0xff]
    %v1207 = vld [vmem:[#allocation9 + $0x1f8] sm:$0xff]
    %v1208 = vld [vmem:[#allocation9 + $0x200] sm:$0xff]
    %v1209 = vld [vmem:[#allocation9 + $0x208] sm:$0xff]
    %v1210 = vld [vmem:[#allocation9 + $0x210] sm:$0xff]
    %v1211 = vld [vmem:[#allocation9 + $0x218] sm:$0xff]
    %v1212 = vld [vmem:[#allocation9 + $0x220] sm:$0xff]
    %v1213 = vld [vmem:[#allocation9 + $0x228] sm:$0xff]
    %v1214 = vld [vmem:[#allocation9 + $0x230] sm:$0xff]
    %v1215 = vld [vmem:[#allocation9 + $0x238] sm:$0xff]
    %v1216 = vld [vmem:[#allocation9 + $0x240] sm:$0xff]
    %v1217 = vld [vmem:[#allocation9 + $0x248] sm:$0xff]
    %v1218 = vld [vmem:[#allocation9 + $0x250] sm:$0xff]
    %v1219 = vld [vmem:[#allocation9 + $0x258] sm:$0xff]
    %v1220 = vld [vmem:[#allocation9 + $0x260] sm:$0xff]
    %v1221 = vld [vmem:[#allocation9 + $0x268] sm:$0xff]
    %v1222 = vld [vmem:[#allocation9 + $0x270] sm:$0xff]
    %v1223 = vld [vmem:[#allocation9 + $0x278] sm:$0xff]
    %v1224 = vld [vmem:[#allocation9 + $0x280] sm:$0xff]
    %v1225 = vld [vmem:[#allocation9 + $0x288] sm:$0xff]
    %v1226 = vld [vmem:[#allocation9 + $0x290] sm:$0xff]
    %v1227 = vld [vmem:[#allocation9 + $0x298] sm:$0xff]
    %v1228 = vld [vmem:[#allocation9 + $0x2a0] sm:$0xff]
    %v1229 = vld [vmem:[#allocation9 + $0x2a8] sm:$0xff]
    %v1230 = vld [vmem:[#allocation9 + $0x2b0] sm:$0xff]
    %v1231 = vld [vmem:[#allocation9 + $0x2b8] sm:$0xff]
    %v1232 = vld [vmem:[#allocation9 + $0x2c0] sm:$0xff]
    %v1233 = vld [vmem:[#allocation9 + $0x2c8] sm:$0xff]
    %v1234 = vld [vmem:[#allocation9 + $0x2d0] sm:$0xff]
    %v1235 = vld [vmem:[#allocation9 + $0x2d8] sm:$0xff]
    %v1236 = vld [vmem:[#allocation9 + $0x2e0] sm:$0xff]
    %v1237 = vld [vmem:[#allocation9 + $0x2e8] sm:$0xff]
    %v1238 = vld [vmem:[#allocation9 + $0x2f0] sm:$0xff]
    %v1239 = vld [vmem:[#allocation9 + $0x2f8] sm:$0xff]
    %v1240 = vld [vmem:[#allocation9 + $0x300] sm:$0xff]
    %v1241 = vld [vmem:[#allocation9 + $0x308] sm:$0xff]
    %v1242 = vld [vmem:[#allocation9 + $0x310] sm:$0xff]
    %v1243 = vld [vmem:[#allocation9 + $0x318] sm:$0xff]
    %v1244 = vld [vmem:[#allocation9 + $0x320] sm:$0xff]
    %v1245 = vld [vmem:[#allocation9 + $0x328] sm:$0xff]
    %v1246 = vld [vmem:[#allocation9 + $0x330] sm:$0xff]
    %v1247 = vld [vmem:[#allocation9 + $0x338] sm:$0xff]
    %v1248 = vld [vmem:[#allocation9 + $0x340] sm:$0xff]
    %v1249 = vld [vmem:[#allocation9 + $0x348] sm:$0xff]
    %v1250 = vld [vmem:[#allocation9 + $0x350] sm:$0xff]
    %v1251 = vld [vmem:[#allocation9 + $0x358] sm:$0xff]
    %v1252 = vld [vmem:[#allocation9 + $0x360] sm:$0xff]
    %v1253 = vld [vmem:[#allocation9 + $0x368] sm:$0xff]
    %v1254 = vld [vmem:[#allocation9 + $0x370] sm:$0xff]
    %v1255 = vld [vmem:[#allocation9 + $0x378] sm:$0xff]
    %v1256 = vld [vmem:[#allocation9 + $0x380] sm:$0xff]
    %v1257 = vld [vmem:[#allocation9 + $0x388] sm:$0xff]
    %v1258 = vld [vmem:[#allocation9 + $0x390] sm:$0xff]
    %v1259 = vld [vmem:[#allocation9 + $0x398] sm:$0xff]
    %v1260 = vld [vmem:[#allocation9 + $0x3a0] sm:$0xff]
    %v1261 = vld [vmem:[#allocation9 + $0x3a8] sm:$0xff]
    %v1262 = vld [vmem:[#allocation9 + $0x3b0] sm:$0xff]
    %v1263 = vld [vmem:[#allocation9 + $0x3b8] sm:$0xff]
    %v1264 = vld [vmem:[#allocation9 + $0x3c0] sm:$0xff]
    %v1265 = vld [vmem:[#allocation9 + $0x3c8] sm:$0xff]
    %v1266 = vld [vmem:[#allocation9 + $0x3d0] sm:$0xff]
    %v1267 = vld [vmem:[#allocation9 + $0x3d8] sm:$0xff]
    %v1268 = vld [vmem:[#allocation9 + $0x3e0] sm:$0xff]
    %v1269 = vld [vmem:[#allocation9 + $0x3e8] sm:$0xff]
    %v1270 = vld [vmem:[#allocation9 + $0x3f0] sm:$0xff]
    %v1271 = vld [vmem:[#allocation9 + $0x3f8] sm:$0xff]
    %v1400 = vunpack.c.l.b16 %v1144
    %v1401 = vunpack.c.h.b16 %v1144
    %v1402 = vunpack.c.l.b16 %v1145
    %v1403 = vunpack.c.h.b16 %v1145
    %v1404 = vunpack.c.l.b16 %v1146
    %v1405 = vunpack.c.h.b16 %v1146
    %v1406 = vunpack.c.l.b16 %v1147
    %v1407 = vunpack.c.h.b16 %v1147
    %v1408 = vunpack.c.l.b16 %v1148
    %v1409 = vunpack.c.h.b16 %v1148
    %v1410 = vunpack.c.l.b16 %v1149
    %v1411 = vunpack.c.h.b16 %v1149
    %v1412 = vunpack.c.l.b16 %v1150
    %v1413 = vunpack.c.h.b16 %v1150
    %v1414 = vunpack.c.l.b16 %v1151
    %v1415 = vunpack.c.h.b16 %v1151
    %v1416 = vunpack.c.l.b16 %v1152
    %v1417 = vunpack.c.h.b16 %v1152
    %v1418 = vunpack.c.l.b16 %v1153
    %v1419 = vunpack.c.h.b16 %v1153
    %v1420 = vunpack.c.l.b16 %v1154
    %v1421 = vunpack.c.h.b16 %v1154
    %v1422 = vunpack.c.l.b16 %v1155
    %v1423 = vunpack.c.h.b16 %v1155
    %v1424 = vunpack.c.l.b16 %v1156
    %v1425 = vunpack.c.h.b16 %v1156
    %v1426 = vunpack.c.l.b16 %v1157
    %v1427 = vunpack.c.h.b16 %v1157
    %v1428 = vunpack.c.l.b16 %v1158
    %v1429 = vunpack.c.h.b16 %v1158
    %v1430 = vunpack.c.l.b16 %v1159
    %v1431 = vunpack.c.h.b16 %v1159
    %v1432 = vunpack.c.l.b16 %v1160
    %v1433 = vunpack.c.h.b16 %v1160
    %v1434 = vunpack.c.l.b16 %v1161
    %v1435 = vunpack.c.h.b16 %v1161
    %v1436 = vunpack.c.l.b16 %v1162
    %v1437 = vunpack.c.h.b16 %v1162
    %v1438 = vunpack.c.l.b16 %v1163
    %v1439 = vunpack.c.h.b16 %v1163
    %v1440 = vunpack.c.l.b16 %v1164
    %v1441 = vunpack.c.h.b16 %v1164
    %v1442 = vunpack.c.l.b16 %v1165
    %v1443 = vunpack.c.h.b16 %v1165
    %v1444 = vunpack.c.l.b16 %v1166
    %v1445 = vunpack.c.h.b16 %v1166
    %v1446 = vunpack.c.l.b16 %v1167
    %v1447 = vunpack.c.h.b16 %v1167
    %v1448 = vunpack.c.l.b16 %v1168
    %v1449 = vunpack.c.h.b16 %v1168
    %v1450 = vunpack.c.l.b16 %v1169
    %v1451 = vunpack.c.h.b16 %v1169
    %v1452 = vunpack.c.l.b16 %v1170
    %v1453 = vunpack.c.h.b16 %v1170
    %v1454 = vunpack.c.l.b16 %v1171
    %v1455 = vunpack.c.h.b16 %v1171
    %v1456 = vunpack.c.l.b16 %v1172
    %v1457 = vunpack.c.h.b16 %v1172
    %v1458 = vunpack.c.l.b16 %v1173
    %v1459 = vunpack.c.h.b16 %v1173
    %v1460 = vunpack.c.l.b16 %v1174
    %v1461 = vunpack.c.h.b16 %v1174
    %v1462 = vunpack.c.l.b16 %v1175
    %v1463 = vunpack.c.h.b16 %v1175
    %v1464 = vunpack.c.l.b16 %v1176
    %v1465 = vunpack.c.h.b16 %v1176
    %v1466 = vunpack.c.l.b16 %v1177
    %v1467 = vunpack.c.h.b16 %v1177
    %v1468 = vunpack.c.l.b16 %v1178
    %v1469 = vunpack.c.h.b16 %v1178
    %v1470 = vunpack.c.l.b16 %v1179
    %v1471 = vunpack.c.h.b16 %v1179
    %v1472 = vunpack.c.l.b16 %v1180
    %v1473 = vunpack.c.h.b16 %v1180
    %v1474 = vunpack.c.l.b16 %v1181
    %v1475 = vunpack.c.h.b16 %v1181
    %v1476 = vunpack.c.l.b16 %v1182
    %v1477 = vunpack.c.h.b16 %v1182
    %v1478 = vunpack.c.l.b16 %v1183
    %v1479 = vunpack.c.h.b16 %v1183
    %v1480 = vunpack.c.l.b16 %v1184
    %v1481 = vunpack.c.h.b16 %v1184
    %v1482 = vunpack.c.l.b16 %v1185
    %v1483 = vunpack.c.h.b16 %v1185
    %v1484 = vunpack.c.l.b16 %v1186
    %v1485 = vunpack.c.h.b16 %v1186
    %v1486 = vunpack.c.l.b16 %v1187
    %v1487 = vunpack.c.h.b16 %v1187
    %v1488 = vunpack.c.l.b16 %v1188
    %v1489 = vunpack.c.h.b16 %v1188
    %v1490 = vunpack.c.l.b16 %v1189
    %v1491 = vunpack.c.h.b16 %v1189
    %v1492 = vunpack.c.l.b16 %v1190
    %v1493 = vunpack.c.h.b16 %v1190
    %v1494 = vunpack.c.l.b16 %v1191
    %v1495 = vunpack.c.h.b16 %v1191
    %v1496 = vunpack.c.l.b16 %v1192
    %v1497 = vunpack.c.h.b16 %v1192
    %v1498 = vunpack.c.l.b16 %v1193
    %v1499 = vunpack.c.h.b16 %v1193
    %v1500 = vunpack.c.l.b16 %v1194
    %v1501 = vunpack.c.h.b16 %v1194
    %v1502 = vunpack.c.l.b16 %v1195
    %v1503 = vunpack.c.h.b16 %v1195
    %v1504 = vunpack.c.l.b16 %v1196
    %v1505 = vunpack.c.h.b16 %v1196
    %v1506 = vunpack.c.l.b16 %v1197
    %v1507 = vunpack.c.h.b16 %v1197
    %v1508 = vunpack.c.l.b16 %v1198
    %v1509 = vunpack.c.h.b16 %v1198
    %v1510 = vunpack.c.l.b16 %v1199
    %v1511 = vunpack.c.h.b16 %v1199
    %v1512 = vunpack.c.l.b16 %v1200
    %v1513 = vunpack.c.h.b16 %v1200
    %v1514 = vunpack.c.l.b16 %v1201
    %v1515 = vunpack.c.h.b16 %v1201
    %v1516 = vunpack.c.l.b16 %v1202
    %v1517 = vunpack.c.h.b16 %v1202
    %v1518 = vunpack.c.l.b16 %v1203
    %v1519 = vunpack.c.h.b16 %v1203
    %v1520 = vunpack.c.l.b16 %v1204
    %v1521 = vunpack.c.h.b16 %v1204
    %v1522 = vunpack.c.l.b16 %v1205
    %v1523 = vunpack.c.h.b16 %v1205
    %v1524 = vunpack.c.l.b16 %v1206
    %v1525 = vunpack.c.h.b16 %v1206
    %v1526 = vunpack.c.l.b16 %v1207
    %v1527 = vunpack.c.h.b16 %v1207
    %v1528 = vunpack.c.l.b16 %v1208
    %v1529 = vunpack.c.h.b16 %v1208
    %v1530 = vunpack.c.l.b16 %v1209
    %v1531 = vunpack.c.h.b16 %v1209
    %v1532 = vunpack.c.l.b16 %v1210
    %v1533 = vunpack.c.h.b16 %v1210
    %v1534 = vunpack.c.l.b16 %v1211
    %v1535 = vunpack.c.h.b16 %v1211
    %v1536 = vunpack.c.l.b16 %v1212
    %v1537 = vunpack.c.h.b16 %v1212
    %v1538 = vunpack.c.l.b16 %v1213
    %v1539 = vunpack.c.h.b16 %v1213
    %v1540 = vunpack.c.l.b16 %v1214
    %v1541 = vunpack.c.h.b16 %v1214
    %v1542 = vunpack.c.l.b16 %v1215
    %v1543 = vunpack.c.h.b16 %v1215
    %v1544 = vunpack.c.l.b16 %v1216
    %v1545 = vunpack.c.h.b16 %v1216
    %v1546 = vunpack.c.l.b16 %v1217
    %v1547 = vunpack.c.h.b16 %v1217
    %v1548 = vunpack.c.l.b16 %v1218
    %v1549 = vunpack.c.h.b16 %v1218
    %v1550 = vunpack.c.l.b16 %v1219
    %v1551 = vunpack.c.h.b16 %v1219
    %v1552 = vunpack.c.l.b16 %v1220
    %v1553 = vunpack.c.h.b16 %v1220
    %v1554 = vunpack.c.l.b16 %v1221
    %v1555 = vunpack.c.h.b16 %v1221
    %v1556 = vunpack.c.l.b16 %v1222
    %v1557 = vunpack.c.h.b16 %v1222
    %v1558 = vunpack.c.l.b16 %v1223
    %v1559 = vunpack.c.h.b16 %v1223
    %v1560 = vunpack.c.l.b16 %v1224
    %v1561 = vunpack.c.h.b16 %v1224
    %v1562 = vunpack.c.l.b16 %v1225
    %v1563 = vunpack.c.h.b16 %v1225
    %v1564 = vunpack.c.l.b16 %v1226
    %v1565 = vunpack.c.h.b16 %v1226
    %v1566 = vunpack.c.l.b16 %v1227
    %v1567 = vunpack.c.h.b16 %v1227
    %v1568 = vunpack.c.l.b16 %v1228
    %v1569 = vunpack.c.h.b16 %v1228
    %v1570 = vunpack.c.l.b16 %v1229
    %v1571 = vunpack.c.h.b16 %v1229
    %v1572 = vunpack.c.l.b16 %v1230
    %v1573 = vunpack.c.h.b16 %v1230
    %v1574 = vunpack.c.l.b16 %v1231
    %v1575 = vunpack.c.h.b16 %v1231
    %v1576 = vunpack.c.l.b16 %v1232
    %v1577 = vunpack.c.h.b16 %v1232
    %v1578 = vunpack.c.l.b16 %v1233
    %v1579 = vunpack.c.h.b16 %v1233
    %v1580 = vunpack.c.l.b16 %v1234
    %v1581 = vunpack.c.h.b16 %v1234
    %v1582 = vunpack.c.l.b16 %v1235
    %v1583 = vunpack.c.h.b16 %v1235
    %v1584 = vunpack.c.l.b16 %v1236
    %v1585 = vunpack.c.h.b16 %v1236
    %v1586 = vunpack.c.l.b16 %v1237
    %v1587 = vunpack.c.h.b16 %v1237
    %v1588 = vunpack.c.l.b16 %v1238
    %v1589 = vunpack.c.h.b16 %v1238
    %v1590 = vunpack.c.l.b16 %v1239
    %v1591 = vunpack.c.h.b16 %v1239
    %v1592 = vunpack.c.l.b16 %v1240
    %v1593 = vunpack.c.h.b16 %v1240
    %v1594 = vunpack.c.l.b16 %v1241
    %v1595 = vunpack.c.h.b16 %v1241
    %v1596 = vunpack.c.l.b16 %v1242
    %v1597 = vunpack.c.h.b16 %v1242
    %v1598 = vunpack.c.l.b16 %v1243
    %v1599 = vunpack.c.h.b16 %v1243
    %v1600 = vunpack.c.l.b16 %v1244
    %v1601 = vunpack.c.h.b16 %v1244
    %v1602 = vunpack.c.l.b16 %v1245
    %v1603 = vunpack.c.h.b16 %v1245
    %v1604 = vunpack.c.l.b16 %v1246
    %v1605 = vunpack.c.h.b16 %v1246
    %v1606 = vunpack.c.l.b16 %v1247
    %v1607 = vunpack.c.h.b16 %v1247
    %v1608 = vunpack.c.l.b16 %v1248
    %v1609 = vunpack.c.h.b16 %v1248
    %v1610 = vunpack.c.l.b16 %v1249
    %v1611 = vunpack.c.h.b16 %v1249
    %v1612 = vunpack.c.l.b16 %v1250
    %v1613 = vunpack.c.h.b16 %v1250
    %v1614 = vunpack.c.l.b16 %v1251
    %v1615 = vunpack.c.h.b16 %v1251
    %v1616 = vunpack.c.l.b16 %v1252
    %v1617 = vunpack.c.h.b16 %v1252
    %v1618 = vunpack.c.l.b16 %v1253
    %v1619 = vunpack.c.h.b16 %v1253
    %v1620 = vunpack.c.l.b16 %v1254
    %v1621 = vunpack.c.h.b16 %v1254
    %v1622 = vunpack.c.l.b16 %v1255
    %v1623 = vunpack.c.h.b16 %v1255
    %v1624 = vunpack.c.l.b16 %v1256
    %v1625 = vunpack.c.h.b16 %v1256
    %v1626 = vunpack.c.l.b16 %v1257
    %v1627 = vunpack.c.h.b16 %v1257
    %v1628 = vunpack.c.l.b16 %v1258
    %v1629 = vunpack.c.h.b16 %v1258
    %v1630 = vunpack.c.l.b16 %v1259
    %v1631 = vunpack.c.h.b16 %v1259
    %v1632 = vunpack.c.l.b16 %v1260
    %v1633 = vunpack.c.h.b16 %v1260
    %v1634 = vunpack.c.l.b16 %v1261
    %v1635 = vunpack.c.h.b16 %v1261
    %v1636 = vunpack.c.l.b16 %v1262
    %v1637 = vunpack.c.h.b16 %v1262
    %v1638 = vunpack.c.l.b16 %v1263
    %v1639 = vunpack.c.h.b16 %v1263
    %v1640 = vunpack.c.l.b16 %v1264
    %v1641 = vunpack.c.h.b16 %v1264
    %v1642 = vunpack.c.l.b16 %v1265
    %v1643 = vunpack.c.h.b16 %v1265
    %v1644 = vunpack.c.l.b16 %v1266
    %v1645 = vunpack.c.h.b16 %v1266
    %v1646 = vunpack.c.l.b16 %v1267
    %v1647 = vunpack.c.h.b16 %v1267
    %v1648 = vunpack.c.l.b16 %v1268
    %v1649 = vunpack.c.h.b16 %v1268
    %v1650 = vunpack.c.l.b16 %v1269
    %v1651 = vunpack.c.h.b16 %v1269
    %v1652 = vunpack.c.l.b16 %v1270
    %v1653 = vunpack.c.h.b16 %v1270
    %v1654 = vunpack.c.l.b16 %v1271
    %v1655 = vunpack.c.h.b16 %v1271
    %v1656 = vpack.c.b16 %v1404, %v1400
    %v1657 = vpack.c.b16 %v1405, %v1401
    %v1658 = vpack.c.b16 %v1406, %v1402
    %v1659 = vpack.c.b16 %v1407, %v1403
    %v1660 = vpack.c.b16 %v1412, %v1408
    %v1661 = vpack.c.b16 %v1413, %v1409
    %v1662 = vpack.c.b16 %v1414, %v1410
    %v1663 = vpack.c.b16 %v1415, %v1411
    %v1664 = vpack.c.b16 %v1420, %v1416
    %v1665 = vpack.c.b16 %v1421, %v1417
    %v1666 = vpack.c.b16 %v1422, %v1418
    %v1667 = vpack.c.b16 %v1423, %v1419
    %v1668 = vpack.c.b16 %v1428, %v1424
    %v1669 = vpack.c.b16 %v1429, %v1425
    %v1670 = vpack.c.b16 %v1430, %v1426
    %v1671 = vpack.c.b16 %v1431, %v1427
    %v1672 = vpack.c.b16 %v1436, %v1432
    %v1673 = vpack.c.b16 %v1437, %v1433
    %v1674 = vpack.c.b16 %v1438, %v1434
    %v1675 = vpack.c.b16 %v1439, %v1435
    %v1676 = vpack.c.b16 %v1444, %v1440
    %v1677 = vpack.c.b16 %v1445, %v1441
    %v1678 = vpack.c.b16 %v1446, %v1442
    %v1679 = vpack.c.b16 %v1447, %v1443
    %v1680 = vpack.c.b16 %v1452, %v1448
    %v1681 = vpack.c.b16 %v1453, %v1449
    %v1682 = vpack.c.b16 %v1454, %v1450
    %v1683 = vpack.c.b16 %v1455, %v1451
    %v1684 = vpack.c.b16 %v1460, %v1456
    %v1685 = vpack.c.b16 %v1461, %v1457
    %v1686 = vpack.c.b16 %v1462, %v1458
    %v1687 = vpack.c.b16 %v1463, %v1459
    %v1688 = vpack.c.b16 %v1468, %v1464
    %v1689 = vpack.c.b16 %v1469, %v1465
    %v1690 = vpack.c.b16 %v1470, %v1466
    %v1691 = vpack.c.b16 %v1471, %v1467
    %v1692 = vpack.c.b16 %v1476, %v1472
    %v1693 = vpack.c.b16 %v1477, %v1473
    %v1694 = vpack.c.b16 %v1478, %v1474
    %v1695 = vpack.c.b16 %v1479, %v1475
    %v1696 = vpack.c.b16 %v1484, %v1480
    %v1697 = vpack.c.b16 %v1485, %v1481
    %v1698 = vpack.c.b16 %v1486, %v1482
    %v1699 = vpack.c.b16 %v1487, %v1483
    %v1700 = vpack.c.b16 %v1492, %v1488
    %v1701 = vpack.c.b16 %v1493, %v1489
    %v1702 = vpack.c.b16 %v1494, %v1490
    %v1703 = vpack.c.b16 %v1495, %v1491
    %v1704 = vpack.c.b16 %v1500, %v1496
    %v1705 = vpack.c.b16 %v1501, %v1497
    %v1706 = vpack.c.b16 %v1502, %v1498
    %v1707 = vpack.c.b16 %v1503, %v1499
    %v1708 = vpack.c.b16 %v1508, %v1504
    %v1709 = vpack.c.b16 %v1509, %v1505
    %v1710 = vpack.c.b16 %v1510, %v1506
    %v1711 = vpack.c.b16 %v1511, %v1507
    %v1712 = vpack.c.b16 %v1516, %v1512
    %v1713 = vpack.c.b16 %v1517, %v1513
    %v1714 = vpack.c.b16 %v1518, %v1514
    %v1715 = vpack.c.b16 %v1519, %v1515
    %v1716 = vpack.c.b16 %v1524, %v1520
    %v1717 = vpack.c.b16 %v1525, %v1521
    %v1718 = vpack.c.b16 %v1526, %v1522
    %v1719 = vpack.c.b16 %v1527, %v1523
    %v1720 = vpack.c.b16 %v1532, %v1528
    %v1721 = vpack.c.b16 %v1533, %v1529
    %v1722 = vpack.c.b16 %v1534, %v1530
    %v1723 = vpack.c.b16 %v1535, %v1531
    %v1724 = vpack.c.b16 %v1540, %v1536
    %v1725 = vpack.c.b16 %v1541, %v1537
    %v1726 = vpack.c.b16 %v1542, %v1538
    %v1727 = vpack.c.b16 %v1543, %v1539
    %v1728 = vpack.c.b16 %v1548, %v1544
    %v1729 = vpack.c.b16 %v1549, %v1545
    %v1730 = vpack.c.b16 %v1550, %v1546
    %v1731 = vpack.c.b16 %v1551, %v1547
    %v1732 = vpack.c.b16 %v1556, %v1552
    %v1733 = vpack.c.b16 %v1557, %v1553
    %v1734 = vpack.c.b16 %v1558, %v1554
    %v1735 = vpack.c.b16 %v1559, %v1555
    %v1736 = vpack.c.b16 %v1564, %v1560
    %v1737 = vpack.c.b16 %v1565, %v1561
    %v1738 = vpack.c.b16 %v1566, %v1562
    %v1739 = vpack.c.b16 %v1567, %v1563
    %v1740 = vpack.c.b16 %v1572, %v1568
    %v1741 = vpack.c.b16 %v1573, %v1569
    %v1742 = vpack.c.b16 %v1574, %v1570
    %v1743 = vpack.c.b16 %v1575, %v1571
    %v1744 = vpack.c.b16 %v1580, %v1576
    %v1745 = vpack.c.b16 %v1581, %v1577
    %v1746 = vpack.c.b16 %v1582, %v1578
    %v1747 = vpack.c.b16 %v1583, %v1579
    %v1748 = vpack.c.b16 %v1588, %v1584
    %v1749 = vpack.c.b16 %v1589, %v1585
    %v1750 = vpack.c.b16 %v1590, %v1586
    %v1751 = vpack.c.b16 %v1591, %v1587
    %v1752 = vpack.c.b16 %v1596, %v1592
    %v1753 = vpack.c.b16 %v1597, %v1593
    %v1754 = vpack.c.b16 %v1598, %v1594
    %v1755 = vpack.c.b16 %v1599, %v1595
    %v1756 = vpack.c.b16 %v1604, %v1600
    %v1757 = vpack.c.b16 %v1605, %v1601
    %v1758 = vpack.c.b16 %v1606, %v1602
    %v1759 = vpack.c.b16 %v1607, %v1603
    %v1760 = vpack.c.b16 %v1612, %v1608
    %v1761 = vpack.c.b16 %v1613, %v1609
    %v1762 = vpack.c.b16 %v1614, %v1610
    %v1763 = vpack.c.b16 %v1615, %v1611
    %v1764 = vpack.c.b16 %v1620, %v1616
    %v1765 = vpack.c.b16 %v1621, %v1617
    %v1766 = vpack.c.b16 %v1622, %v1618
    %v1767 = vpack.c.b16 %v1623, %v1619
    %v1768 = vpack.c.b16 %v1628, %v1624
    %v1769 = vpack.c.b16 %v1629, %v1625
    %v1770 = vpack.c.b16 %v1630, %v1626
    %v1771 = vpack.c.b16 %v1631, %v1627
    %v1772 = vpack.c.b16 %v1636, %v1632
    %v1773 = vpack.c.b16 %v1637, %v1633
    %v1774 = vpack.c.b16 %v1638, %v1634
    %v1775 = vpack.c.b16 %v1639, %v1635
    %v1776 = vpack.c.b16 %v1644, %v1640
    %v1777 = vpack.c.b16 %v1645, %v1641
    %v1778 = vpack.c.b16 %v1646, %v1642
    %v1779 = vpack.c.b16 %v1647, %v1643
    %v1780 = vpack.c.b16 %v1652, %v1648
    %v1781 = vpack.c.b16 %v1653, %v1649
    %v1782 = vpack.c.b16 %v1654, %v1650
    %v1783 = vpack.c.b16 %v1655, %v1651
    %1912 = vmatpush.bf16.msra.mxu0 %v1684
    %1913 = vmatpush.bf16.msra.mxu0 %v1680
    %1914 = vmatpush.bf16.msra.mxu0 %v1676
    %1915 = vmatpush.bf16.msra.mxu0 %v1672
    %1916 = vmatpush.bf16.msra.mxu0 %v1668
    %1917 = vmatpush.bf16.msra.mxu0 %v1664
    %1918 = vmatpush.bf16.msra.mxu0 %v1660
    %1919 = vmatpush.bf16.msra.mxu0 %v1656
    %1920 = vmatmul.bf16.gmra.mxu0 %v1140
    %v1921 = vpop.f32.mrf.mxu0
    %v1922 = vadd.f32 0.0, %v1921
    %v1923 = vpop.f32.mrf.mxu0
    %v1924 = vadd.f32 0.0, %v1923
    %1925 = vdwg.mxu0
    %1926 = vmatpush.bf16.msra.mxu0 %v1716
    %1927 = vmatpush.bf16.msra.mxu0 %v1712
    %1928 = vmatpush.bf16.msra.mxu0 %v1708
    %1929 = vmatpush.bf16.msra.mxu0 %v1704
    %1930 = vmatpush.bf16.msra.mxu0 %v1700
    %1931 = vmatpush.bf16.msra.mxu0 %v1696
    %1932 = vmatpush.bf16.msra.mxu0 %v1692
    %1933 = vmatpush.bf16.msra.mxu0 %v1688
    %1934 = vmatmul.bf16.gmra.mxu0 %v1141
    %v1935 = vpop.f32.mrf.mxu0
    %v1936 = vadd.f32 %v1922, %v1935
    %v1937 = vpop.f32.mrf.mxu0
    %v1938 = vadd.f32 %v1924, %v1937
    %1939 = vdwg.mxu0
    %1940 = vmatpush.bf16.msra.mxu0 %v1748
    %1941 = vmatpush.bf16.msra.mxu0 %v1744
    %1942 = vmatpush.bf16.msra.mxu0 %v1740
    %1943 = vmatpush.bf16.msra.mxu0 %v1736
    %1944 = vmatpush.bf16.msra.mxu0 %v1732
    %1945 = vmatpush.bf16.msra.mxu0 %v1728
    %1946 = vmatpush.bf16.msra.mxu0 %v1724
    %1947 = vmatpush.bf16.msra.mxu0 %v1720
    %1948 = vmatmul.bf16.gmra.mxu0 %v1142
    %v1949 = vpop.f32.mrf.mxu0
    %v1950 = vadd.f32 %v1936, %v1949
    %v1951 = vpop.f32.mrf.mxu0
    %v1952 = vadd.f32 %v1938, %v1951
    %1953 = vdwg.mxu0
    %1954 = vmatpush.bf16.msra.mxu0 %v1780
    %1955 = vmatpush.bf16.msra.mxu0 %v1776
    %1956 = vmatpush.bf16.msra.mxu0 %v1772
    %1957 = vmatpush.bf16.msra.mxu0 %v1768
    %1958 = vmatpush.bf16.msra.mxu0 %v1764
    %1959 = vmatpush.bf16.msra.mxu0 %v1760
    %1960 = vmatpush.bf16.msra.mxu0 %v1756
    %1961 = vmatpush.bf16.msra.mxu0 %v1752
    %1962 = vmatmul.bf16.gmra.mxu0 %v1143
    %v1963 = vpop.f32.mrf.mxu0
    %v1964 = vadd.f32 %v1950, %v1963
    %v1965 = vpop.f32.mrf.mxu0
    %v1966 = vadd.f32 %v1952, %v1965
    %1967 = vdwg.mxu0
    %1968 = vmatpush.bf16.msra.mxu0 %v1685
    %1969 = vmatpush.bf16.msra.mxu0 %v1681
    %1970 = vmatpush.bf16.msra.mxu0 %v1677
    %1971 = vmatpush.bf16.msra.mxu0 %v1673
    %1972 = vmatpush.bf16.msra.mxu0 %v1669
    %1973 = vmatpush.bf16.msra.mxu0 %v1665
    %1974 = vmatpush.bf16.msra.mxu0 %v1661
    %1975 = vmatpush.bf16.msra.mxu0 %v1657
    %1976 = vmatmul.bf16.gmra.mxu0 %v1140
    %v1977 = vpop.f32.mrf.mxu0
    %v1978 = vadd.f32 0.0, %v1977
    %v1979 = vpop.f32.mrf.mxu0
    %v1980 = vadd.f32 0.0, %v1979
    %1981 = vdwg.mxu0
    %1982 = vmatpush.bf16.msra.mxu0 %v1717
    %1983 = vmatpush.bf16.msra.mxu0 %v1713
    %1984 = vmatpush.bf16.msra.mxu0 %v1709
    %1985 = vmatpush.bf16.msra.mxu0 %v1705
    %1986 = vmatpush.bf16.msra.mxu0 %v1701
    %1987 = vmatpush.bf16.msra.mxu0 %v1697
    %1988 = vmatpush.bf16.msra.mxu0 %v1693
    %1989 = vmatpush.bf16.msra.mxu0 %v1689
    %1990 = vmatmul.bf16.gmra.mxu0 %v1141
    %v1991 = vpop.f32.mrf.mxu0
    %v1992 = vadd.f32 %v1978, %v1991
    %v1993 = vpop.f32.mrf.mxu0
    %v1994 = vadd.f32 %v1980, %v1993
    %1995 = vdwg.mxu0
    %1996 = vmatpush.bf16.msra.mxu0 %v1749
    %1997 = vmatpush.bf16.msra.mxu0 %v1745
    %1998 = vmatpush.bf16.msra.mxu0 %v1741
    %1999 = vmatpush.bf16.msra.mxu0 %v1737
    %2000 = vmatpush.bf16.msra.mxu0 %v1733
    %2001 = vmatpush.bf16.msra.mxu0 %v1729
    %2002 = vmatpush.bf16.msra.mxu0 %v1725
    %2003 = vmatpush.bf16.msra.mxu0 %v1721
    %2004 = vmatmul.bf16.gmra.mxu0 %v1142
    %v2005 = vpop.f32.mrf.mxu0
    %v2006 = vadd.f32 %v1992, %v2005
    %v2007 = vpop.f32.mrf.mxu0
    %v2008 = vadd.f32 %v1994, %v2007
    %2009 = vdwg.mxu0
    %2010 = vmatpush.bf16.msra.mxu0 %v1781
    %2011 = vmatpush.bf16.msra.mxu0 %v1777
    %2012 = vmatpush.bf16.msra.mxu0 %v1773
    %2013 = vmatpush.bf16.msra.mxu0 %v1769
    %2014 = vmatpush.bf16.msra.mxu0 %v1765
    %2015 = vmatpush.bf16.msra.mxu0 %v1761
    %2016 = vmatpush.bf16.msra.mxu0 %v1757
    %2017 = vmatpush.bf16.msra.mxu0 %v1753
    %2018 = vmatmul.bf16.gmra.mxu0 %v1143
    %v2019 = vpop.f32.mrf.mxu0
    %v2020 = vadd.f32 %v2006, %v2019
    %v2021 = vpop.f32.mrf.mxu0
    %v2022 = vadd.f32 %v2008, %v2021
    %2023 = vdwg.mxu0
    %2024 = vmatpush.bf16.msra.mxu0 %v1686
    %2025 = vmatpush.bf16.msra.mxu0 %v1682
    %2026 = vmatpush.bf16.msra.mxu0 %v1678
    %2027 = vmatpush.bf16.msra.mxu0 %v1674
    %2028 = vmatpush.bf16.msra.mxu0 %v1670
    %2029 = vmatpush.bf16.msra.mxu0 %v1666
    %2030 = vmatpush.bf16.msra.mxu0 %v1662
    %2031 = vmatpush.bf16.msra.mxu0 %v1658
    %2032 = vmatmul.bf16.gmra.mxu0 %v1140
    %v2033 = vpop.f32.mrf.mxu0
    %v2034 = vadd.f32 0.0, %v2033
    %v2035 = vpop.f32.mrf.mxu0
    %v2036 = vadd.f32 0.0, %v2035
    %2037 = vdwg.mxu0
    %2038 = vmatpush.bf16.msra.mxu0 %v1718
    %2039 = vmatpush.bf16.msra.mxu0 %v1714
    %2040 = vmatpush.bf16.msra.mxu0 %v1710
    %2041 = vmatpush.bf16.msra.mxu0 %v1706
    %2042 = vmatpush.bf16.msra.mxu0 %v1702
    %2043 = vmatpush.bf16.msra.mxu0 %v1698
    %2044 = vmatpush.bf16.msra.mxu0 %v1694
    %2045 = vmatpush.bf16.msra.mxu0 %v1690
    %2046 = vmatmul.bf16.gmra.mxu0 %v1141
    %v2047 = vpop.f32.mrf.mxu0
    %v2048 = vadd.f32 %v2034, %v2047
    %v2049 = vpop.f32.mrf.mxu0
    %v2050 = vadd.f32 %v2036, %v2049
    %2051 = vdwg.mxu0
    %2052 = vmatpush.bf16.msra.mxu0 %v1750
    %2053 = vmatpush.bf16.msra.mxu0 %v1746
    %2054 = vmatpush.bf16.msra.mxu0 %v1742
    %2055 = vmatpush.bf16.msra.mxu0 %v1738
    %2056 = vmatpush.bf16.msra.mxu0 %v1734
    %2057 = vmatpush.bf16.msra.mxu0 %v1730
    %2058 = vmatpush.bf16.msra.mxu0 %v1726
    %2059 = vmatpush.bf16.msra.mxu0 %v1722
    %2060 = vmatmul.bf16.gmra.mxu0 %v1142
    %v2061 = vpop.f32.mrf.mxu0
    %v2062 = vadd.f32 %v2048, %v2061
    %v2063 = vpop.f32.mrf.mxu0
    %v2064 = vadd.f32 %v2050, %v2063
    %2065 = vdwg.mxu0
    %2066 = vmatpush.bf16.msra.mxu0 %v1782
    %2067 = vmatpush.bf16.msra.mxu0 %v1778
    %2068 = vmatpush.bf16.msra.mxu0 %v1774
    %2069 = vmatpush.bf16.msra.mxu0 %v1770
    %2070 = vmatpush.bf16.msra.mxu0 %v1766
    %2071 = vmatpush.bf16.msra.mxu0 %v1762
    %2072 = vmatpush.bf16.msra.mxu0 %v1758
    %2073 = vmatpush.bf16.msra.mxu0 %v1754
    %2074 = vmatmul.bf16.gmra.mxu0 %v1143
    %v2075 = vpop.f32.mrf.mxu0
    %v2076 = vadd.f32 %v2062, %v2075
    %v2077 = vpop.f32.mrf.mxu0
    %v2078 = vadd.f32 %v2064, %v2077
    %2079 = vdwg.mxu0
    %2080 = vmatpush.bf16.msra.mxu0 %v1687
    %2081 = vmatpush.bf16.msra.mxu0 %v1683
    %2082 = vmatpush.bf16.msra.mxu0 %v1679
    %2083 = vmatpush.bf16.msra.mxu0 %v1675
    %2084 = vmatpush.bf16.msra.mxu0 %v1671
    %2085 = vmatpush.bf16.msra.mxu0 %v1667
    %2086 = vmatpush.bf16.msra.mxu0 %v1663
    %2087 = vmatpush.bf16.msra.mxu0 %v1659
    %2088 = vmatmul.bf16.gmra.mxu0 %v1140
    %v2089 = vpop.f32.mrf.mxu0
    %v2090 = vadd.f32 0.0, %v2089
    %v2091 = vpop.f32.mrf.mxu0
    %v2092 = vadd.f32 0.0, %v2091
    %2093 = vdwg.mxu0
    %2094 = vmatpush.bf16.msra.mxu0 %v1719
    %2095 = vmatpush.bf16.msra.mxu0 %v1715
    %2096 = vmatpush.bf16.msra.mxu0 %v1711
    %2097 = vmatpush.bf16.msra.mxu0 %v1707
    %2098 = vmatpush.bf16.msra.mxu0 %v1703
    %2099 = vmatpush.bf16.msra.mxu0 %v1699
    %2100 = vmatpush.bf16.msra.mxu0 %v1695
    %2101 = vmatpush.bf16.msra.mxu0 %v1691
    %2102 = vmatmul.bf16.gmra.mxu0 %v1141
    %v2103 = vpop.f32.mrf.mxu0
    %v2104 = vadd.f32 %v2090, %v2103
    %v2105 = vpop.f32.mrf.mxu0
    %v2106 = vadd.f32 %v2092, %v2105
    %2107 = vdwg.mxu0
    %2108 = vmatpush.bf16.msra.mxu0 %v1751
    %2109 = vmatpush.bf16.msra.mxu0 %v1747
    %2110 = vmatpush.bf16.msra.mxu0 %v1743
    %2111 = vmatpush.bf16.msra.mxu0 %v1739
    %2112 = vmatpush.bf16.msra.mxu0 %v1735
    %2113 = vmatpush.bf16.msra.mxu0 %v1731
    %2114 = vmatpush.bf16.msra.mxu0 %v1727
    %2115 = vmatpush.bf16.msra.mxu0 %v1723
    %2116 = vmatmul.bf16.gmra.mxu0 %v1142
    %v2117 = vpop.f32.mrf.mxu0
    %v2118 = vadd.f32 %v2104, %v2117
    %v2119 = vpop.f32.mrf.mxu0
    %v2120 = vadd.f32 %v2106, %v2119
    %2121 = vdwg.mxu0
    %2122 = vmatpush.bf16.msra.mxu0 %v1783
    %2123 = vmatpush.bf16.msra.mxu0 %v1779
    %2124 = vmatpush.bf16.msra.mxu0 %v1775
    %2125 = vmatpush.bf16.msra.mxu0 %v1771
    %2126 = vmatpush.bf16.msra.mxu0 %v1767
    %2127 = vmatpush.bf16.msra.mxu0 %v1763
    %2128 = vmatpush.bf16.msra.mxu0 %v1759
    %2129 = vmatpush.bf16.msra.mxu0 %v1755
    %2130 = vmatmul.bf16.gmra.mxu0 %v1143
    %v2131 = vpop.f32.mrf.mxu0
    %v2132 = vadd.f32 %v2118, %v2131
    %v2133 = vpop.f32.mrf.mxu0
    %v2134 = vadd.f32 %v2120, %v2133
    %2135 = vdwg.mxu0
    %v2136 = vpack.c.bf16 %v2020, %v1964
    %v2137 = vpack.c.bf16 %v2132, %v2076
    %v2138 = vpack.c.bf16 %v2022, %v1966
    %v2139 = vpack.c.bf16 %v2134, %v2078
    %2140 = vst [vmem:[%s7] sm:$0xff] %v2136
    %2141 = vst [vmem:[%s7 + $0x8] sm:$0xff] %v2137
    %2142 = vst [vmem:[%s7 + $0x10] sm:$0xff] %v2138
    %2143 = vst [vmem:[%s7 + $0x18] sm:$0xff] %v2139
    %v2144 = vld [vmem:[#allocation6] sm:$0xff]
    %v2145 = vld [vmem:[#allocation6 + $0x8] sm:$0xff]
    %v2146 = vld [vmem:[#allocation6 + $0x10] sm:$0xff]
    %v2147 = vld [vmem:[#allocation6 + $0x18] sm:$0xff]
    %v2148 = vld [vmem:[#allocation6 + $0x20] sm:$0xff]
    %v2149 = vld [vmem:[#allocation6 + $0x28] sm:$0xff]
    %v2150 = vld [vmem:[#allocation6 + $0x30] sm:$0xff]
    %v2151 = vld [vmem:[#allocation6 + $0x38] sm:$0xff]
    %v2152 = vpack.c.bf16 %v2148, %v2144
    %v2153 = vpack.c.bf16 %v2149, %v2145
    %v2154 = vpack.c.bf16 %v2150, %v2146
    %v2155 = vpack.c.bf16 %v2151, %v2147
    %v2156 = vld [vmem:[#allocation10] sm:$0xff]
    %v2157 = vld [vmem:[#allocation10 + $0x8] sm:$0xff]
    %v2158 = vld [vmem:[#allocation10 + $0x10] sm:$0xff]
    %v2159 = vld [vmem:[#allocation10 + $0x18] sm:$0xff]
    %v2160 = vld [vmem:[#allocation10 + $0x20] sm:$0xff]
    %v2161 = vld [vmem:[#allocation10 + $0x28] sm:$0xff]
    %v2162 = vld [vmem:[#allocation10 + $0x30] sm:$0xff]
    %v2163 = vld [vmem:[#allocation10 + $0x38] sm:$0xff]
    %v2164 = vld [vmem:[#allocation10 + $0x40] sm:$0xff]
    %v2165 = vld [vmem:[#allocation10 + $0x48] sm:$0xff]
    %v2166 = vld [vmem:[#allocation10 + $0x50] sm:$0xff]
    %v2167 = vld [vmem:[#allocation10 + $0x58] sm:$0xff]
    %v2168 = vld [vmem:[#allocation10 + $0x60] sm:$0xff]
    %v2169 = vld [vmem:[#allocation10 + $0x68] sm:$0xff]
    %v2170 = vld [vmem:[#allocation10 + $0x70] sm:$0xff]
    %v2171 = vld [vmem:[#allocation10 + $0x78] sm:$0xff]
    %v2172 = vld [vmem:[#allocation10 + $0x80] sm:$0xff]
    %v2173 = vld [vmem:[#allocation10 + $0x88] sm:$0xff]
    %v2174 = vld [vmem:[#allocation10 + $0x90] sm:$0xff]
    %v2175 = vld [vmem:[#allocation10 + $0x98] sm:$0xff]
    %v2176 = vld [vmem:[#allocation10 + $0xa0] sm:$0xff]
    %v2177 = vld [vmem:[#allocation10 + $0xa8] sm:$0xff]
    %v2178 = vld [vmem:[#allocation10 + $0xb0] sm:$0xff]
    %v2179 = vld [vmem:[#allocation10 + $0xb8] sm:$0xff]
    %v2180 = vld [vmem:[#allocation10 + $0xc0] sm:$0xff]
    %v2181 = vld [vmem:[#allocation10 + $0xc8] sm:$0xff]
    %v2182 = vld [vmem:[#allocation10 + $0xd0] sm:$0xff]
    %v2183 = vld [vmem:[#allocation10 + $0xd8] sm:$0xff]
    %v2184 = vld [vmem:[#allocation10 + $0xe0] sm:$0xff]
    %v2185 = vld [vmem:[#allocation10 + $0xe8] sm:$0xff]
    %v2186 = vld [vmem:[#allocation10 + $0xf0] sm:$0xff]
    %v2187 = vld [vmem:[#allocation10 + $0xf8] sm:$0xff]
    %v2188 = vld [vmem:[#allocation10 + $0x100] sm:$0xff]
    %v2189 = vld [vmem:[#allocation10 + $0x108] sm:$0xff]
    %v2190 = vld [vmem:[#allocation10 + $0x110] sm:$0xff]
    %v2191 = vld [vmem:[#allocation10 + $0x118] sm:$0xff]
    %v2192 = vld [vmem:[#allocation10 + $0x120] sm:$0xff]
    %v2193 = vld [vmem:[#allocation10 + $0x128] sm:$0xff]
    %v2194 = vld [vmem:[#allocation10 + $0x130] sm:$0xff]
    %v2195 = vld [vmem:[#allocation10 + $0x138] sm:$0xff]
    %v2196 = vld [vmem:[#allocation10 + $0x140] sm:$0xff]
    %v2197 = vld [vmem:[#allocation10 + $0x148] sm:$0xff]
    %v2198 = vld [vmem:[#allocation10 + $0x150] sm:$0xff]
    %v2199 = vld [vmem:[#allocation10 + $0x158] sm:$0xff]
    %v2200 = vld [vmem:[#allocation10 + $0x160] sm:$0xff]
    %v2201 = vld [vmem:[#allocation10 + $0x168] sm:$0xff]
    %v2202 = vld [vmem:[#allocation10 + $0x170] sm:$0xff]
    %v2203 = vld [vmem:[#allocation10 + $0x178] sm:$0xff]
    %v2204 = vld [vmem:[#allocation10 + $0x180] sm:$0xff]
    %v2205 = vld [vmem:[#allocation10 + $0x188] sm:$0xff]
    %v2206 = vld [vmem:[#allocation10 + $0x190] sm:$0xff]
    %v2207 = vld [vmem:[#allocation10 + $0x198] sm:$0xff]
    %v2208 = vld [vmem:[#allocation10 + $0x1a0] sm:$0xff]
    %v2209 = vld [vmem:[#allocation10 + $0x1a8] sm:$0xff]
    %v2210 = vld [vmem:[#allocation10 + $0x1b0] sm:$0xff]
    %v2211 = vld [vmem:[#allocation10 + $0x1b8] sm:$0xff]
    %v2212 = vld [vmem:[#allocation10 + $0x1c0] sm:$0xff]
    %v2213 = vld [vmem:[#allocation10 + $0x1c8] sm:$0xff]
    %v2214 = vld [vmem:[#allocation10 + $0x1d0] sm:$0xff]
    %v2215 = vld [vmem:[#allocation10 + $0x1d8] sm:$0xff]
    %v2216 = vld [vmem:[#allocation10 + $0x1e0] sm:$0xff]
    %v2217 = vld [vmem:[#allocation10 + $0x1e8] sm:$0xff]
    %v2218 = vld [vmem:[#allocation10 + $0x1f0] sm:$0xff]
    %v2219 = vld [vmem:[#allocation10 + $0x1f8] sm:$0xff]
    %v2220 = vld [vmem:[#allocation10 + $0x200] sm:$0xff]
    %v2221 = vld [vmem:[#allocation10 + $0x208] sm:$0xff]
    %v2222 = vld [vmem:[#allocation10 + $0x210] sm:$0xff]
    %v2223 = vld [vmem:[#allocation10 + $0x218] sm:$0xff]
    %v2224 = vld [vmem:[#allocation10 + $0x220] sm:$0xff]
    %v2225 = vld [vmem:[#allocation10 + $0x228] sm:$0xff]
    %v2226 = vld [vmem:[#allocation10 + $0x230] sm:$0xff]
    %v2227 = vld [vmem:[#allocation10 + $0x238] sm:$0xff]
    %v2228 = vld [vmem:[#allocation10 + $0x240] sm:$0xff]
    %v2229 = vld [vmem:[#allocation10 + $0x248] sm:$0xff]
    %v2230 = vld [vmem:[#allocation10 + $0x250] sm:$0xff]
    %v2231 = vld [vmem:[#allocation10 + $0x258] sm:$0xff]
    %v2232 = vld [vmem:[#allocation10 + $0x260] sm:$0xff]
    %v2233 = vld [vmem:[#allocation10 + $0x268] sm:$0xff]
    %v2234 = vld [vmem:[#allocation10 + $0x270] sm:$0xff]
    %v2235 = vld [vmem:[#allocation10 + $0x278] sm:$0xff]
    %v2236 = vld [vmem:[#allocation10 + $0x280] sm:$0xff]
    %v2237 = vld [vmem:[#allocation10 + $0x288] sm:$0xff]
    %v2238 = vld [vmem:[#allocation10 + $0x290] sm:$0xff]
    %v2239 = vld [vmem:[#allocation10 + $0x298] sm:$0xff]
    %v2240 = vld [vmem:[#allocation10 + $0x2a0] sm:$0xff]
    %v2241 = vld [vmem:[#allocation10 + $0x2a8] sm:$0xff]
    %v2242 = vld [vmem:[#allocation10 + $0x2b0] sm:$0xff]
    %v2243 = vld [vmem:[#allocation10 + $0x2b8] sm:$0xff]
    %v2244 = vld [vmem:[#allocation10 + $0x2c0] sm:$0xff]
    %v2245 = vld [vmem:[#allocation10 + $0x2c8] sm:$0xff]
    %v2246 = vld [vmem:[#allocation10 + $0x2d0] sm:$0xff]
    %v2247 = vld [vmem:[#allocation10 + $0x2d8] sm:$0xff]
    %v2248 = vld [vmem:[#allocation10 + $0x2e0] sm:$0xff]
    %v2249 = vld [vmem:[#allocation10 + $0x2e8] sm:$0xff]
    %v2250 = vld [vmem:[#allocation10 + $0x2f0] sm:$0xff]
    %v2251 = vld [vmem:[#allocation10 + $0x2f8] sm:$0xff]
    %v2252 = vld [vmem:[#allocation10 + $0x300] sm:$0xff]
    %v2253 = vld [vmem:[#allocation10 + $0x308] sm:$0xff]
    %v2254 = vld [vmem:[#allocation10 + $0x310] sm:$0xff]
    %v2255 = vld [vmem:[#allocation10 + $0x318] sm:$0xff]
    %v2256 = vld [vmem:[#allocation10 + $0x320] sm:$0xff]
    %v2257 = vld [vmem:[#allocation10 + $0x328] sm:$0xff]
    %v2258 = vld [vmem:[#allocation10 + $0x330] sm:$0xff]
    %v2259 = vld [vmem:[#allocation10 + $0x338] sm:$0xff]
    %v2260 = vld [vmem:[#allocation10 + $0x340] sm:$0xff]
    %v2261 = vld [vmem:[#allocation10 + $0x348] sm:$0xff]
    %v2262 = vld [vmem:[#allocation10 + $0x350] sm:$0xff]
    %v2263 = vld [vmem:[#allocation10 + $0x358] sm:$0xff]
    %v2264 = vld [vmem:[#allocation10 + $0x360] sm:$0xff]
    %v2265 = vld [vmem:[#allocation10 + $0x368] sm:$0xff]
    %v2266 = vld [vmem:[#allocation10 + $0x370] sm:$0xff]
    %v2267 = vld [vmem:[#allocation10 + $0x378] sm:$0xff]
    %v2268 = vld [vmem:[#allocation10 + $0x380] sm:$0xff]
    %v2269 = vld [vmem:[#allocation10 + $0x388] sm:$0xff]
    %v2270 = vld [vmem:[#allocation10 + $0x390] sm:$0xff]
    %v2271 = vld [vmem:[#allocation10 + $0x398] sm:$0xff]
    %v2272 = vld [vmem:[#allocation10 + $0x3a0] sm:$0xff]
    %v2273 = vld [vmem:[#allocation10 + $0x3a8] sm:$0xff]
    %v2274 = vld [vmem:[#allocation10 + $0x3b0] sm:$0xff]
    %v2275 = vld [vmem:[#allocation10 + $0x3b8] sm:$0xff]
    %v2276 = vld [vmem:[#allocation10 + $0x3c0] sm:$0xff]
    %v2277 = vld [vmem:[#allocation10 + $0x3c8] sm:$0xff]
    %v2278 = vld [vmem:[#allocation10 + $0x3d0] sm:$0xff]
    %v2279 = vld [vmem:[#allocation10 + $0x3d8] sm:$0xff]
    %v2280 = vld [vmem:[#allocation10 + $0x3e0] sm:$0xff]
    %v2281 = vld [vmem:[#allocation10 + $0x3e8] sm:$0xff]
    %v2282 = vld [vmem:[#allocation10 + $0x3f0] sm:$0xff]
    %v2283 = vld [vmem:[#allocation10 + $0x3f8] sm:$0xff]
    %v2412 = vunpack.c.l.b16 %v2156
    %v2413 = vunpack.c.h.b16 %v2156
    %v2414 = vunpack.c.l.b16 %v2157
    %v2415 = vunpack.c.h.b16 %v2157
    %v2416 = vunpack.c.l.b16 %v2158
    %v2417 = vunpack.c.h.b16 %v2158
    %v2418 = vunpack.c.l.b16 %v2159
    %v2419 = vunpack.c.h.b16 %v2159
    %v2420 = vunpack.c.l.b16 %v2160
    %v2421 = vunpack.c.h.b16 %v2160
    %v2422 = vunpack.c.l.b16 %v2161
    %v2423 = vunpack.c.h.b16 %v2161
    %v2424 = vunpack.c.l.b16 %v2162
    %v2425 = vunpack.c.h.b16 %v2162
    %v2426 = vunpack.c.l.b16 %v2163
    %v2427 = vunpack.c.h.b16 %v2163
    %v2428 = vunpack.c.l.b16 %v2164
    %v2429 = vunpack.c.h.b16 %v2164
    %v2430 = vunpack.c.l.b16 %v2165
    %v2431 = vunpack.c.h.b16 %v2165
    %v2432 = vunpack.c.l.b16 %v2166
    %v2433 = vunpack.c.h.b16 %v2166
    %v2434 = vunpack.c.l.b16 %v2167
    %v2435 = vunpack.c.h.b16 %v2167
    %v2436 = vunpack.c.l.b16 %v2168
    %v2437 = vunpack.c.h.b16 %v2168
    %v2438 = vunpack.c.l.b16 %v2169
    %v2439 = vunpack.c.h.b16 %v2169
    %v2440 = vunpack.c.l.b16 %v2170
    %v2441 = vunpack.c.h.b16 %v2170
    %v2442 = vunpack.c.l.b16 %v2171
    %v2443 = vunpack.c.h.b16 %v2171
    %v2444 = vunpack.c.l.b16 %v2172
    %v2445 = vunpack.c.h.b16 %v2172
    %v2446 = vunpack.c.l.b16 %v2173
    %v2447 = vunpack.c.h.b16 %v2173
    %v2448 = vunpack.c.l.b16 %v2174
    %v2449 = vunpack.c.h.b16 %v2174
    %v2450 = vunpack.c.l.b16 %v2175
    %v2451 = vunpack.c.h.b16 %v2175
    %v2452 = vunpack.c.l.b16 %v2176
    %v2453 = vunpack.c.h.b16 %v2176
    %v2454 = vunpack.c.l.b16 %v2177
    %v2455 = vunpack.c.h.b16 %v2177
    %v2456 = vunpack.c.l.b16 %v2178
    %v2457 = vunpack.c.h.b16 %v2178
    %v2458 = vunpack.c.l.b16 %v2179
    %v2459 = vunpack.c.h.b16 %v2179
    %v2460 = vunpack.c.l.b16 %v2180
    %v2461 = vunpack.c.h.b16 %v2180
    %v2462 = vunpack.c.l.b16 %v2181
    %v2463 = vunpack.c.h.b16 %v2181
    %v2464 = vunpack.c.l.b16 %v2182
    %v2465 = vunpack.c.h.b16 %v2182
    %v2466 = vunpack.c.l.b16 %v2183
    %v2467 = vunpack.c.h.b16 %v2183
    %v2468 = vunpack.c.l.b16 %v2184
    %v2469 = vunpack.c.h.b16 %v2184
    %v2470 = vunpack.c.l.b16 %v2185
    %v2471 = vunpack.c.h.b16 %v2185
    %v2472 = vunpack.c.l.b16 %v2186
    %v2473 = vunpack.c.h.b16 %v2186
    %v2474 = vunpack.c.l.b16 %v2187
    %v2475 = vunpack.c.h.b16 %v2187
    %v2476 = vunpack.c.l.b16 %v2188
    %v2477 = vunpack.c.h.b16 %v2188
    %v2478 = vunpack.c.l.b16 %v2189
    %v2479 = vunpack.c.h.b16 %v2189
    %v2480 = vunpack.c.l.b16 %v2190
    %v2481 = vunpack.c.h.b16 %v2190
    %v2482 = vunpack.c.l.b16 %v2191
    %v2483 = vunpack.c.h.b16 %v2191
    %v2484 = vunpack.c.l.b16 %v2192
    %v2485 = vunpack.c.h.b16 %v2192
    %v2486 = vunpack.c.l.b16 %v2193
    %v2487 = vunpack.c.h.b16 %v2193
    %v2488 = vunpack.c.l.b16 %v2194
    %v2489 = vunpack.c.h.b16 %v2194
    %v2490 = vunpack.c.l.b16 %v2195
    %v2491 = vunpack.c.h.b16 %v2195
    %v2492 = vunpack.c.l.b16 %v2196
    %v2493 = vunpack.c.h.b16 %v2196
    %v2494 = vunpack.c.l.b16 %v2197
    %v2495 = vunpack.c.h.b16 %v2197
    %v2496 = vunpack.c.l.b16 %v2198
    %v2497 = vunpack.c.h.b16 %v2198
    %v2498 = vunpack.c.l.b16 %v2199
    %v2499 = vunpack.c.h.b16 %v2199
    %v2500 = vunpack.c.l.b16 %v2200
    %v2501 = vunpack.c.h.b16 %v2200
    %v2502 = vunpack.c.l.b16 %v2201
    %v2503 = vunpack.c.h.b16 %v2201
    %v2504 = vunpack.c.l.b16 %v2202
    %v2505 = vunpack.c.h.b16 %v2202
    %v2506 = vunpack.c.l.b16 %v2203
    %v2507 = vunpack.c.h.b16 %v2203
    %v2508 = vunpack.c.l.b16 %v2204
    %v2509 = vunpack.c.h.b16 %v2204
    %v2510 = vunpack.c.l.b16 %v2205
    %v2511 = vunpack.c.h.b16 %v2205
    %v2512 = vunpack.c.l.b16 %v2206
    %v2513 = vunpack.c.h.b16 %v2206
    %v2514 = vunpack.c.l.b16 %v2207
    %v2515 = vunpack.c.h.b16 %v2207
    %v2516 = vunpack.c.l.b16 %v2208
    %v2517 = vunpack.c.h.b16 %v2208
    %v2518 = vunpack.c.l.b16 %v2209
    %v2519 = vunpack.c.h.b16 %v2209
    %v2520 = vunpack.c.l.b16 %v2210
    %v2521 = vunpack.c.h.b16 %v2210
    %v2522 = vunpack.c.l.b16 %v2211
    %v2523 = vunpack.c.h.b16 %v2211
    %v2524 = vunpack.c.l.b16 %v2212
    %v2525 = vunpack.c.h.b16 %v2212
    %v2526 = vunpack.c.l.b16 %v2213
    %v2527 = vunpack.c.h.b16 %v2213
    %v2528 = vunpack.c.l.b16 %v2214
    %v2529 = vunpack.c.h.b16 %v2214
    %v2530 = vunpack.c.l.b16 %v2215
    %v2531 = vunpack.c.h.b16 %v2215
    %v2532 = vunpack.c.l.b16 %v2216
    %v2533 = vunpack.c.h.b16 %v2216
    %v2534 = vunpack.c.l.b16 %v2217
    %v2535 = vunpack.c.h.b16 %v2217
    %v2536 = vunpack.c.l.b16 %v2218
    %v2537 = vunpack.c.h.b16 %v2218
    %v2538 = vunpack.c.l.b16 %v2219
    %v2539 = vunpack.c.h.b16 %v2219
    %v2540 = vunpack.c.l.b16 %v2220
    %v2541 = vunpack.c.h.b16 %v2220
    %v2542 = vunpack.c.l.b16 %v2221
    %v2543 = vunpack.c.h.b16 %v2221
    %v2544 = vunpack.c.l.b16 %v2222
    %v2545 = vunpack.c.h.b16 %v2222
    %v2546 = vunpack.c.l.b16 %v2223
    %v2547 = vunpack.c.h.b16 %v2223
    %v2548 = vunpack.c.l.b16 %v2224
    %v2549 = vunpack.c.h.b16 %v2224
    %v2550 = vunpack.c.l.b16 %v2225
    %v2551 = vunpack.c.h.b16 %v2225
    %v2552 = vunpack.c.l.b16 %v2226
    %v2553 = vunpack.c.h.b16 %v2226
    %v2554 = vunpack.c.l.b16 %v2227
    %v2555 = vunpack.c.h.b16 %v2227
    %v2556 = vunpack.c.l.b16 %v2228
    %v2557 = vunpack.c.h.b16 %v2228
    %v2558 = vunpack.c.l.b16 %v2229
    %v2559 = vunpack.c.h.b16 %v2229
    %v2560 = vunpack.c.l.b16 %v2230
    %v2561 = vunpack.c.h.b16 %v2230
    %v2562 = vunpack.c.l.b16 %v2231
    %v2563 = vunpack.c.h.b16 %v2231
    %v2564 = vunpack.c.l.b16 %v2232
    %v2565 = vunpack.c.h.b16 %v2232
    %v2566 = vunpack.c.l.b16 %v2233
    %v2567 = vunpack.c.h.b16 %v2233
    %v2568 = vunpack.c.l.b16 %v2234
    %v2569 = vunpack.c.h.b16 %v2234
    %v2570 = vunpack.c.l.b16 %v2235
    %v2571 = vunpack.c.h.b16 %v2235
    %v2572 = vunpack.c.l.b16 %v2236
    %v2573 = vunpack.c.h.b16 %v2236
    %v2574 = vunpack.c.l.b16 %v2237
    %v2575 = vunpack.c.h.b16 %v2237
    %v2576 = vunpack.c.l.b16 %v2238
    %v2577 = vunpack.c.h.b16 %v2238
    %v2578 = vunpack.c.l.b16 %v2239
    %v2579 = vunpack.c.h.b16 %v2239
    %v2580 = vunpack.c.l.b16 %v2240
    %v2581 = vunpack.c.h.b16 %v2240
    %v2582 = vunpack.c.l.b16 %v2241
    %v2583 = vunpack.c.h.b16 %v2241
    %v2584 = vunpack.c.l.b16 %v2242
    %v2585 = vunpack.c.h.b16 %v2242
    %v2586 = vunpack.c.l.b16 %v2243
    %v2587 = vunpack.c.h.b16 %v2243
    %v2588 = vunpack.c.l.b16 %v2244
    %v2589 = vunpack.c.h.b16 %v2244
    %v2590 = vunpack.c.l.b16 %v2245
    %v2591 = vunpack.c.h.b16 %v2245
    %v2592 = vunpack.c.l.b16 %v2246
    %v2593 = vunpack.c.h.b16 %v2246
    %v2594 = vunpack.c.l.b16 %v2247
    %v2595 = vunpack.c.h.b16 %v2247
    %v2596 = vunpack.c.l.b16 %v2248
    %v2597 = vunpack.c.h.b16 %v2248
    %v2598 = vunpack.c.l.b16 %v2249
    %v2599 = vunpack.c.h.b16 %v2249
    %v2600 = vunpack.c.l.b16 %v2250
    %v2601 = vunpack.c.h.b16 %v2250
    %v2602 = vunpack.c.l.b16 %v2251
    %v2603 = vunpack.c.h.b16 %v2251
    %v2604 = vunpack.c.l.b16 %v2252
    %v2605 = vunpack.c.h.b16 %v2252
    %v2606 = vunpack.c.l.b16 %v2253
    %v2607 = vunpack.c.h.b16 %v2253
    %v2608 = vunpack.c.l.b16 %v2254
    %v2609 = vunpack.c.h.b16 %v2254
    %v2610 = vunpack.c.l.b16 %v2255
    %v2611 = vunpack.c.h.b16 %v2255
    %v2612 = vunpack.c.l.b16 %v2256
    %v2613 = vunpack.c.h.b16 %v2256
    %v2614 = vunpack.c.l.b16 %v2257
    %v2615 = vunpack.c.h.b16 %v2257
    %v2616 = vunpack.c.l.b16 %v2258
    %v2617 = vunpack.c.h.b16 %v2258
    %v2618 = vunpack.c.l.b16 %v2259
    %v2619 = vunpack.c.h.b16 %v2259
    %v2620 = vunpack.c.l.b16 %v2260
    %v2621 = vunpack.c.h.b16 %v2260
    %v2622 = vunpack.c.l.b16 %v2261
    %v2623 = vunpack.c.h.b16 %v2261
    %v2624 = vunpack.c.l.b16 %v2262
    %v2625 = vunpack.c.h.b16 %v2262
    %v2626 = vunpack.c.l.b16 %v2263
    %v2627 = vunpack.c.h.b16 %v2263
    %v2628 = vunpack.c.l.b16 %v2264
    %v2629 = vunpack.c.h.b16 %v2264
    %v2630 = vunpack.c.l.b16 %v2265
    %v2631 = vunpack.c.h.b16 %v2265
    %v2632 = vunpack.c.l.b16 %v2266
    %v2633 = vunpack.c.h.b16 %v2266
    %v2634 = vunpack.c.l.b16 %v2267
    %v2635 = vunpack.c.h.b16 %v2267
    %v2636 = vunpack.c.l.b16 %v2268
    %v2637 = vunpack.c.h.b16 %v2268
    %v2638 = vunpack.c.l.b16 %v2269
    %v2639 = vunpack.c.h.b16 %v2269
    %v2640 = vunpack.c.l.b16 %v2270
    %v2641 = vunpack.c.h.b16 %v2270
    %v2642 = vunpack.c.l.b16 %v2271
    %v2643 = vunpack.c.h.b16 %v2271
    %v2644 = vunpack.c.l.b16 %v2272
    %v2645 = vunpack.c.h.b16 %v2272
    %v2646 = vunpack.c.l.b16 %v2273
    %v2647 = vunpack.c.h.b16 %v2273
    %v2648 = vunpack.c.l.b16 %v2274
    %v2649 = vunpack.c.h.b16 %v2274
    %v2650 = vunpack.c.l.b16 %v2275
    %v2651 = vunpack.c.h.b16 %v2275
    %v2652 = vunpack.c.l.b16 %v2276
    %v2653 = vunpack.c.h.b16 %v2276
    %v2654 = vunpack.c.l.b16 %v2277
    %v2655 = vunpack.c.h.b16 %v2277
    %v2656 = vunpack.c.l.b16 %v2278
    %v2657 = vunpack.c.h.b16 %v2278
    %v2658 = vunpack.c.l.b16 %v2279
    %v2659 = vunpack.c.h.b16 %v2279
    %v2660 = vunpack.c.l.b16 %v2280
    %v2661 = vunpack.c.h.b16 %v2280
    %v2662 = vunpack.c.l.b16 %v2281
    %v2663 = vunpack.c.h.b16 %v2281
    %v2664 = vunpack.c.l.b16 %v2282
    %v2665 = vunpack.c.h.b16 %v2282
    %v2666 = vunpack.c.l.b16 %v2283
    %v2667 = vunpack.c.h.b16 %v2283
    %v2668 = vpack.c.b16 %v2416, %v2412
    %v2669 = vpack.c.b16 %v2417, %v2413
    %v2670 = vpack.c.b16 %v2418, %v2414
    %v2671 = vpack.c.b16 %v2419, %v2415
    %v2672 = vpack.c.b16 %v2424, %v2420
    %v2673 = vpack.c.b16 %v2425, %v2421
    %v2674 = vpack.c.b16 %v2426, %v2422
    %v2675 = vpack.c.b16 %v2427, %v2423
    %v2676 = vpack.c.b16 %v2432, %v2428
    %v2677 = vpack.c.b16 %v2433, %v2429
    %v2678 = vpack.c.b16 %v2434, %v2430
    %v2679 = vpack.c.b16 %v2435, %v2431
    %v2680 = vpack.c.b16 %v2440, %v2436
    %v2681 = vpack.c.b16 %v2441, %v2437
    %v2682 = vpack.c.b16 %v2442, %v2438
    %v2683 = vpack.c.b16 %v2443, %v2439
    %v2684 = vpack.c.b16 %v2448, %v2444
    %v2685 = vpack.c.b16 %v2449, %v2445
    %v2686 = vpack.c.b16 %v2450, %v2446
    %v2687 = vpack.c.b16 %v2451, %v2447
    %v2688 = vpack.c.b16 %v2456, %v2452
    %v2689 = vpack.c.b16 %v2457, %v2453
    %v2690 = vpack.c.b16 %v2458, %v2454
    %v2691 = vpack.c.b16 %v2459, %v2455
    %v2692 = vpack.c.b16 %v2464, %v2460
    %v2693 = vpack.c.b16 %v2465, %v2461
    %v2694 = vpack.c.b16 %v2466, %v2462
    %v2695 = vpack.c.b16 %v2467, %v2463
    %v2696 = vpack.c.b16 %v2472, %v2468
    %v2697 = vpack.c.b16 %v2473, %v2469
    %v2698 = vpack.c.b16 %v2474, %v2470
    %v2699 = vpack.c.b16 %v2475, %v2471
    %v2700 = vpack.c.b16 %v2480, %v2476
    %v2701 = vpack.c.b16 %v2481, %v2477
    %v2702 = vpack.c.b16 %v2482, %v2478
    %v2703 = vpack.c.b16 %v2483, %v2479
    %v2704 = vpack.c.b16 %v2488, %v2484
    %v2705 = vpack.c.b16 %v2489, %v2485
    %v2706 = vpack.c.b16 %v2490, %v2486
    %v2707 = vpack.c.b16 %v2491, %v2487
    %v2708 = vpack.c.b16 %v2496, %v2492
    %v2709 = vpack.c.b16 %v2497, %v2493
    %v2710 = vpack.c.b16 %v2498, %v2494
    %v2711 = vpack.c.b16 %v2499, %v2495
    %v2712 = vpack.c.b16 %v2504, %v2500
    %v2713 = vpack.c.b16 %v2505, %v2501
    %v2714 = vpack.c.b16 %v2506, %v2502
    %v2715 = vpack.c.b16 %v2507, %v2503
    %v2716 = vpack.c.b16 %v2512, %v2508
    %v2717 = vpack.c.b16 %v2513, %v2509
    %v2718 = vpack.c.b16 %v2514, %v2510
    %v2719 = vpack.c.b16 %v2515, %v2511
    %v2720 = vpack.c.b16 %v2520, %v2516
    %v2721 = vpack.c.b16 %v2521, %v2517
    %v2722 = vpack.c.b16 %v2522, %v2518
    %v2723 = vpack.c.b16 %v2523, %v2519
    %v2724 = vpack.c.b16 %v2528, %v2524
    %v2725 = vpack.c.b16 %v2529, %v2525
    %v2726 = vpack.c.b16 %v2530, %v2526
    %v2727 = vpack.c.b16 %v2531, %v2527
    %v2728 = vpack.c.b16 %v2536, %v2532
    %v2729 = vpack.c.b16 %v2537, %v2533
    %v2730 = vpack.c.b16 %v2538, %v2534
    %v2731 = vpack.c.b16 %v2539, %v2535
    %v2732 = vpack.c.b16 %v2544, %v2540
    %v2733 = vpack.c.b16 %v2545, %v2541
    %v2734 = vpack.c.b16 %v2546, %v2542
    %v2735 = vpack.c.b16 %v2547, %v2543
    %v2736 = vpack.c.b16 %v2552, %v2548
    %v2737 = vpack.c.b16 %v2553, %v2549
    %v2738 = vpack.c.b16 %v2554, %v2550
    %v2739 = vpack.c.b16 %v2555, %v2551
    %v2740 = vpack.c.b16 %v2560, %v2556
    %v2741 = vpack.c.b16 %v2561, %v2557
    %v2742 = vpack.c.b16 %v2562, %v2558
    %v2743 = vpack.c.b16 %v2563, %v2559
    %v2744 = vpack.c.b16 %v2568, %v2564
    %v2745 = vpack.c.b16 %v2569, %v2565
    %v2746 = vpack.c.b16 %v2570, %v2566
    %v2747 = vpack.c.b16 %v2571, %v2567
    %v2748 = vpack.c.b16 %v2576, %v2572
    %v2749 = vpack.c.b16 %v2577, %v2573
    %v2750 = vpack.c.b16 %v2578, %v2574
    %v2751 = vpack.c.b16 %v2579, %v2575
    %v2752 = vpack.c.b16 %v2584, %v2580
    %v2753 = vpack.c.b16 %v2585, %v2581
    %v2754 = vpack.c.b16 %v2586, %v2582
    %v2755 = vpack.c.b16 %v2587, %v2583
    %v2756 = vpack.c.b16 %v2592, %v2588
    %v2757 = vpack.c.b16 %v2593, %v2589
    %v2758 = vpack.c.b16 %v2594, %v2590
    %v2759 = vpack.c.b16 %v2595, %v2591
    %v2760 = vpack.c.b16 %v2600, %v2596
    %v2761 = vpack.c.b16 %v2601, %v2597
    %v2762 = vpack.c.b16 %v2602, %v2598
    %v2763 = vpack.c.b16 %v2603, %v2599
    %v2764 = vpack.c.b16 %v2608, %v2604
    %v2765 = vpack.c.b16 %v2609, %v2605
    %v2766 = vpack.c.b16 %v2610, %v2606
    %v2767 = vpack.c.b16 %v2611, %v2607
    %v2768 = vpack.c.b16 %v2616, %v2612
    %v2769 = vpack.c.b16 %v2617, %v2613
    %v2770 = vpack.c.b16 %v2618, %v2614
    %v2771 = vpack.c.b16 %v2619, %v2615
    %v2772 = vpack.c.b16 %v2624, %v2620
    %v2773 = vpack.c.b16 %v2625, %v2621
    %v2774 = vpack.c.b16 %v2626, %v2622
    %v2775 = vpack.c.b16 %v2627, %v2623
    %v2776 = vpack.c.b16 %v2632, %v2628
    %v2777 = vpack.c.b16 %v2633, %v2629
    %v2778 = vpack.c.b16 %v2634, %v2630
    %v2779 = vpack.c.b16 %v2635, %v2631
    %v2780 = vpack.c.b16 %v2640, %v2636
    %v2781 = vpack.c.b16 %v2641, %v2637
    %v2782 = vpack.c.b16 %v2642, %v2638
    %v2783 = vpack.c.b16 %v2643, %v2639
    %v2784 = vpack.c.b16 %v2648, %v2644
    %v2785 = vpack.c.b16 %v2649, %v2645
    %v2786 = vpack.c.b16 %v2650, %v2646
    %v2787 = vpack.c.b16 %v2651, %v2647
    %v2788 = vpack.c.b16 %v2656, %v2652
    %v2789 = vpack.c.b16 %v2657, %v2653
    %v2790 = vpack.c.b16 %v2658, %v2654
    %v2791 = vpack.c.b16 %v2659, %v2655
    %v2792 = vpack.c.b16 %v2664, %v2660
    %v2793 = vpack.c.b16 %v2665, %v2661
    %v2794 = vpack.c.b16 %v2666, %v2662
    %v2795 = vpack.c.b16 %v2667, %v2663
    %2924 = vmatpush.bf16.msra.mxu0 %v2696
    %2925 = vmatpush.bf16.msra.mxu0 %v2692
    %2926 = vmatpush.bf16.msra.mxu0 %v2688
    %2927 = vmatpush.bf16.msra.mxu0 %v2684
    %2928 = vmatpush.bf16.msra.mxu0 %v2680
    %2929 = vmatpush.bf16.msra.mxu0 %v2676
    %2930 = vmatpush.bf16.msra.mxu0 %v2672
    %2931 = vmatpush.bf16.msra.mxu0 %v2668
    %2932 = vmatmul.bf16.gmra.mxu0 %v2152
    %v2933 = vpop.f32.mrf.mxu0
    %v2934 = vadd.f32 0.0, %v2933
    %v2935 = vpop.f32.mrf.mxu0
    %v2936 = vadd.f32 0.0, %v2935
    %2937 = vdwg.mxu0
    %2938 = vmatpush.bf16.msra.mxu0 %v2728
    %2939 = vmatpush.bf16.msra.mxu0 %v2724
    %2940 = vmatpush.bf16.msra.mxu0 %v2720
    %2941 = vmatpush.bf16.msra.mxu0 %v2716
    %2942 = vmatpush.bf16.msra.mxu0 %v2712
    %2943 = vmatpush.bf16.msra.mxu0 %v2708
    %2944 = vmatpush.bf16.msra.mxu0 %v2704
    %2945 = vmatpush.bf16.msra.mxu0 %v2700
    %2946 = vmatmul.bf16.gmra.mxu0 %v2153
    %v2947 = vpop.f32.mrf.mxu0
    %v2948 = vadd.f32 %v2934, %v2947
    %v2949 = vpop.f32.mrf.mxu0
    %v2950 = vadd.f32 %v2936, %v2949
    %2951 = vdwg.mxu0
    %2952 = vmatpush.bf16.msra.mxu0 %v2760
    %2953 = vmatpush.bf16.msra.mxu0 %v2756
    %2954 = vmatpush.bf16.msra.mxu0 %v2752
    %2955 = vmatpush.bf16.msra.mxu0 %v2748
    %2956 = vmatpush.bf16.msra.mxu0 %v2744
    %2957 = vmatpush.bf16.msra.mxu0 %v2740
    %2958 = vmatpush.bf16.msra.mxu0 %v2736
    %2959 = vmatpush.bf16.msra.mxu0 %v2732
    %2960 = vmatmul.bf16.gmra.mxu0 %v2154
    %v2961 = vpop.f32.mrf.mxu0
    %v2962 = vadd.f32 %v2948, %v2961
    %v2963 = vpop.f32.mrf.mxu0
    %v2964 = vadd.f32 %v2950, %v2963
    %2965 = vdwg.mxu0
    %2966 = vmatpush.bf16.msra.mxu0 %v2792
    %2967 = vmatpush.bf16.msra.mxu0 %v2788
    %2968 = vmatpush.bf16.msra.mxu0 %v2784
    %2969 = vmatpush.bf16.msra.mxu0 %v2780
    %2970 = vmatpush.bf16.msra.mxu0 %v2776
    %2971 = vmatpush.bf16.msra.mxu0 %v2772
    %2972 = vmatpush.bf16.msra.mxu0 %v2768
    %2973 = vmatpush.bf16.msra.mxu0 %v2764
    %2974 = vmatmul.bf16.gmra.mxu0 %v2155
    %v2975 = vpop.f32.mrf.mxu0
    %v2976 = vadd.f32 %v2962, %v2975
    %v2977 = vpop.f32.mrf.mxu0
    %v2978 = vadd.f32 %v2964, %v2977
    %2979 = vdwg.mxu0
    %2980 = vmatpush.bf16.msra.mxu0 %v2697
    %2981 = vmatpush.bf16.msra.mxu0 %v2693
    %2982 = vmatpush.bf16.msra.mxu0 %v2689
    %2983 = vmatpush.bf16.msra.mxu0 %v2685
    %2984 = vmatpush.bf16.msra.mxu0 %v2681
    %2985 = vmatpush.bf16.msra.mxu0 %v2677
    %2986 = vmatpush.bf16.msra.mxu0 %v2673
    %2987 = vmatpush.bf16.msra.mxu0 %v2669
    %2988 = vmatmul.bf16.gmra.mxu0 %v2152
    %v2989 = vpop.f32.mrf.mxu0
    %v2990 = vadd.f32 0.0, %v2989
    %v2991 = vpop.f32.mrf.mxu0
    %v2992 = vadd.f32 0.0, %v2991
    %2993 = vdwg.mxu0
    %2994 = vmatpush.bf16.msra.mxu0 %v2729
    %2995 = vmatpush.bf16.msra.mxu0 %v2725
    %2996 = vmatpush.bf16.msra.mxu0 %v2721
    %2997 = vmatpush.bf16.msra.mxu0 %v2717
    %2998 = vmatpush.bf16.msra.mxu0 %v2713
    %2999 = vmatpush.bf16.msra.mxu0 %v2709
    %3000 = vmatpush.bf16.msra.mxu0 %v2705
    %3001 = vmatpush.bf16.msra.mxu0 %v2701
    %3002 = vmatmul.bf16.gmra.mxu0 %v2153
    %v3003 = vpop.f32.mrf.mxu0
    %v3004 = vadd.f32 %v2990, %v3003
    %v3005 = vpop.f32.mrf.mxu0
    %v3006 = vadd.f32 %v2992, %v3005
    %3007 = vdwg.mxu0
    %3008 = vmatpush.bf16.msra.mxu0 %v2761
    %3009 = vmatpush.bf16.msra.mxu0 %v2757
    %3010 = vmatpush.bf16.msra.mxu0 %v2753
    %3011 = vmatpush.bf16.msra.mxu0 %v2749
    %3012 = vmatpush.bf16.msra.mxu0 %v2745
    %3013 = vmatpush.bf16.msra.mxu0 %v2741
    %3014 = vmatpush.bf16.msra.mxu0 %v2737
    %3015 = vmatpush.bf16.msra.mxu0 %v2733
    %3016 = vmatmul.bf16.gmra.mxu0 %v2154
    %v3017 = vpop.f32.mrf.mxu0
    %v3018 = vadd.f32 %v3004, %v3017
    %v3019 = vpop.f32.mrf.mxu0
    %v3020 = vadd.f32 %v3006, %v3019
    %3021 = vdwg.mxu0
    %3022 = vmatpush.bf16.msra.mxu0 %v2793
    %3023 = vmatpush.bf16.msra.mxu0 %v2789
    %3024 = vmatpush.bf16.msra.mxu0 %v2785
    %3025 = vmatpush.bf16.msra.mxu0 %v2781
    %3026 = vmatpush.bf16.msra.mxu0 %v2777
    %3027 = vmatpush.bf16.msra.mxu0 %v2773
    %3028 = vmatpush.bf16.msra.mxu0 %v2769
    %3029 = vmatpush.bf16.msra.mxu0 %v2765
    %3030 = vmatmul.bf16.gmra.mxu0 %v2155
    %v3031 = vpop.f32.mrf.mxu0
    %v3032 = vadd.f32 %v3018, %v3031
    %v3033 = vpop.f32.mrf.mxu0
    %v3034 = vadd.f32 %v3020, %v3033
    %3035 = vdwg.mxu0
    %3036 = vmatpush.bf16.msra.mxu0 %v2698
    %3037 = vmatpush.bf16.msra.mxu0 %v2694
    %3038 = vmatpush.bf16.msra.mxu0 %v2690
    %3039 = vmatpush.bf16.msra.mxu0 %v2686
    %3040 = vmatpush.bf16.msra.mxu0 %v2682
    %3041 = vmatpush.bf16.msra.mxu0 %v2678
    %3042 = vmatpush.bf16.msra.mxu0 %v2674
    %3043 = vmatpush.bf16.msra.mxu0 %v2670
    %3044 = vmatmul.bf16.gmra.mxu0 %v2152
    %v3045 = vpop.f32.mrf.mxu0
    %v3046 = vadd.f32 0.0, %v3045
    %v3047 = vpop.f32.mrf.mxu0
    %v3048 = vadd.f32 0.0, %v3047
    %3049 = vdwg.mxu0
    %3050 = vmatpush.bf16.msra.mxu0 %v2730
    %3051 = vmatpush.bf16.msra.mxu0 %v2726
    %3052 = vmatpush.bf16.msra.mxu0 %v2722
    %3053 = vmatpush.bf16.msra.mxu0 %v2718
    %3054 = vmatpush.bf16.msra.mxu0 %v2714
    %3055 = vmatpush.bf16.msra.mxu0 %v2710
    %3056 = vmatpush.bf16.msra.mxu0 %v2706
    %3057 = vmatpush.bf16.msra.mxu0 %v2702
    %3058 = vmatmul.bf16.gmra.mxu0 %v2153
    %v3059 = vpop.f32.mrf.mxu0
    %v3060 = vadd.f32 %v3046, %v3059
    %v3061 = vpop.f32.mrf.mxu0
    %v3062 = vadd.f32 %v3048, %v3061
    %3063 = vdwg.mxu0
    %3064 = vmatpush.bf16.msra.mxu0 %v2762
    %3065 = vmatpush.bf16.msra.mxu0 %v2758
    %3066 = vmatpush.bf16.msra.mxu0 %v2754
    %3067 = vmatpush.bf16.msra.mxu0 %v2750
    %3068 = vmatpush.bf16.msra.mxu0 %v2746
    %3069 = vmatpush.bf16.msra.mxu0 %v2742
    %3070 = vmatpush.bf16.msra.mxu0 %v2738
    %3071 = vmatpush.bf16.msra.mxu0 %v2734
    %3072 = vmatmul.bf16.gmra.mxu0 %v2154
    %v3073 = vpop.f32.mrf.mxu0
    %v3074 = vadd.f32 %v3060, %v3073
    %v3075 = vpop.f32.mrf.mxu0
    %v3076 = vadd.f32 %v3062, %v3075
    %3077 = vdwg.mxu0
    %3078 = vmatpush.bf16.msra.mxu0 %v2794
    %3079 = vmatpush.bf16.msra.mxu0 %v2790
    %3080 = vmatpush.bf16.msra.mxu0 %v2786
    %3081 = vmatpush.bf16.msra.mxu0 %v2782
    %3082 = vmatpush.bf16.msra.mxu0 %v2778
    %3083 = vmatpush.bf16.msra.mxu0 %v2774
    %3084 = vmatpush.bf16.msra.mxu0 %v2770
    %3085 = vmatpush.bf16.msra.mxu0 %v2766
    %3086 = vmatmul.bf16.gmra.mxu0 %v2155
    %v3087 = vpop.f32.mrf.mxu0
    %v3088 = vadd.f32 %v3074, %v3087
    %v3089 = vpop.f32.mrf.mxu0
    %v3090 = vadd.f32 %v3076, %v3089
    %3091 = vdwg.mxu0
    %3092 = vmatpush.bf16.msra.mxu0 %v2699
    %3093 = vmatpush.bf16.msra.mxu0 %v2695
    %3094 = vmatpush.bf16.msra.mxu0 %v2691
    %3095 = vmatpush.bf16.msra.mxu0 %v2687
    %3096 = vmatpush.bf16.msra.mxu0 %v2683
    %3097 = vmatpush.bf16.msra.mxu0 %v2679
    %3098 = vmatpush.bf16.msra.mxu0 %v2675
    %3099 = vmatpush.bf16.msra.mxu0 %v2671
    %3100 = vmatmul.bf16.gmra.mxu0 %v2152
    %v3101 = vpop.f32.mrf.mxu0
    %v3102 = vadd.f32 0.0, %v3101
    %v3103 = vpop.f32.mrf.mxu0
    %v3104 = vadd.f32 0.0, %v3103
    %3105 = vdwg.mxu0
    %3106 = vmatpush.bf16.msra.mxu0 %v2731
    %3107 = vmatpush.bf16.msra.mxu0 %v2727
    %3108 = vmatpush.bf16.msra.mxu0 %v2723
    %3109 = vmatpush.bf16.msra.mxu0 %v2719
    %3110 = vmatpush.bf16.msra.mxu0 %v2715
    %3111 = vmatpush.bf16.msra.mxu0 %v2711
    %3112 = vmatpush.bf16.msra.mxu0 %v2707
    %3113 = vmatpush.bf16.msra.mxu0 %v2703
    %3114 = vmatmul.bf16.gmra.mxu0 %v2153
    %v3115 = vpop.f32.mrf.mxu0
    %v3116 = vadd.f32 %v3102, %v3115
    %v3117 = vpop.f32.mrf.mxu0
    %v3118 = vadd.f32 %v3104, %v3117
    %3119 = vdwg.mxu0
    %3120 = vmatpush.bf16.msra.mxu0 %v2763
    %3121 = vmatpush.bf16.msra.mxu0 %v2759
    %3122 = vmatpush.bf16.msra.mxu0 %v2755
    %3123 = vmatpush.bf16.msra.mxu0 %v2751
    %3124 = vmatpush.bf16.msra.mxu0 %v2747
    %3125 = vmatpush.bf16.msra.mxu0 %v2743
    %3126 = vmatpush.bf16.msra.mxu0 %v2739
    %3127 = vmatpush.bf16.msra.mxu0 %v2735
    %3128 = vmatmul.bf16.gmra.mxu0 %v2154
    %v3129 = vpop.f32.mrf.mxu0
    %v3130 = vadd.f32 %v3116, %v3129
    %v3131 = vpop.f32.mrf.mxu0
    %v3132 = vadd.f32 %v3118, %v3131
    %3133 = vdwg.mxu0
    %3134 = vmatpush.bf16.msra.mxu0 %v2795
    %3135 = vmatpush.bf16.msra.mxu0 %v2791
    %3136 = vmatpush.bf16.msra.mxu0 %v2787
    %3137 = vmatpush.bf16.msra.mxu0 %v2783
    %3138 = vmatpush.bf16.msra.mxu0 %v2779
    %3139 = vmatpush.bf16.msra.mxu0 %v2775
    %3140 = vmatpush.bf16.msra.mxu0 %v2771
    %3141 = vmatpush.bf16.msra.mxu0 %v2767
    %3142 = vmatmul.bf16.gmra.mxu0 %v2155
    %v3143 = vpop.f32.mrf.mxu0
    %v3144 = vadd.f32 %v3130, %v3143
    %v3145 = vpop.f32.mrf.mxu0
    %v3146 = vadd.f32 %v3132, %v3145
    %3147 = vdwg.mxu0
    %v3148 = vpack.c.bf16 %v3032, %v2976
    %v3149 = vpack.c.bf16 %v3144, %v3088
    %v3150 = vpack.c.bf16 %v3034, %v2978
    %v3151 = vpack.c.bf16 %v3146, %v3090
    %3152 = vst [vmem:[%s8] sm:$0xff] %v3148
    %3153 = vst [vmem:[%s8 + $0x8] sm:$0xff] %v3149
    %3154 = vst [vmem:[%s8 + $0x10] sm:$0xff] %v3150
    %3155 = vst [vmem:[%s8 + $0x18] sm:$0xff] %v3151
    // Predicated region
    $region50: #{multi_head_attention.3} parent=1 // pred_check
      _
    $region51: #{multi_head_attention.3} parent=1 // pred_check_branch
      %3157 = sbr.rel (0) target = $region53
    $region52: #{multi_head_attention.3} parent=1 // pred_region
      _
    $region53: #{multi_head_attention.3} parent=1 // pred_fallthru
      _
    // Predicated region
    $region54: #{multi_head_attention.3} parent=1 // pred_check
      _
    $region55: #{multi_head_attention.3} parent=1 // pred_check_branch
      %3159 = sbr.rel (0) target = $region57
    $region56: #{multi_head_attention.3} parent=1 // pred_region
      _
    $region57: #{multi_head_attention.3} parent=1 // pred_fallthru
      _
    // Predicated region
    $region58: #{multi_head_attention.3} parent=1 // pred_check
      _
    $region59: #{multi_head_attention.3} parent=1 // pred_check_branch
      %3161 = sbr.rel (0) target = $region61
    $region60: #{multi_head_attention.3} parent=1 // pred_region
      _
    $region61: #{multi_head_attention.3} parent=1 // pred_fallthru
      _
    // Predicated region
    $region62: #{multi_head_attention.3} parent=1 // pred_check
      _
    $region63: #{multi_head_attention.3} parent=1 // pred_check_branch
      %3163 = sbr.rel (0) target = $region65
    $region64: #{multi_head_attention.3} parent=1 // pred_region
      _
    $region65: #{multi_head_attention.3} parent=1 // pred_fallthru
      _
    // Predicated region
    $region66: #{multi_head_attention.3} parent=1 // pred_check
      _
    $region67: #{multi_head_attention.3} parent=1 // pred_check_branch
      %3165 = sbr.rel (0) target = $region69
    $region68: #{multi_head_attention.3} parent=1 // pred_region
      _
    $region69: #{multi_head_attention.3} parent=1 // pred_fallthru
      _
    // Predicated region
    $region70: #{multi_head_attention.3} parent=1 // pred_check
      _
    $region71: #{multi_head_attention.3} parent=1 // pred_check_branch
      %3167 = sbr.rel (0) target = $region73
    $region72: #{multi_head_attention.3} parent=1 // pred_region
      _
    $region73: #{multi_head_attention.3} parent=1 // pred_fallthru
      _
    %3168 = vsyncpa [#allocation3], 1
    %3169 = vsyncpa [#allocation5], 1
    %3170 = vsyncpa [#allocation8], 1
    %3171 = vsyncpa [#allocation11], 1

</llo_original>
